<compile_context>
chip_gen: v7x
topology: tpu7x:2x2x1
jax: 0.10.0
libtpu: 0.0.40
codegen_flags: <defaults>
</compile_context>

<pallas_src>
import functools

import jax
import jax.numpy as jnp
from jax.experimental import pallas as pl
from jax.experimental.pallas import tpu as pltpu

EPS = 1e-5     # PyTorch InstanceNorm2d default eps
KSIZE = 3      # kernel=3 in the module under test

_PAD_MODE = {"zeros": "constant", "reflect": "reflect",
             "replicate": "edge", "circular": "wrap"}


# ---------------------------------------------------------------------------
# In-kernel spatial halo (pad=1) -- pure static slicing + concat, stays in VMEM
# ---------------------------------------------------------------------------
def _pad_hw(z, padding_type):
    """z: (H, W, C) f32 value -> (H+2, W+2, C) with the requested halo."""
    if padding_type == "zeros":
        zero_row = jnp.zeros_like(z[0:1, :, :])
        z2 = jnp.concatenate([zero_row, z, zero_row], axis=0)
        zero_col = jnp.zeros_like(z2[:, 0:1, :])
        return jnp.concatenate([zero_col, z2, zero_col], axis=1)

    if padding_type == "reflect":
        top, bot = z[1:2, :, :], z[-2:-1, :, :]
    elif padding_type == "replicate":
        top, bot = z[0:1, :, :], z[-1:, :, :]
    elif padding_type == "circular":
        top, bot = z[-1:, :, :], z[0:1, :, :]
    else:
        raise ValueError(f"unsupported padding_type: {padding_type}")
    z2 = jnp.concatenate([top, z, bot], axis=0)

    if padding_type == "reflect":
        left, right = z2[:, 1:2, :], z2[:, -2:-1, :]
    elif padding_type == "replicate":
        left, right = z2[:, 0:1, :], z2[:, -1:, :]
    else:  # circular
        left, right = z2[:, -1:, :], z2[:, 0:1, :]
    return jnp.concatenate([left, z2, right], axis=1)


# ---------------------------------------------------------------------------
# Fused kernel: conv1 -> IN -> relu -> conv2 -> IN -> residual, all in VMEM
# ---------------------------------------------------------------------------
def fused_resnet_block_kernel(x_ref, w1_ref, w2_ref, o_ref, *, padding_type):
    # x_ref: (H, W, C) f32      w*_ref: (9*C, C) bf16      o_ref: (H, W, C) f32
    H, W, C = o_ref.shape
    x = x_ref[...].astype(jnp.float32)

    def conv_instance_norm(z, w_ref):
        """3x3 conv (im2col, single MXU matmul) + InstanceNorm.  (H*W, C) f32."""
        zp = _pad_hw(z, padding_type)                       # (H+2, W+2, C) f32
        cols = [zp[dy:dy + H, dx:dx + W, :].reshape(H * W, C)
                for dy in range(KSIZE) for dx in range(KSIZE)]
        # Single im2col patch buffer; bf16 into the MXU, f32 accumulation.
        patches = jnp.concatenate(cols, axis=-1).astype(jnp.bfloat16)  # (H*W, 9C)
        acc = jnp.dot(patches, w_ref[...],
                      preferred_element_type=jnp.float32)    # (H*W, C) f32
        # One-pass InstanceNorm2d (affine=False): biased variance over H*W.
        mean = jnp.mean(acc, axis=0, keepdims=True)
        var = jnp.mean(acc * acc, axis=0, keepdims=True) - mean * mean
        return (acc - mean) * jax.lax.rsqrt(var + EPS)

    h = jnp.maximum(conv_instance_norm(x, w1_ref), 0.0).reshape(H, W, C)  # ReLU
    y = conv_instance_norm(h, w2_ref).reshape(H, W, C)
    o_ref[...] = (x + y).astype(o_ref.dtype)


# ---------------------------------------------------------------------------
# Wrapper: layout transposes + weight repacking, one pallas_call for the block
# ---------------------------------------------------------------------------
def resnet_block_attn_forward(x_nchw, w1, b1, w2, b2, *,
                              stride=1, padding_type="reflect"):
    """x_nchw: (N, C, H, W) f32; w*: (C, C, 3, 3) OIHW; b*: (C,) (ignored)."""
    assert stride == 1, "residual resnet block requires stride=1"
    assert padding_type in _PAD_MODE
    # Conv bias is a per-channel constant -> exactly cancelled by InstanceNorm
    # (affine=False).  Dropped on purpose (perf review).
    del b1, b2

    N, C, H, W = x_nchw.shape
    x_nhwc = jnp.transpose(x_nchw, (0, 2, 3, 1)).astype(jnp.float32)

    def to_im2col_w(w):
        # OIHW -> (ky, kx, Ci, Co) -> (9*Ci, Co), bf16 for the MXU.
        return (jnp.transpose(w, (2, 3, 1, 0))
                .reshape(KSIZE * KSIZE * C, C)
                .astype(jnp.bfloat16))

    w1m, w2m = to_im2col_w(w1), to_im2col_w(w2)

    kern = functools.partial(fused_resnet_block_kernel, padding_type=padding_type)
    img_spec = pl.BlockSpec((None, H, W, C), lambda n: (n, 0, 0, 0))
    w_spec = pl.BlockSpec((KSIZE * KSIZE * C, C), lambda n: (0, 0))

    y = pl.pallas_call(
        kern,
        out_shape=jax.ShapeDtypeStruct((N, H, W, C), jnp.float32),
        grid=(N,),
        in_specs=[img_spec, w_spec, w_spec],
        out_specs=img_spec,
        compiler_params=pltpu.CompilerParams(
            dimension_semantics=("parallel",)),
    )(x_nhwc, w1m, w2m)

    return jnp.transpose(y, (0, 3, 1, 2))


# ---------------------------------------------------------------------------
# Pure-JAX reference (mirrors the PyTorch module, full f32, HIGHEST precision)
# ---------------------------------------------------------------------------
def reference_forward(x, w1, b1, w2, b2, padding_type="reflect"):
    mode = _PAD_MODE[padding_type]

    def conv(z, w, b):
        pads = ((0, 0), (0, 0), (1, 1), (1, 1))
        zp = (jnp.pad(z, pads, mode="constant", constant_values=0.0)
              if mode == "constant" else jnp.pad(z, pads, mode=mode))
        out = jax.lax.conv_general_dilated(
            zp, w, (1, 1), "VALID",
            dimension_numbers=("NCHW", "OIHW", "NCHW"),
            precision=jax.lax.Precision.HIGHEST)
        return out + b[None, :, None, None]

    def inorm(z):
        m = jnp.mean(z, axis=(2, 3), keepdims=True)
        v = jnp.mean((z - m) ** 2, axis=(2, 3), keepdims=True)
        return (z - m) * jax.lax.rsqrt(v + EPS)

    h = jax.nn.relu(inorm(conv(x, w1, b1)))
    h = inorm(conv(h, w2, b2))
    return x + h


# ---------------------------------------------------------------------------
if __name__ == "__main__":
    key = jax.random.PRNGKey(0)
    k_x, k_w1, k_b1, k_w2, k_b2 = jax.random.split(key, 5)

    N, C, H, W = 2, 4, 16, 16          # channel=4, kernel=3, stride=1
    padding_type = "reflect"

    x = jax.random.normal(k_x, (N, C, H, W), jnp.float32)
    w1 = 0.02 * jax.random.normal(k_w1, (C, C, KSIZE, KSIZE), jnp.float32)
    b1 = 0.02 * jax.random.normal(k_b1, (C,), jnp.float32)
    w2 = 0.02 * jax.random.normal(k_w2, (C, C, KSIZE, KSIZE), jnp.float32)
    b2 = 0.02 * jax.random.normal(k_b2, (C,), jnp.float32)

    out = resnet_block_attn_forward(x, w1, b1, w2, b2,
                                    stride=1, padding_type=padding_type)
    out = jax.block_until_ready(out)

    ref = reference_forward(x, w1, b1, w2, b2, padding_type)
    assert out.shape == (N, C, H, W)
    # Tolerance sized for bf16 MXU inputs (two conv layers, InstanceNorm
    # amplifies by 1/std of the conv output); measured error is ~1e-2.
    err = float(jnp.max(jnp.abs(out - ref)))
    assert err < 3e-2, err
    print("KERNEL_OK")
</pallas_src>

<mosaic_0001>
module attributes {stable_mosaic.version = 11 : i64} {
  func.func @fused_resnet_block_kernel(%arg0: i32, %arg1: memref<1x16x16x4xf32, #tpu.memory_space<vmem>>, %arg2: memref<36x4xbf16, #tpu.memory_space<vmem>>, %arg3: memref<36x4xbf16, #tpu.memory_space<vmem>>, %arg4: memref<1x16x16x4xf32, #tpu.memory_space<vmem>>) attributes {dimension_semantics = [#tpu.dimension_semantics<parallel>], iteration_bounds = array<i64: 2>, scalar_prefetch = 0 : i64, scratch_operands = 0 : i64, tpu.core_type = #tpu.core_type<tc>, window_params = [{transform_indices = @transform_0, window_bounds = array<i64: 1, 16, 16, 4>}, {pipeline_mode = #tpu.pipeline_mode<synchronous>, transform_indices = @transform_1, window_bounds = array<i64: 36, 4>}, {pipeline_mode = #tpu.pipeline_mode<synchronous>, transform_indices = @transform_2, window_bounds = array<i64: 36, 4>}, {transform_indices = @transform_3, window_bounds = array<i64: 1, 16, 16, 4>}]} {
    %c0 = arith.constant 0 : index
    %c0_0 = arith.constant 0 : index
    %c0_1 = arith.constant 0 : index
    %c0_2 = arith.constant 0 : index
    %0 = vector.load %arg1[%c0, %c0_0, %c0_1, %c0_2] : memref<1x16x16x4xf32, #tpu.memory_space<vmem>>, vector<1x16x16x4xf32>
    %1 = vector.shape_cast %0 : vector<1x16x16x4xf32> to vector<16x16x4xf32>
    %2 = vector.extract_strided_slice %1 {offsets = [1, 0, 0], sizes = [1, 16, 4], strides = [1, 1, 1]} : vector<16x16x4xf32> to vector<1x16x4xf32>
    %3 = vector.extract_strided_slice %1 {offsets = [14, 0, 0], sizes = [1, 16, 4], strides = [1, 1, 1]} : vector<16x16x4xf32> to vector<1x16x4xf32>
    %4 = tpu.concatenate %2, %1, %3 in 0 : vector<1x16x4xf32>, vector<16x16x4xf32>, vector<1x16x4xf32> -> vector<18x16x4xf32>
    %5 = vector.extract_strided_slice %4 {offsets = [0, 1, 0], sizes = [18, 1, 4], strides = [1, 1, 1]} : vector<18x16x4xf32> to vector<18x1x4xf32>
    %6 = vector.extract_strided_slice %4 {offsets = [0, 14, 0], sizes = [18, 1, 4], strides = [1, 1, 1]} : vector<18x16x4xf32> to vector<18x1x4xf32>
    %7 = tpu.concatenate %5, %4, %6 in 1 : vector<18x1x4xf32>, vector<18x16x4xf32>, vector<18x1x4xf32> -> vector<18x18x4xf32>
    %8 = vector.extract_strided_slice %7 {offsets = [0, 0, 0], sizes = [16, 16, 4], strides = [1, 1, 1]} : vector<18x18x4xf32> to vector<16x16x4xf32>
    %9 = vector.shape_cast %8 : vector<16x16x4xf32> to vector<256x4xf32>
    %10 = vector.extract_strided_slice %7 {offsets = [0, 1, 0], sizes = [16, 16, 4], strides = [1, 1, 1]} : vector<18x18x4xf32> to vector<16x16x4xf32>
    %11 = vector.shape_cast %10 : vector<16x16x4xf32> to vector<256x4xf32>
    %12 = vector.extract_strided_slice %7 {offsets = [0, 2, 0], sizes = [16, 16, 4], strides = [1, 1, 1]} : vector<18x18x4xf32> to vector<16x16x4xf32>
    %13 = vector.shape_cast %12 : vector<16x16x4xf32> to vector<256x4xf32>
    %14 = vector.extract_strided_slice %7 {offsets = [1, 0, 0], sizes = [16, 16, 4], strides = [1, 1, 1]} : vector<18x18x4xf32> to vector<16x16x4xf32>
    %15 = vector.shape_cast %14 : vector<16x16x4xf32> to vector<256x4xf32>
    %16 = vector.extract_strided_slice %7 {offsets = [1, 1, 0], sizes = [16, 16, 4], strides = [1, 1, 1]} : vector<18x18x4xf32> to vector<16x16x4xf32>
    %17 = vector.shape_cast %16 : vector<16x16x4xf32> to vector<256x4xf32>
    %18 = vector.extract_strided_slice %7 {offsets = [1, 2, 0], sizes = [16, 16, 4], strides = [1, 1, 1]} : vector<18x18x4xf32> to vector<16x16x4xf32>
    %19 = vector.shape_cast %18 : vector<16x16x4xf32> to vector<256x4xf32>
    %20 = vector.extract_strided_slice %7 {offsets = [2, 0, 0], sizes = [16, 16, 4], strides = [1, 1, 1]} : vector<18x18x4xf32> to vector<16x16x4xf32>
    %21 = vector.shape_cast %20 : vector<16x16x4xf32> to vector<256x4xf32>
    %22 = vector.extract_strided_slice %7 {offsets = [2, 1, 0], sizes = [16, 16, 4], strides = [1, 1, 1]} : vector<18x18x4xf32> to vector<16x16x4xf32>
    %23 = vector.shape_cast %22 : vector<16x16x4xf32> to vector<256x4xf32>
    %24 = vector.extract_strided_slice %7 {offsets = [2, 2, 0], sizes = [16, 16, 4], strides = [1, 1, 1]} : vector<18x18x4xf32> to vector<16x16x4xf32>
    %25 = vector.shape_cast %24 : vector<16x16x4xf32> to vector<256x4xf32>
    %26 = tpu.concatenate %9, %11, %13, %15, %17, %19, %21, %23, %25 in 1 : vector<256x4xf32>, vector<256x4xf32>, vector<256x4xf32>, vector<256x4xf32>, vector<256x4xf32>, vector<256x4xf32>, vector<256x4xf32>, vector<256x4xf32>, vector<256x4xf32> -> vector<256x36xf32>
    %27 = arith.truncf %26 : vector<256x36xf32> to vector<256x36xbf16>
    %c0_3 = arith.constant 0 : index
    %c0_4 = arith.constant 0 : index
    %28 = vector.load %arg2[%c0_3, %c0_4] : memref<36x4xbf16, #tpu.memory_space<vmem>>, vector<36x4xbf16>
    %cst = arith.constant dense<0.000000e+00> : vector<256x4xf32>
    %29 = tpu.matmul %27, %28, %cst {dimension_numbers = #tpu.dot_dimension_numbers<[1], [0], [0], [1], [0, 0, 1, 1], [], []>} : vector<256x36xbf16>, vector<36x4xbf16>, vector<256x4xf32> -> vector<256x4xf32>
    %cst_5 = arith.constant dense<0.000000e+00> : vector<4xf32>
    %30 = vector.multi_reduction <add>, %29, %cst_5 [0] : vector<256x4xf32> to vector<4xf32>
    %31 = vector.shape_cast %30 : vector<4xf32> to vector<1x4xf32>
    %cst_6 = arith.constant 2.560000e+02 : f32
    %32 = vector.broadcast %cst_6 : f32 to vector<1x4xf32>
    %33 = arith.divf %31, %32 : vector<1x4xf32>
    %34 = arith.mulf %29, %29 : vector<256x4xf32>
    %cst_7 = arith.constant dense<0.000000e+00> : vector<4xf32>
    %35 = vector.multi_reduction <add>, %34, %cst_7 [0] : vector<256x4xf32> to vector<4xf32>
    %36 = vector.shape_cast %35 : vector<4xf32> to vector<1x4xf32>
    %cst_8 = arith.constant 2.560000e+02 : f32
    %37 = vector.broadcast %cst_8 : f32 to vector<1x4xf32>
    %38 = arith.divf %36, %37 : vector<1x4xf32>
    %39 = arith.mulf %33, %33 : vector<1x4xf32>
    %40 = arith.subf %38, %39 : vector<1x4xf32>
    %41 = vector.broadcast %33 : vector<1x4xf32> to vector<256x4xf32>
    %42 = arith.subf %29, %41 : vector<256x4xf32>
    %cst_9 = arith.constant 9.99999974E-6 : f32
    %43 = vector.broadcast %cst_9 : f32 to vector<1x4xf32>
    %44 = arith.addf %40, %43 : vector<1x4xf32>
    %45 = math.rsqrt %44 : vector<1x4xf32>
    %46 = vector.broadcast %45 : vector<1x4xf32> to vector<256x4xf32>
    %47 = arith.mulf %42, %46 : vector<256x4xf32>
    %cst_10 = arith.constant 0.000000e+00 : f32
    %48 = vector.broadcast %cst_10 : f32 to vector<256x4xf32>
    %49 = arith.maximumf %47, %48 : vector<256x4xf32>
    %50 = vector.shape_cast %49 : vector<256x4xf32> to vector<16x16x4xf32>
    %51 = vector.extract_strided_slice %50 {offsets = [1, 0, 0], sizes = [1, 16, 4], strides = [1, 1, 1]} : vector<16x16x4xf32> to vector<1x16x4xf32>
    %52 = vector.extract_strided_slice %50 {offsets = [14, 0, 0], sizes = [1, 16, 4], strides = [1, 1, 1]} : vector<16x16x4xf32> to vector<1x16x4xf32>
    %53 = tpu.concatenate %51, %50, %52 in 0 : vector<1x16x4xf32>, vector<16x16x4xf32>, vector<1x16x4xf32> -> vector<18x16x4xf32>
    %54 = vector.extract_strided_slice %53 {offsets = [0, 1, 0], sizes = [18, 1, 4], strides = [1, 1, 1]} : vector<18x16x4xf32> to vector<18x1x4xf32>
    %55 = vector.extract_strided_slice %53 {offsets = [0, 14, 0], sizes = [18, 1, 4], strides = [1, 1, 1]} : vector<18x16x4xf32> to vector<18x1x4xf32>
    %56 = tpu.concatenate %54, %53, %55 in 1 : vector<18x1x4xf32>, vector<18x16x4xf32>, vector<18x1x4xf32> -> vector<18x18x4xf32>
    %57 = vector.extract_strided_slice %56 {offsets = [0, 0, 0], sizes = [16, 16, 4], strides = [1, 1, 1]} : vector<18x18x4xf32> to vector<16x16x4xf32>
    %58 = vector.shape_cast %57 : vector<16x16x4xf32> to vector<256x4xf32>
    %59 = vector.extract_strided_slice %56 {offsets = [0, 1, 0], sizes = [16, 16, 4], strides = [1, 1, 1]} : vector<18x18x4xf32> to vector<16x16x4xf32>
    %60 = vector.shape_cast %59 : vector<16x16x4xf32> to vector<256x4xf32>
    %61 = vector.extract_strided_slice %56 {offsets = [0, 2, 0], sizes = [16, 16, 4], strides = [1, 1, 1]} : vector<18x18x4xf32> to vector<16x16x4xf32>
    %62 = vector.shape_cast %61 : vector<16x16x4xf32> to vector<256x4xf32>
    %63 = vector.extract_strided_slice %56 {offsets = [1, 0, 0], sizes = [16, 16, 4], strides = [1, 1, 1]} : vector<18x18x4xf32> to vector<16x16x4xf32>
    %64 = vector.shape_cast %63 : vector<16x16x4xf32> to vector<256x4xf32>
    %65 = vector.extract_strided_slice %56 {offsets = [1, 1, 0], sizes = [16, 16, 4], strides = [1, 1, 1]} : vector<18x18x4xf32> to vector<16x16x4xf32>
    %66 = vector.shape_cast %65 : vector<16x16x4xf32> to vector<256x4xf32>
    %67 = vector.extract_strided_slice %56 {offsets = [1, 2, 0], sizes = [16, 16, 4], strides = [1, 1, 1]} : vector<18x18x4xf32> to vector<16x16x4xf32>
    %68 = vector.shape_cast %67 : vector<16x16x4xf32> to vector<256x4xf32>
    %69 = vector.extract_strided_slice %56 {offsets = [2, 0, 0], sizes = [16, 16, 4], strides = [1, 1, 1]} : vector<18x18x4xf32> to vector<16x16x4xf32>
    %70 = vector.shape_cast %69 : vector<16x16x4xf32> to vector<256x4xf32>
    %71 = vector.extract_strided_slice %56 {offsets = [2, 1, 0], sizes = [16, 16, 4], strides = [1, 1, 1]} : vector<18x18x4xf32> to vector<16x16x4xf32>
    %72 = vector.shape_cast %71 : vector<16x16x4xf32> to vector<256x4xf32>
    %73 = vector.extract_strided_slice %56 {offsets = [2, 2, 0], sizes = [16, 16, 4], strides = [1, 1, 1]} : vector<18x18x4xf32> to vector<16x16x4xf32>
    %74 = vector.shape_cast %73 : vector<16x16x4xf32> to vector<256x4xf32>
    %75 = tpu.concatenate %58, %60, %62, %64, %66, %68, %70, %72, %74 in 1 : vector<256x4xf32>, vector<256x4xf32>, vector<256x4xf32>, vector<256x4xf32>, vector<256x4xf32>, vector<256x4xf32>, vector<256x4xf32>, vector<256x4xf32>, vector<256x4xf32> -> vector<256x36xf32>
    %76 = arith.truncf %75 : vector<256x36xf32> to vector<256x36xbf16>
    %c0_11 = arith.constant 0 : index
    %c0_12 = arith.constant 0 : index
    %77 = vector.load %arg3[%c0_11, %c0_12] : memref<36x4xbf16, #tpu.memory_space<vmem>>, vector<36x4xbf16>
    %cst_13 = arith.constant dense<0.000000e+00> : vector<256x4xf32>
    %78 = tpu.matmul %76, %77, %cst_13 {dimension_numbers = #tpu.dot_dimension_numbers<[1], [0], [0], [1], [0, 0, 1, 1], [], []>} : vector<256x36xbf16>, vector<36x4xbf16>, vector<256x4xf32> -> vector<256x4xf32>
    %cst_14 = arith.constant dense<0.000000e+00> : vector<4xf32>
    %79 = vector.multi_reduction <add>, %78, %cst_14 [0] : vector<256x4xf32> to vector<4xf32>
    %80 = vector.shape_cast %79 : vector<4xf32> to vector<1x4xf32>
    %cst_15 = arith.constant 2.560000e+02 : f32
    %81 = vector.broadcast %cst_15 : f32 to vector<1x4xf32>
    %82 = arith.divf %80, %81 : vector<1x4xf32>
    %83 = arith.mulf %78, %78 : vector<256x4xf32>
    %cst_16 = arith.constant dense<0.000000e+00> : vector<4xf32>
    %84 = vector.multi_reduction <add>, %83, %cst_16 [0] : vector<256x4xf32> to vector<4xf32>
    %85 = vector.shape_cast %84 : vector<4xf32> to vector<1x4xf32>
    %cst_17 = arith.constant 2.560000e+02 : f32
    %86 = vector.broadcast %cst_17 : f32 to vector<1x4xf32>
    %87 = arith.divf %85, %86 : vector<1x4xf32>
    %88 = arith.mulf %82, %82 : vector<1x4xf32>
    %89 = arith.subf %87, %88 : vector<1x4xf32>
    %90 = vector.broadcast %82 : vector<1x4xf32> to vector<256x4xf32>
    %91 = arith.subf %78, %90 : vector<256x4xf32>
    %cst_18 = arith.constant 9.99999974E-6 : f32
    %92 = vector.broadcast %cst_18 : f32 to vector<1x4xf32>
    %93 = arith.addf %89, %92 : vector<1x4xf32>
    %94 = math.rsqrt %93 : vector<1x4xf32>
    %95 = vector.broadcast %94 : vector<1x4xf32> to vector<256x4xf32>
    %96 = arith.mulf %91, %95 : vector<256x4xf32>
    %97 = vector.shape_cast %96 : vector<256x4xf32> to vector<16x16x4xf32>
    %98 = arith.addf %1, %97 : vector<16x16x4xf32>
    %c0_19 = arith.constant 0 : index
    %c0_20 = arith.constant 0 : index
    %c0_21 = arith.constant 0 : index
    %c0_22 = arith.constant 0 : index
    %99 = vector.load %arg4[%c0_19, %c0_20, %c0_21, %c0_22] : memref<1x16x16x4xf32, #tpu.memory_space<vmem>>, vector<1x16x16x4xf32>
    %100 = vector.shape_cast %99 : vector<1x16x16x4xf32> to vector<16x16x4xf32>
    %101 = vector.shape_cast %98 : vector<16x16x4xf32> to vector<1x16x16x4xf32>
    tpu.vector_store %arg4[%c0_19, %c0_20, %c0_21, %c0_22], %101 {strides = array<i32>} : memref<1x16x16x4xf32, #tpu.memory_space<vmem>>, vector<1x16x16x4xf32>,
    return
  }
  func.func @transform_0(%arg0: i32) -> (i32, i32, i32, i32) {
    %c0_i32 = arith.constant 0 : i32
    %c0_i32_0 = arith.constant 0 : i32
    %c0_i32_1 = arith.constant 0 : i32
    %c0_i32_2 = arith.constant 0 : i32
    return %arg0, %c0_i32, %c0_i32_0, %c0_i32_1 : i32, i32, i32, i32
  }
  func.func @transform_1(%arg0: i32) -> (i32, i32) {
    %c0_i32 = arith.constant 0 : i32
    %c0_i32_0 = arith.constant 0 : i32
    %c0_i32_1 = arith.constant 0 : i32
    return %c0_i32, %c0_i32_0 : i32, i32
  }
  func.func @transform_2(%arg0: i32) -> (i32, i32) {
    %c0_i32 = arith.constant 0 : i32
    %c0_i32_0 = arith.constant 0 : i32
    %c0_i32_1 = arith.constant 0 : i32
    return %c0_i32, %c0_i32_0 : i32, i32
  }
  func.func @transform_3(%arg0: i32) -> (i32, i32, i32, i32) {
    %c0_i32 = arith.constant 0 : i32
    %c0_i32_0 = arith.constant 0 : i32
    %c0_i32_1 = arith.constant 0 : i32
    %c0_i32_2 = arith.constant 0 : i32
    return %arg0, %c0_i32, %c0_i32_0, %c0_i32_1 : i32, i32, i32, i32
  }
}

</mosaic_0001>

<llo_original>
// kernel: tpu_custom_call.1
$region0: #{tpu_custom_call.1}
  #allocation0 [shape = 'u32[]', space=smem, size = 0x4, offset = 0x4, fixed_abs, tag = 'smem constant byte address 0x4 - core index']
  #allocation1 [shape = 'u32[144,128]{1,0:T(1,128)}', space=vmem, size = 0x12000, scoped, tag = 'internal scratch']
  %s0 = inlined_call_operand.vmem [shape: f32[2,16,16,4], index: 0, kind: input, shape index: {}]
  %s1 = inlined_call_operand.vmem [shape: bf16[36,4], index: 1, kind: input, shape index: {}]
  %s2 = inlined_call_operand.vmem [shape: bf16[36,4], index: 2, kind: input, shape index: {}]
  %s3 = inlined_call_operand.vmem [shape: f32[2,16,16,4], index: 3, kind: output, shape index: {}]
  %s4 = sld [smem:[#allocation0]]
  $region45: #{tpu_custom_call.1} parent=0
    _
  %s6 = ssub.s32 1, %s4
  %s7 = scalar_select 0, %s6, %s4
  loop: start=0, step=1, limit=4
  $region2: #{tpu_custom_call.1} parent=0 // loop_pre_header
    _
  $region3: #{tpu_custom_call.1} parent=0 // loop_header
    %s9 = sphi 0, %s13
    %p10 = scmp.ge.s32.totalorder %s9, 4
    %s19 = sphi 0, %s21
    %s22 = sphi 0, %s19
    %s23 = sphi 0, %s22
    %s39 = sphi 0, %s23
    %s43 = sphi 0, %s43
    %s45 = sphi 0, %s43
    %s46 = sphi 0, %s45
    %s60 = sphi 0, %s46
    %s64 = sphi 0, %s64
    %s66 = sphi 0, %s64
    %s67 = sphi 0, %s66
    %s81 = sphi 0, %s67
    %s87 = sphi 0, %s89
    %s90 = sphi 0, %s87
    %s91 = sphi 0, %s90
    %s107 = sphi 0, %s91
  $region4: #{tpu_custom_call.1} parent=0 // loop_header_branch
    %12 = sbr.rel (%p10) target = $region8
  $region5: #{tpu_custom_call.1} parent=0 // loop_body
    %s14 = ssub.s32 %s9, 1
    %s15 = ssub.s32 %s9, 2
    %s16 = sadd.s32 %s9, 1
    %s17 = ssub.s32 %s9, %s16
    %p18 = scmp.eq.s32.totalorder %s17, 0
    %s20 = sadd.s32 %s19, 1
    %s21 = scalar_select %p18, %s19, %s20
    %p24 = pneg %p18
    %p25 = scmp.eq.s32.totalorder %s9, 1
    %p26 = por %p24, %p25
    %p27 = scmp.ne.s32.totalorder %s19, %s22
    %p28 = scmp.eq.s32.totalorder %s9, 0
    %p29 = por %p27, %p28
    %p30 = scmp.ne.s32.totalorder %s19, %s22
    %p31 = scmp.eq.s32.totalorder %s14, 1
    %p32 = por %p30, %p31
    %p33 = scmp.ne.s32.totalorder %s22, %s23
    %p34 = scmp.eq.s32.totalorder %s14, 0
    %p35 = por %p33, %p34
    %p36 = scmp.ne.s32.totalorder %s22, %s23
    %p37 = scmp.eq.s32.totalorder %s15, 1
    %p38 = por %p36, %p37
    %p40 = scmp.ne.s32.totalorder %s23, %s39
    %p41 = scmp.eq.s32.totalorder %s15, 0
    %p42 = por %p40, %p41
    %s44 = sadd.s32 %s43, 1
    %p47 = scmp.eq.s32.totalorder %s9, 1
    %p48 = scmp.ne.s32.totalorder %s43, %s45
    %p49 = scmp.eq.s32.totalorder %s9, 0
    %p50 = por %p48, %p49
    %p51 = scmp.ne.s32.totalorder %s43, %s45
    %p52 = scmp.eq.s32.totalorder %s14, 1
    %p53 = por %p51, %p52
    %p54 = scmp.ne.s32.totalorder %s45, %s46
    %p55 = scmp.eq.s32.totalorder %s14, 0
    %p56 = por %p54, %p55
    %p57 = scmp.ne.s32.totalorder %s45, %s46
    %p58 = scmp.eq.s32.totalorder %s15, 1
    %p59 = por %p57, %p58
    %p61 = scmp.ne.s32.totalorder %s46, %s60
    %p62 = scmp.eq.s32.totalorder %s15, 0
    %p63 = por %p61, %p62
    %s65 = sadd.s32 %s64, 1
    %p68 = scmp.eq.s32.totalorder %s9, 1
    %p69 = scmp.ne.s32.totalorder %s64, %s66
    %p70 = scmp.eq.s32.totalorder %s9, 0
    %p71 = por %p69, %p70
    %p72 = scmp.ne.s32.totalorder %s64, %s66
    %p73 = scmp.eq.s32.totalorder %s14, 1
    %p74 = por %p72, %p73
    %p75 = scmp.ne.s32.totalorder %s66, %s67
    %p76 = scmp.eq.s32.totalorder %s14, 0
    %p77 = por %p75, %p76
    %p78 = scmp.ne.s32.totalorder %s66, %s67
    %p79 = scmp.eq.s32.totalorder %s15, 1
    %p80 = por %p78, %p79
    %p82 = scmp.ne.s32.totalorder %s67, %s81
    %p83 = scmp.eq.s32.totalorder %s15, 0
    %p84 = por %p82, %p83
    %s85 = ssub.s32 %s9, %s16
    %p86 = scmp.eq.s32.totalorder %s85, 0
    %s88 = sadd.s32 %s87, 1
    %s89 = scalar_select %p86, %s87, %s88
    %p92 = pneg %p86
    %p93 = scmp.eq.s32.totalorder %s9, 1
    %p94 = por %p92, %p93
    %p95 = scmp.ne.s32.totalorder %s87, %s90
    %p96 = scmp.eq.s32.totalorder %s9, 0
    %p97 = por %p95, %p96
    %p98 = scmp.ne.s32.totalorder %s87, %s90
    %p99 = scmp.eq.s32.totalorder %s14, 1
    %p100 = por %p98, %p99
    %p101 = scmp.ne.s32.totalorder %s90, %s91
    %p102 = scmp.eq.s32.totalorder %s14, 0
    %p103 = por %p101, %p102
    %p104 = scmp.ne.s32.totalorder %s90, %s91
    %p105 = scmp.eq.s32.totalorder %s15, 1
    %p106 = por %p104, %p105
    %p108 = scmp.ne.s32.totalorder %s91, %s107
    %p109 = scmp.eq.s32.totalorder %s15, 0
    %p110 = por %p108, %p109
    %p111 = scmp.le.s32.totalorder 1, %s9
    %p112 = scmp.lt.s32.totalorder %s9, 3
    %p113 = pnand %p111, %p112
    %p114 = pneg %p113
    // Predicated region
    $region9: #{tpu_custom_call.1} parent=5 // pred_check
      _
    $region10: #{tpu_custom_call.1} parent=5 // pred_check_branch
      %116 = sbr.rel (%p113) target = $region12
    $region11: #{tpu_custom_call.1} parent=5 // pred_region
      %s117 = ssub.s32 %s9, 1
      // Predicated region
      $region13: #{tpu_custom_call.1} parent=11 // pred_check
        %p118 = pneg %p56
      $region14: #{tpu_custom_call.1} parent=11 // pred_check_branch
        %120 = sbr.rel (%p118) target = $region16
      $region15: #{tpu_custom_call.1} parent=11 // pred_region
        _
      $region16: #{tpu_custom_call.1} parent=11 // pred_fallthru
        _
      // Predicated region
      $region17: #{tpu_custom_call.1} parent=11 // pred_check
        %p121 = pneg %p77
      $region18: #{tpu_custom_call.1} parent=11 // pred_check_branch
        %123 = sbr.rel (%p121) target = $region20
      $region19: #{tpu_custom_call.1} parent=11 // pred_region
        _
      $region20: #{tpu_custom_call.1} parent=11 // pred_fallthru
        _
    $region12: #{tpu_custom_call.1} parent=5 // pred_fallthru
      _
    %p124 = scmp.lt.s32.totalorder %s9, 2
    // Predicated region
    $region21: #{tpu_custom_call.1} parent=5 // pred_check
      %p125 = pneg %p124
    $region22: #{tpu_custom_call.1} parent=5 // pred_check_branch
      %127 = sbr.rel (%p125) target = $region24
    $region23: #{tpu_custom_call.1} parent=5 // pred_region
      // Predicated region
      $region25: #{tpu_custom_call.1} parent=23 // pred_check
        %p128 = pneg %p29
      $region26: #{tpu_custom_call.1} parent=23 // pred_check_branch
        %130 = sbr.rel (%p128) target = $region28
      $region27: #{tpu_custom_call.1} parent=23 // pred_region
        %p131 = scmp.lt.s32.totalorder %s9, 1
        %s132 = scalar_select %p131, %s9, 1
        %s133 = smul.addr %s132, 32
        %s134 = smul.addr %s133, 8
        %s135 = scalar_lea.vmem %s0, %s134
      $region28: #{tpu_custom_call.1} parent=23 // pred_fallthru
        _
    $region24: #{tpu_custom_call.1} parent=5 // pred_fallthru
      _
    %p136 = scmp.le.s32.totalorder 1, %s9
    %p137 = scmp.lt.s32.totalorder %s9, 3
    %p138 = pnand %p136, %p137
    %p139 = pneg %p138
    // Predicated region
    $region29: #{tpu_custom_call.1} parent=5 // pred_check
      _
    $region30: #{tpu_custom_call.1} parent=5 // pred_check_branch
      %141 = sbr.rel (%p138) target = $region32
    $region31: #{tpu_custom_call.1} parent=5 // pred_region
      %s142 = ssub.s32 %s9, 1
      %p143 = scmp.lt.s32.totalorder %s14, 1
      %s144 = scalar_select %p143, %s14, 1
      %s145 = smul.addr %s144, 32
      %s146 = smul.addr %s145, 8
      %s147 = scalar_lea.vmem %s0, %s146
      %p148 = pneg %p35
      %p149 = pneg %p32
      %p150 = pneg %p56
      %p151 = pneg %p53
      %p152 = pneg %p77
      %p153 = pneg %p74
      %p154 = pneg %p103
      %p155 = pneg %p100
      %p156 = scmp.lt.s32.totalorder %s14, 1
      %s157 = scalar_select %p156, %s14, 1
      %s158 = smul.addr %s157, 32
      %s159 = smul.addr %s158, 8
      %s160 = scalar_lea.vmem %s3, %s159
      %p161 = scmp.lt.s32.totalorder %s14, 1
      %s162 = scalar_select %p161, %s14, 1
      %s163 = smul.addr %s162, 32
      %s164 = smul.addr %s163, 8
      %s165 = scalar_lea.vmem %s0, %s164
      %p166 = scmp.lt.s32.totalorder %s14, 1
      %s167 = scalar_select %p166, %s14, 1
      %s168 = smul.addr %s167, 32
      %s169 = smul.addr %s168, 8
      %s170 = scalar_lea.vmem %s3, %s169
      %v172 = vld [vmem:[%s165] sm:$0xff]
      %v173 = vld [vmem:[%s165 + $0x8] sm:$0xff]
      %v174 = vld [vmem:[%s165 + $0x10] sm:$0xff]
      %v175 = vld [vmem:[%s165 + $0x18] sm:$0xff]
      %v176 = vld [vmem:[%s165 + $0x20] sm:$0xff]
      %v177 = vld [vmem:[%s165 + $0x28] sm:$0xff]
      %v178 = vld [vmem:[%s165 + $0x30] sm:$0xff]
      %v179 = vld [vmem:[%s165 + $0x38] sm:$0xff]
      %v180 = vld [vmem:[%s165 + $0x40] sm:$0xff]
      %v181 = vld [vmem:[%s165 + $0x48] sm:$0xff]
      %v182 = vld [vmem:[%s165 + $0x50] sm:$0xff]
      %v183 = vld [vmem:[%s165 + $0x58] sm:$0xff]
      %v184 = vld [vmem:[%s165 + $0x60] sm:$0xff]
      %v185 = vld [vmem:[%s165 + $0x68] sm:$0xff]
      %v186 = vld [vmem:[%s165 + $0x70] sm:$0xff]
      %v187 = vld [vmem:[%s165 + $0x78] sm:$0xff]
      %v188 = vld [vmem:[%s165 + $0x80] sm:$0xff]
      %v189 = vld [vmem:[%s165 + $0x88] sm:$0xff]
      %v190 = vld [vmem:[%s165 + $0x90] sm:$0xff]
      %v191 = vld [vmem:[%s165 + $0x98] sm:$0xff]
      %v192 = vld [vmem:[%s165 + $0xa0] sm:$0xff]
      %v193 = vld [vmem:[%s165 + $0xa8] sm:$0xff]
      %v194 = vld [vmem:[%s165 + $0xb0] sm:$0xff]
      %v195 = vld [vmem:[%s165 + $0xb8] sm:$0xff]
      %v196 = vld [vmem:[%s165 + $0xc0] sm:$0xff]
      %v197 = vld [vmem:[%s165 + $0xc8] sm:$0xff]
      %v198 = vld [vmem:[%s165 + $0xd0] sm:$0xff]
      %v199 = vld [vmem:[%s165 + $0xd8] sm:$0xff]
      %v200 = vld [vmem:[%s165 + $0xe0] sm:$0xff]
      %v201 = vld [vmem:[%s165 + $0xe8] sm:$0xff]
      %v202 = vld [vmem:[%s165 + $0xf0] sm:$0xff]
      %v203 = vld [vmem:[%s165 + $0xf8] sm:$0xff]
      %v220 = vrot.slane %v174, 1
      %v221 = vrot.slane %v172, 1
      %v222 = vrot.slane %v176, 1
      %v223 = vrot.slane %v178, 1
      %v224 = vrot.slane %v180, 1
      %v225 = vrot.slane %v182, 1
      %v226 = vrot.slane %v184, 1
      %v227 = vrot.slane %v186, 1
      %v228 = vrot.slane %v188, 1
      %v229 = vrot.slane %v190, 1
      %v230 = vrot.slane %v192, 1
      %v231 = vrot.slane %v194, 1
      %v232 = vrot.slane %v196, 1
      %v233 = vrot.slane %v198, 1
      %v234 = vrot.slane %v200, 1
      %v235 = vrot.slane %v202, 1
      %vm268 = vcmask 1040384
      %v269 = vrot.slane %v174, 7
      %v270 = vrot.slane %v175, 7
      %v271 = vsel %vm268, %v269, %v270
      %v272 = vrot.slane %v172, 7
      %v273 = vrot.slane %v173, 7
      %v274 = vsel %vm268, %v272, %v273
      %v275 = vrot.slane %v176, 7
      %v276 = vrot.slane %v177, 7
      %v277 = vsel %vm268, %v275, %v276
      %v278 = vrot.slane %v178, 7
      %v279 = vrot.slane %v179, 7
      %v280 = vsel %vm268, %v278, %v279
      %v281 = vrot.slane %v180, 7
      %v282 = vrot.slane %v181, 7
      %v283 = vsel %vm268, %v281, %v282
      %v284 = vrot.slane %v182, 7
      %v285 = vrot.slane %v183, 7
      %v286 = vsel %vm268, %v284, %v285
      %v287 = vrot.slane %v184, 7
      %v288 = vrot.slane %v185, 7
      %v289 = vsel %vm268, %v287, %v288
      %v290 = vrot.slane %v186, 7
      %v291 = vrot.slane %v187, 7
      %v292 = vsel %vm268, %v290, %v291
      %v293 = vrot.slane %v188, 7
      %v294 = vrot.slane %v189, 7
      %v295 = vsel %vm268, %v293, %v294
      %v296 = vrot.slane %v190, 7
      %v297 = vrot.slane %v191, 7
      %v298 = vsel %vm268, %v296, %v297
      %v299 = vrot.slane %v192, 7
      %v300 = vrot.slane %v193, 7
      %v301 = vsel %vm268, %v299, %v300
      %v302 = vrot.slane %v194, 7
      %v303 = vrot.slane %v195, 7
      %v304 = vsel %vm268, %v302, %v303
      %v305 = vrot.slane %v196, 7
      %v306 = vrot.slane %v197, 7
      %v307 = vsel %vm268, %v305, %v306
      %v308 = vrot.slane %v198, 7
      %v309 = vrot.slane %v199, 7
      %v310 = vsel %vm268, %v308, %v309
      %v311 = vrot.slane %v200, 7
      %v312 = vrot.slane %v201, 7
      %v313 = vsel %vm268, %v311, %v312
      %v314 = vrot.slane %v202, 7
      %v315 = vrot.slane %v203, 7
      %v316 = vsel %vm268, %v314, %v315
      %v364 = vrot.slane %v175, 5
      %v365 = vrot.slane %v173, 5
      %v366 = vrot.slane %v177, 5
      %v367 = vrot.slane %v179, 5
      %v368 = vrot.slane %v181, 5
      %v369 = vrot.slane %v183, 5
      %v370 = vrot.slane %v185, 5
      %v371 = vrot.slane %v187, 5
      %v372 = vrot.slane %v189, 5
      %v373 = vrot.slane %v191, 5
      %v374 = vrot.slane %v193, 5
      %v375 = vrot.slane %v195, 5
      %v376 = vrot.slane %v197, 5
      %v377 = vrot.slane %v199, 5
      %v378 = vrot.slane %v201, 5
      %v379 = vrot.slane %v203, 5
      %v396 = vsel %vm268, %v220, %v269
      %v397 = vsel %vm268, %v221, %v272
      %v398 = vsel %vm268, %v222, %v275
      %v399 = vsel %vm268, %v223, %v278
      %v400 = vsel %vm268, %v224, %v281
      %v401 = vsel %vm268, %v225, %v284
      %v402 = vsel %vm268, %v226, %v287
      %v403 = vsel %vm268, %v227, %v290
      %v404 = vsel %vm268, %v228, %v293
      %v405 = vsel %vm268, %v229, %v296
      %v406 = vsel %vm268, %v230, %v299
      %v407 = vsel %vm268, %v231, %v302
      %v408 = vsel %vm268, %v232, %v305
      %v409 = vsel %vm268, %v233, %v308
      %v410 = vsel %vm268, %v234, %v311
      %v411 = vsel %vm268, %v235, %v314
      %v412 = vsel %vm268, %v270, %v364
      %v413 = vsel %vm268, %v273, %v365
      %v414 = vsel %vm268, %v276, %v366
      %v415 = vsel %vm268, %v279, %v367
      %v416 = vsel %vm268, %v282, %v368
      %v417 = vsel %vm268, %v285, %v369
      %v418 = vsel %vm268, %v288, %v370
      %v419 = vsel %vm268, %v291, %v371
      %v420 = vsel %vm268, %v294, %v372
      %v421 = vsel %vm268, %v297, %v373
      %v422 = vsel %vm268, %v300, %v374
      %v423 = vsel %vm268, %v303, %v375
      %v424 = vsel %vm268, %v306, %v376
      %v425 = vsel %vm268, %v309, %v377
      %v426 = vsel %vm268, %v312, %v378
      %v427 = vsel %vm268, %v315, %v379
      %vm458 = vcmask 1046528
      %v459 = vrot.slane %v396, 1
      %v460 = vrot.slane %v271, 1
      %v461 = vsel %vm458, %v459, %v460
      %v462 = vrot.slane %v412, 1
      %v463 = vsel %vm458, %v460, %v462
      %v464 = vrot.slane %v397, 1
      %v465 = vrot.slane %v274, 1
      %v466 = vsel %vm458, %v464, %v465
      %v467 = vrot.slane %v413, 1
      %v468 = vsel %vm458, %v465, %v467
      %v469 = vrot.slane %v398, 1
      %v470 = vrot.slane %v277, 1
      %v471 = vsel %vm458, %v469, %v470
      %v472 = vrot.slane %v414, 1
      %v473 = vsel %vm458, %v470, %v472
      %v474 = vrot.slane %v399, 1
      %v475 = vrot.slane %v280, 1
      %v476 = vsel %vm458, %v474, %v475
      %v477 = vrot.slane %v415, 1
      %v478 = vsel %vm458, %v475, %v477
      %v479 = vrot.slane %v400, 1
      %v480 = vrot.slane %v283, 1
      %v481 = vsel %vm458, %v479, %v480
      %v482 = vrot.slane %v416, 1
      %v483 = vsel %vm458, %v480, %v482
      %v484 = vrot.slane %v401, 1
      %v485 = vrot.slane %v286, 1
      %v486 = vsel %vm458, %v484, %v485
      %v487 = vrot.slane %v417, 1
      %v488 = vsel %vm458, %v485, %v487
      %v489 = vrot.slane %v402, 1
      %v490 = vrot.slane %v289, 1
      %v491 = vsel %vm458, %v489, %v490
      %v492 = vrot.slane %v418, 1
      %v493 = vsel %vm458, %v490, %v492
      %v494 = vrot.slane %v403, 1
      %v495 = vrot.slane %v292, 1
      %v496 = vsel %vm458, %v494, %v495
      %v497 = vrot.slane %v419, 1
      %v498 = vsel %vm458, %v495, %v497
      %v499 = vrot.slane %v404, 1
      %v500 = vrot.slane %v295, 1
      %v501 = vsel %vm458, %v499, %v500
      %v502 = vrot.slane %v420, 1
      %v503 = vsel %vm458, %v500, %v502
      %v504 = vrot.slane %v405, 1
      %v505 = vrot.slane %v298, 1
      %v506 = vsel %vm458, %v504, %v505
      %v507 = vrot.slane %v421, 1
      %v508 = vsel %vm458, %v505, %v507
      %v509 = vrot.slane %v406, 1
      %v510 = vrot.slane %v301, 1
      %v511 = vsel %vm458, %v509, %v510
      %v512 = vrot.slane %v422, 1
      %v513 = vsel %vm458, %v510, %v512
      %v514 = vrot.slane %v407, 1
      %v515 = vrot.slane %v304, 1
      %v516 = vsel %vm458, %v514, %v515
      %v517 = vrot.slane %v423, 1
      %v518 = vsel %vm458, %v515, %v517
      %v519 = vrot.slane %v408, 1
      %v520 = vrot.slane %v307, 1
      %v521 = vsel %vm458, %v519, %v520
      %v522 = vrot.slane %v424, 1
      %v523 = vsel %vm458, %v520, %v522
      %v524 = vrot.slane %v409, 1
      %v525 = vrot.slane %v310, 1
      %v526 = vsel %vm458, %v524, %v525
      %v527 = vrot.slane %v425, 1
      %v528 = vsel %vm458, %v525, %v527
      %v529 = vrot.slane %v410, 1
      %v530 = vrot.slane %v313, 1
      %v531 = vsel %vm458, %v529, %v530
      %v532 = vrot.slane %v426, 1
      %v533 = vsel %vm458, %v530, %v532
      %vm534 = vcmask 1045504
      %v535 = vrot.slane %v396, 2
      %v536 = vrot.slane %v271, 2
      %v537 = vsel %vm534, %v535, %v536
      %v538 = vrot.slane %v412, 2
      %v539 = vsel %vm534, %v536, %v538
      %v540 = vrot.slane %v397, 2
      %v541 = vrot.slane %v274, 2
      %v542 = vsel %vm534, %v540, %v541
      %v543 = vrot.slane %v413, 2
      %v544 = vsel %vm534, %v541, %v543
      %v545 = vrot.slane %v398, 2
      %v546 = vrot.slane %v277, 2
      %v547 = vsel %vm534, %v545, %v546
      %v548 = vrot.slane %v414, 2
      %v549 = vsel %vm534, %v546, %v548
      %v550 = vrot.slane %v399, 2
      %v551 = vrot.slane %v280, 2
      %v552 = vsel %vm534, %v550, %v551
      %v553 = vrot.slane %v415, 2
      %v554 = vsel %vm534, %v551, %v553
      %v555 = vrot.slane %v400, 2
      %v556 = vrot.slane %v283, 2
      %v557 = vsel %vm534, %v555, %v556
      %v558 = vrot.slane %v416, 2
      %v559 = vsel %vm534, %v556, %v558
      %v560 = vrot.slane %v401, 2
      %v561 = vrot.slane %v286, 2
      %v562 = vsel %vm534, %v560, %v561
      %v563 = vrot.slane %v417, 2
      %v564 = vsel %vm534, %v561, %v563
      %v565 = vrot.slane %v402, 2
      %v566 = vrot.slane %v289, 2
      %v567 = vsel %vm534, %v565, %v566
      %v568 = vrot.slane %v418, 2
      %v569 = vsel %vm534, %v566, %v568
      %v570 = vrot.slane %v403, 2
      %v571 = vrot.slane %v292, 2
      %v572 = vsel %vm534, %v570, %v571
      %v573 = vrot.slane %v419, 2
      %v574 = vsel %vm534, %v571, %v573
      %v575 = vrot.slane %v404, 2
      %v576 = vrot.slane %v295, 2
      %v577 = vsel %vm534, %v575, %v576
      %v578 = vrot.slane %v420, 2
      %v579 = vsel %vm534, %v576, %v578
      %v580 = vrot.slane %v405, 2
      %v581 = vrot.slane %v298, 2
      %v582 = vsel %vm534, %v580, %v581
      %v583 = vrot.slane %v421, 2
      %v584 = vsel %vm534, %v581, %v583
      %v585 = vrot.slane %v406, 2
      %v586 = vrot.slane %v301, 2
      %v587 = vsel %vm534, %v585, %v586
      %v588 = vrot.slane %v422, 2
      %v589 = vsel %vm534, %v586, %v588
      %v590 = vrot.slane %v407, 2
      %v591 = vrot.slane %v304, 2
      %v592 = vsel %vm534, %v590, %v591
      %v593 = vrot.slane %v423, 2
      %v594 = vsel %vm534, %v591, %v593
      %v595 = vrot.slane %v408, 2
      %v596 = vrot.slane %v307, 2
      %v597 = vsel %vm534, %v595, %v596
      %v598 = vrot.slane %v424, 2
      %v599 = vsel %vm534, %v596, %v598
      %v600 = vrot.slane %v409, 2
      %v601 = vrot.slane %v310, 2
      %v602 = vsel %vm534, %v600, %v601
      %v603 = vrot.slane %v425, 2
      %v604 = vsel %vm534, %v601, %v603
      %v605 = vrot.slane %v410, 2
      %v606 = vrot.slane %v313, 2
      %v607 = vsel %vm534, %v605, %v606
      %v608 = vrot.slane %v426, 2
      %v609 = vsel %vm534, %v606, %v608
      %v612 = vrot.slane %v411, 1
      %v613 = vrot.slane %v316, 1
      %v614 = vsel %vm458, %v612, %v613
      %v615 = vrot.slane %v427, 1
      %v616 = vsel %vm458, %v613, %v615
      %v617 = vrot.slane %v411, 2
      %v618 = vrot.slane %v316, 2
      %v619 = vsel %vm534, %v617, %v618
      %v620 = vrot.slane %v427, 2
      %v621 = vsel %vm534, %v618, %v620
      %622 = vrot.lane.b32.xlu0 %v461, 4
      %v623 = vpop.permute.xlu0 %622
      %624 = vrot.lane.b32.xlu0 %v463, 4
      %v625 = vpop.permute.xlu0 %624
      %626 = vrot.lane.b32.xlu0 %v466, 4
      %v627 = vpop.permute.xlu0 %626
      %628 = vrot.lane.b32.xlu0 %v468, 4
      %v629 = vpop.permute.xlu0 %628
      %630 = vrot.lane.b32.xlu0 %v471, 4
      %v631 = vpop.permute.xlu0 %630
      %632 = vrot.lane.b32.xlu0 %v473, 4
      %v633 = vpop.permute.xlu0 %632
      %634 = vrot.lane.b32.xlu0 %v476, 4
      %v635 = vpop.permute.xlu0 %634
      %636 = vrot.lane.b32.xlu0 %v478, 4
      %v637 = vpop.permute.xlu0 %636
      %638 = vrot.lane.b32.xlu0 %v481, 4
      %v639 = vpop.permute.xlu0 %638
      %640 = vrot.lane.b32.xlu0 %v483, 4
      %v641 = vpop.permute.xlu0 %640
      %642 = vrot.lane.b32.xlu0 %v486, 4
      %v643 = vpop.permute.xlu0 %642
      %644 = vrot.lane.b32.xlu0 %v488, 4
      %v645 = vpop.permute.xlu0 %644
      %646 = vrot.lane.b32.xlu0 %v491, 4
      %v647 = vpop.permute.xlu0 %646
      %648 = vrot.lane.b32.xlu0 %v493, 4
      %v649 = vpop.permute.xlu0 %648
      %650 = vrot.lane.b32.xlu0 %v496, 4
      %v651 = vpop.permute.xlu0 %650
      %652 = vrot.lane.b32.xlu0 %v498, 4
      %v653 = vpop.permute.xlu0 %652
      %654 = vrot.lane.b32.xlu0 %v501, 4
      %v655 = vpop.permute.xlu0 %654
      %656 = vrot.lane.b32.xlu0 %v503, 4
      %v657 = vpop.permute.xlu0 %656
      %658 = vrot.lane.b32.xlu0 %v506, 4
      %v659 = vpop.permute.xlu0 %658
      %660 = vrot.lane.b32.xlu0 %v508, 4
      %v661 = vpop.permute.xlu0 %660
      %662 = vrot.lane.b32.xlu0 %v511, 4
      %v663 = vpop.permute.xlu0 %662
      %664 = vrot.lane.b32.xlu0 %v513, 4
      %v665 = vpop.permute.xlu0 %664
      %666 = vrot.lane.b32.xlu0 %v516, 4
      %v667 = vpop.permute.xlu0 %666
      %668 = vrot.lane.b32.xlu0 %v518, 4
      %v669 = vpop.permute.xlu0 %668
      %670 = vrot.lane.b32.xlu0 %v521, 4
      %v671 = vpop.permute.xlu0 %670
      %672 = vrot.lane.b32.xlu0 %v523, 4
      %v673 = vpop.permute.xlu0 %672
      %674 = vrot.lane.b32.xlu0 %v526, 4
      %v675 = vpop.permute.xlu0 %674
      %676 = vrot.lane.b32.xlu0 %v528, 4
      %v677 = vpop.permute.xlu0 %676
      %678 = vrot.lane.b32.xlu0 %v531, 4
      %v679 = vpop.permute.xlu0 %678
      %680 = vrot.lane.b32.xlu0 %v533, 4
      %v681 = vpop.permute.xlu0 %680
      %712 = vrot.lane.b32.xlu0 %v537, 8
      %v713 = vpop.permute.xlu0 %712
      %714 = vrot.lane.b32.xlu0 %v539, 8
      %v715 = vpop.permute.xlu0 %714
      %716 = vrot.lane.b32.xlu0 %v542, 8
      %v717 = vpop.permute.xlu0 %716
      %718 = vrot.lane.b32.xlu0 %v544, 8
      %v719 = vpop.permute.xlu0 %718
      %720 = vrot.lane.b32.xlu0 %v547, 8
      %v721 = vpop.permute.xlu0 %720
      %722 = vrot.lane.b32.xlu0 %v549, 8
      %v723 = vpop.permute.xlu0 %722
      %724 = vrot.lane.b32.xlu0 %v552, 8
      %v725 = vpop.permute.xlu0 %724
      %726 = vrot.lane.b32.xlu0 %v554, 8
      %v727 = vpop.permute.xlu0 %726
      %728 = vrot.lane.b32.xlu0 %v557, 8
      %v729 = vpop.permute.xlu0 %728
      %730 = vrot.lane.b32.xlu0 %v559, 8
      %v731 = vpop.permute.xlu0 %730
      %732 = vrot.lane.b32.xlu0 %v562, 8
      %v733 = vpop.permute.xlu0 %732
      %734 = vrot.lane.b32.xlu0 %v564, 8
      %v735 = vpop.permute.xlu0 %734
      %736 = vrot.lane.b32.xlu0 %v567, 8
      %v737 = vpop.permute.xlu0 %736
      %738 = vrot.lane.b32.xlu0 %v569, 8
      %v739 = vpop.permute.xlu0 %738
      %740 = vrot.lane.b32.xlu0 %v572, 8
      %v741 = vpop.permute.xlu0 %740
      %742 = vrot.lane.b32.xlu0 %v574, 8
      %v743 = vpop.permute.xlu0 %742
      %744 = vrot.lane.b32.xlu0 %v577, 8
      %v745 = vpop.permute.xlu0 %744
      %746 = vrot.lane.b32.xlu0 %v579, 8
      %v747 = vpop.permute.xlu0 %746
      %748 = vrot.lane.b32.xlu0 %v582, 8
      %v749 = vpop.permute.xlu0 %748
      %750 = vrot.lane.b32.xlu0 %v584, 8
      %v751 = vpop.permute.xlu0 %750
      %752 = vrot.lane.b32.xlu0 %v587, 8
      %v753 = vpop.permute.xlu0 %752
      %754 = vrot.lane.b32.xlu0 %v589, 8
      %v755 = vpop.permute.xlu0 %754
      %756 = vrot.lane.b32.xlu0 %v592, 8
      %v757 = vpop.permute.xlu0 %756
      %758 = vrot.lane.b32.xlu0 %v594, 8
      %v759 = vpop.permute.xlu0 %758
      %760 = vrot.lane.b32.xlu0 %v597, 8
      %v761 = vpop.permute.xlu0 %760
      %762 = vrot.lane.b32.xlu0 %v599, 8
      %v763 = vpop.permute.xlu0 %762
      %764 = vrot.lane.b32.xlu0 %v602, 8
      %v765 = vpop.permute.xlu0 %764
      %766 = vrot.lane.b32.xlu0 %v604, 8
      %v767 = vpop.permute.xlu0 %766
      %768 = vrot.lane.b32.xlu0 %v607, 8
      %v769 = vpop.permute.xlu0 %768
      %770 = vrot.lane.b32.xlu0 %v609, 8
      %v771 = vpop.permute.xlu0 %770
      %802 = vrot.lane.b32.xlu0 %v397, 12
      %v803 = vpop.permute.xlu0 %802
      %804 = vrot.lane.b32.xlu0 %v274, 12
      %v805 = vpop.permute.xlu0 %804
      %806 = vrot.lane.b32.xlu0 %v396, 12
      %v807 = vpop.permute.xlu0 %806
      %808 = vrot.lane.b32.xlu0 %v271, 12
      %v809 = vpop.permute.xlu0 %808
      %810 = vrot.lane.b32.xlu0 %v398, 12
      %v811 = vpop.permute.xlu0 %810
      %812 = vrot.lane.b32.xlu0 %v277, 12
      %v813 = vpop.permute.xlu0 %812
      %814 = vrot.lane.b32.xlu0 %v399, 12
      %v815 = vpop.permute.xlu0 %814
      %816 = vrot.lane.b32.xlu0 %v280, 12
      %v817 = vpop.permute.xlu0 %816
      %818 = vrot.lane.b32.xlu0 %v400, 12
      %v819 = vpop.permute.xlu0 %818
      %820 = vrot.lane.b32.xlu0 %v283, 12
      %v821 = vpop.permute.xlu0 %820
      %822 = vrot.lane.b32.xlu0 %v401, 12
      %v823 = vpop.permute.xlu0 %822
      %824 = vrot.lane.b32.xlu0 %v286, 12
      %v825 = vpop.permute.xlu0 %824
      %826 = vrot.lane.b32.xlu0 %v402, 12
      %v827 = vpop.permute.xlu0 %826
      %828 = vrot.lane.b32.xlu0 %v289, 12
      %v829 = vpop.permute.xlu0 %828
      %830 = vrot.lane.b32.xlu0 %v403, 12
      %v831 = vpop.permute.xlu0 %830
      %832 = vrot.lane.b32.xlu0 %v292, 12
      %v833 = vpop.permute.xlu0 %832
      %834 = vrot.lane.b32.xlu0 %v404, 12
      %v835 = vpop.permute.xlu0 %834
      %836 = vrot.lane.b32.xlu0 %v295, 12
      %v837 = vpop.permute.xlu0 %836
      %838 = vrot.lane.b32.xlu0 %v405, 12
      %v839 = vpop.permute.xlu0 %838
      %840 = vrot.lane.b32.xlu0 %v298, 12
      %v841 = vpop.permute.xlu0 %840
      %842 = vrot.lane.b32.xlu0 %v406, 12
      %v843 = vpop.permute.xlu0 %842
      %844 = vrot.lane.b32.xlu0 %v301, 12
      %v845 = vpop.permute.xlu0 %844
      %846 = vrot.lane.b32.xlu0 %v407, 12
      %v847 = vpop.permute.xlu0 %846
      %848 = vrot.lane.b32.xlu0 %v304, 12
      %v849 = vpop.permute.xlu0 %848
      %850 = vrot.lane.b32.xlu0 %v408, 12
      %v851 = vpop.permute.xlu0 %850
      %852 = vrot.lane.b32.xlu0 %v307, 12
      %v853 = vpop.permute.xlu0 %852
      %854 = vrot.lane.b32.xlu0 %v409, 12
      %v855 = vpop.permute.xlu0 %854
      %856 = vrot.lane.b32.xlu0 %v310, 12
      %v857 = vpop.permute.xlu0 %856
      %858 = vrot.lane.b32.xlu0 %v410, 12
      %v859 = vpop.permute.xlu0 %858
      %860 = vrot.lane.b32.xlu0 %v313, 12
      %v861 = vpop.permute.xlu0 %860
      %862 = vrot.lane.b32.xlu0 %v411, 12
      %v863 = vpop.permute.xlu0 %862
      %864 = vrot.lane.b32.xlu0 %v316, 12
      %v865 = vpop.permute.xlu0 %864
      %898 = vrot.lane.b32.xlu0 %v466, 16
      %v899 = vpop.permute.xlu0 %898
      %900 = vrot.lane.b32.xlu0 %v468, 16
      %v901 = vpop.permute.xlu0 %900
      %902 = vrot.lane.b32.xlu0 %v461, 16
      %v903 = vpop.permute.xlu0 %902
      %904 = vrot.lane.b32.xlu0 %v463, 16
      %v905 = vpop.permute.xlu0 %904
      %906 = vrot.lane.b32.xlu0 %v471, 16
      %v907 = vpop.permute.xlu0 %906
      %908 = vrot.lane.b32.xlu0 %v473, 16
      %v909 = vpop.permute.xlu0 %908
      %910 = vrot.lane.b32.xlu0 %v476, 16
      %v911 = vpop.permute.xlu0 %910
      %912 = vrot.lane.b32.xlu0 %v478, 16
      %v913 = vpop.permute.xlu0 %912
      %914 = vrot.lane.b32.xlu0 %v481, 16
      %v915 = vpop.permute.xlu0 %914
      %916 = vrot.lane.b32.xlu0 %v483, 16
      %v917 = vpop.permute.xlu0 %916
      %918 = vrot.lane.b32.xlu0 %v486, 16
      %v919 = vpop.permute.xlu0 %918
      %920 = vrot.lane.b32.xlu0 %v488, 16
      %v921 = vpop.permute.xlu0 %920
      %922 = vrot.lane.b32.xlu0 %v491, 16
      %v923 = vpop.permute.xlu0 %922
      %924 = vrot.lane.b32.xlu0 %v493, 16
      %v925 = vpop.permute.xlu0 %924
      %926 = vrot.lane.b32.xlu0 %v496, 16
      %v927 = vpop.permute.xlu0 %926
      %928 = vrot.lane.b32.xlu0 %v498, 16
      %v929 = vpop.permute.xlu0 %928
      %930 = vrot.lane.b32.xlu0 %v501, 16
      %v931 = vpop.permute.xlu0 %930
      %932 = vrot.lane.b32.xlu0 %v503, 16
      %v933 = vpop.permute.xlu0 %932
      %934 = vrot.lane.b32.xlu0 %v506, 16
      %v935 = vpop.permute.xlu0 %934
      %936 = vrot.lane.b32.xlu0 %v508, 16
      %v937 = vpop.permute.xlu0 %936
      %938 = vrot.lane.b32.xlu0 %v511, 16
      %v939 = vpop.permute.xlu0 %938
      %940 = vrot.lane.b32.xlu0 %v513, 16
      %v941 = vpop.permute.xlu0 %940
      %942 = vrot.lane.b32.xlu0 %v516, 16
      %v943 = vpop.permute.xlu0 %942
      %944 = vrot.lane.b32.xlu0 %v518, 16
      %v945 = vpop.permute.xlu0 %944
      %946 = vrot.lane.b32.xlu0 %v521, 16
      %v947 = vpop.permute.xlu0 %946
      %948 = vrot.lane.b32.xlu0 %v523, 16
      %v949 = vpop.permute.xlu0 %948
      %950 = vrot.lane.b32.xlu0 %v526, 16
      %v951 = vpop.permute.xlu0 %950
      %952 = vrot.lane.b32.xlu0 %v528, 16
      %v953 = vpop.permute.xlu0 %952
      %954 = vrot.lane.b32.xlu0 %v531, 16
      %v955 = vpop.permute.xlu0 %954
      %956 = vrot.lane.b32.xlu0 %v533, 16
      %v957 = vpop.permute.xlu0 %956
      %958 = vrot.lane.b32.xlu0 %v614, 16
      %v959 = vpop.permute.xlu0 %958
      %960 = vrot.lane.b32.xlu0 %v616, 16
      %v961 = vpop.permute.xlu0 %960
      %994 = vrot.lane.b32.xlu0 %v542, 20
      %v995 = vpop.permute.xlu0 %994
      %996 = vrot.lane.b32.xlu0 %v544, 20
      %v997 = vpop.permute.xlu0 %996
      %998 = vrot.lane.b32.xlu0 %v537, 20
      %v999 = vpop.permute.xlu0 %998
      %1000 = vrot.lane.b32.xlu0 %v539, 20
      %v1001 = vpop.permute.xlu0 %1000
      %1002 = vrot.lane.b32.xlu0 %v547, 20
      %v1003 = vpop.permute.xlu0 %1002
      %1004 = vrot.lane.b32.xlu0 %v549, 20
      %v1005 = vpop.permute.xlu0 %1004
      %1006 = vrot.lane.b32.xlu0 %v552, 20
      %v1007 = vpop.permute.xlu0 %1006
      %1008 = vrot.lane.b32.xlu0 %v554, 20
      %v1009 = vpop.permute.xlu0 %1008
      %1010 = vrot.lane.b32.xlu0 %v557, 20
      %v1011 = vpop.permute.xlu0 %1010
      %1012 = vrot.lane.b32.xlu0 %v559, 20
      %v1013 = vpop.permute.xlu0 %1012
      %1014 = vrot.lane.b32.xlu0 %v562, 20
      %v1015 = vpop.permute.xlu0 %1014
      %1016 = vrot.lane.b32.xlu0 %v564, 20
      %v1017 = vpop.permute.xlu0 %1016
      %1018 = vrot.lane.b32.xlu0 %v567, 20
      %v1019 = vpop.permute.xlu0 %1018
      %1020 = vrot.lane.b32.xlu0 %v569, 20
      %v1021 = vpop.permute.xlu0 %1020
      %1022 = vrot.lane.b32.xlu0 %v572, 20
      %v1023 = vpop.permute.xlu0 %1022
      %1024 = vrot.lane.b32.xlu0 %v574, 20
      %v1025 = vpop.permute.xlu0 %1024
      %1026 = vrot.lane.b32.xlu0 %v577, 20
      %v1027 = vpop.permute.xlu0 %1026
      %1028 = vrot.lane.b32.xlu0 %v579, 20
      %v1029 = vpop.permute.xlu0 %1028
      %1030 = vrot.lane.b32.xlu0 %v582, 20
      %v1031 = vpop.permute.xlu0 %1030
      %1032 = vrot.lane.b32.xlu0 %v584, 20
      %v1033 = vpop.permute.xlu0 %1032
      %1034 = vrot.lane.b32.xlu0 %v587, 20
      %v1035 = vpop.permute.xlu0 %1034
      %1036 = vrot.lane.b32.xlu0 %v589, 20
      %v1037 = vpop.permute.xlu0 %1036
      %1038 = vrot.lane.b32.xlu0 %v592, 20
      %v1039 = vpop.permute.xlu0 %1038
      %1040 = vrot.lane.b32.xlu0 %v594, 20
      %v1041 = vpop.permute.xlu0 %1040
      %1042 = vrot.lane.b32.xlu0 %v597, 20
      %v1043 = vpop.permute.xlu0 %1042
      %1044 = vrot.lane.b32.xlu0 %v599, 20
      %v1045 = vpop.permute.xlu0 %1044
      %1046 = vrot.lane.b32.xlu0 %v602, 20
      %v1047 = vpop.permute.xlu0 %1046
      %1048 = vrot.lane.b32.xlu0 %v604, 20
      %v1049 = vpop.permute.xlu0 %1048
      %1050 = vrot.lane.b32.xlu0 %v607, 20
      %v1051 = vpop.permute.xlu0 %1050
      %1052 = vrot.lane.b32.xlu0 %v609, 20
      %v1053 = vpop.permute.xlu0 %1052
      %1054 = vrot.lane.b32.xlu0 %v619, 20
      %v1055 = vpop.permute.xlu0 %1054
      %1056 = vrot.lane.b32.xlu0 %v621, 20
      %v1057 = vpop.permute.xlu0 %1056
      %1090 = vrot.lane.b32.xlu0 %v396, 24
      %v1091 = vpop.permute.xlu0 %1090
      %1092 = vrot.lane.b32.xlu0 %v271, 24
      %v1093 = vpop.permute.xlu0 %1092
      %1094 = vrot.lane.b32.xlu0 %v398, 24
      %v1095 = vpop.permute.xlu0 %1094
      %1096 = vrot.lane.b32.xlu0 %v277, 24
      %v1097 = vpop.permute.xlu0 %1096
      %1098 = vrot.lane.b32.xlu0 %v399, 24
      %v1099 = vpop.permute.xlu0 %1098
      %1100 = vrot.lane.b32.xlu0 %v280, 24
      %v1101 = vpop.permute.xlu0 %1100
      %1102 = vrot.lane.b32.xlu0 %v400, 24
      %v1103 = vpop.permute.xlu0 %1102
      %1104 = vrot.lane.b32.xlu0 %v283, 24
      %v1105 = vpop.permute.xlu0 %1104
      %1106 = vrot.lane.b32.xlu0 %v401, 24
      %v1107 = vpop.permute.xlu0 %1106
      %1108 = vrot.lane.b32.xlu0 %v286, 24
      %v1109 = vpop.permute.xlu0 %1108
      %1110 = vrot.lane.b32.xlu0 %v402, 24
      %v1111 = vpop.permute.xlu0 %1110
      %1112 = vrot.lane.b32.xlu0 %v289, 24
      %v1113 = vpop.permute.xlu0 %1112
      %1114 = vrot.lane.b32.xlu0 %v403, 24
      %v1115 = vpop.permute.xlu0 %1114
      %1116 = vrot.lane.b32.xlu0 %v292, 24
      %v1117 = vpop.permute.xlu0 %1116
      %1118 = vrot.lane.b32.xlu0 %v404, 24
      %v1119 = vpop.permute.xlu0 %1118
      %1120 = vrot.lane.b32.xlu0 %v295, 24
      %v1121 = vpop.permute.xlu0 %1120
      %1122 = vrot.lane.b32.xlu0 %v405, 24
      %v1123 = vpop.permute.xlu0 %1122
      %1124 = vrot.lane.b32.xlu0 %v298, 24
      %v1125 = vpop.permute.xlu0 %1124
      %1126 = vrot.lane.b32.xlu0 %v406, 24
      %v1127 = vpop.permute.xlu0 %1126
      %1128 = vrot.lane.b32.xlu0 %v301, 24
      %v1129 = vpop.permute.xlu0 %1128
      %1130 = vrot.lane.b32.xlu0 %v407, 24
      %v1131 = vpop.permute.xlu0 %1130
      %1132 = vrot.lane.b32.xlu0 %v304, 24
      %v1133 = vpop.permute.xlu0 %1132
      %1134 = vrot.lane.b32.xlu0 %v408, 24
      %v1135 = vpop.permute.xlu0 %1134
      %1136 = vrot.lane.b32.xlu0 %v307, 24
      %v1137 = vpop.permute.xlu0 %1136
      %1138 = vrot.lane.b32.xlu0 %v409, 24
      %v1139 = vpop.permute.xlu0 %1138
      %1140 = vrot.lane.b32.xlu0 %v310, 24
      %v1141 = vpop.permute.xlu0 %1140
      %1142 = vrot.lane.b32.xlu0 %v410, 24
      %v1143 = vpop.permute.xlu0 %1142
      %1144 = vrot.lane.b32.xlu0 %v313, 24
      %v1145 = vpop.permute.xlu0 %1144
      %1146 = vrot.lane.b32.xlu0 %v411, 24
      %v1147 = vpop.permute.xlu0 %1146
      %1148 = vrot.lane.b32.xlu0 %v316, 24
      %v1149 = vpop.permute.xlu0 %1148
      %1180 = vrot.lane.b32.xlu0 %v461, 28
      %v1181 = vpop.permute.xlu0 %1180
      %1182 = vrot.lane.b32.xlu0 %v463, 28
      %v1183 = vpop.permute.xlu0 %1182
      %1184 = vrot.lane.b32.xlu0 %v471, 28
      %v1185 = vpop.permute.xlu0 %1184
      %1186 = vrot.lane.b32.xlu0 %v473, 28
      %v1187 = vpop.permute.xlu0 %1186
      %1188 = vrot.lane.b32.xlu0 %v476, 28
      %v1189 = vpop.permute.xlu0 %1188
      %1190 = vrot.lane.b32.xlu0 %v478, 28
      %v1191 = vpop.permute.xlu0 %1190
      %1192 = vrot.lane.b32.xlu0 %v481, 28
      %v1193 = vpop.permute.xlu0 %1192
      %1194 = vrot.lane.b32.xlu0 %v483, 28
      %v1195 = vpop.permute.xlu0 %1194
      %1196 = vrot.lane.b32.xlu0 %v486, 28
      %v1197 = vpop.permute.xlu0 %1196
      %1198 = vrot.lane.b32.xlu0 %v488, 28
      %v1199 = vpop.permute.xlu0 %1198
      %1200 = vrot.lane.b32.xlu0 %v491, 28
      %v1201 = vpop.permute.xlu0 %1200
      %1202 = vrot.lane.b32.xlu0 %v493, 28
      %v1203 = vpop.permute.xlu0 %1202
      %1204 = vrot.lane.b32.xlu0 %v496, 28
      %v1205 = vpop.permute.xlu0 %1204
      %1206 = vrot.lane.b32.xlu0 %v498, 28
      %v1207 = vpop.permute.xlu0 %1206
      %1208 = vrot.lane.b32.xlu0 %v501, 28
      %v1209 = vpop.permute.xlu0 %1208
      %1210 = vrot.lane.b32.xlu0 %v503, 28
      %v1211 = vpop.permute.xlu0 %1210
      %1212 = vrot.lane.b32.xlu0 %v506, 28
      %v1213 = vpop.permute.xlu0 %1212
      %1214 = vrot.lane.b32.xlu0 %v508, 28
      %v1215 = vpop.permute.xlu0 %1214
      %1216 = vrot.lane.b32.xlu0 %v511, 28
      %v1217 = vpop.permute.xlu0 %1216
      %1218 = vrot.lane.b32.xlu0 %v513, 28
      %v1219 = vpop.permute.xlu0 %1218
      %1220 = vrot.lane.b32.xlu0 %v516, 28
      %v1221 = vpop.permute.xlu0 %1220
      %1222 = vrot.lane.b32.xlu0 %v518, 28
      %v1223 = vpop.permute.xlu0 %1222
      %1224 = vrot.lane.b32.xlu0 %v521, 28
      %v1225 = vpop.permute.xlu0 %1224
      %1226 = vrot.lane.b32.xlu0 %v523, 28
      %v1227 = vpop.permute.xlu0 %1226
      %1228 = vrot.lane.b32.xlu0 %v526, 28
      %v1229 = vpop.permute.xlu0 %1228
      %1230 = vrot.lane.b32.xlu0 %v528, 28
      %v1231 = vpop.permute.xlu0 %1230
      %1232 = vrot.lane.b32.xlu0 %v531, 28
      %v1233 = vpop.permute.xlu0 %1232
      %1234 = vrot.lane.b32.xlu0 %v533, 28
      %v1235 = vpop.permute.xlu0 %1234
      %1236 = vrot.lane.b32.xlu0 %v614, 28
      %v1237 = vpop.permute.xlu0 %1236
      %1238 = vrot.lane.b32.xlu0 %v616, 28
      %v1239 = vpop.permute.xlu0 %1238
      %1270 = vrot.lane.b32.xlu0 %v537, 32
      %v1271 = vpop.permute.xlu0 %1270
      %1272 = vrot.lane.b32.xlu0 %v539, 32
      %v1273 = vpop.permute.xlu0 %1272
      %1274 = vrot.lane.b32.xlu0 %v547, 32
      %v1275 = vpop.permute.xlu0 %1274
      %1276 = vrot.lane.b32.xlu0 %v549, 32
      %v1277 = vpop.permute.xlu0 %1276
      %1278 = vrot.lane.b32.xlu0 %v552, 32
      %v1279 = vpop.permute.xlu0 %1278
      %1280 = vrot.lane.b32.xlu0 %v554, 32
      %v1281 = vpop.permute.xlu0 %1280
      %1282 = vrot.lane.b32.xlu0 %v557, 32
      %v1283 = vpop.permute.xlu0 %1282
      %1284 = vrot.lane.b32.xlu0 %v559, 32
      %v1285 = vpop.permute.xlu0 %1284
      %1286 = vrot.lane.b32.xlu0 %v562, 32
      %v1287 = vpop.permute.xlu0 %1286
      %1288 = vrot.lane.b32.xlu0 %v564, 32
      %v1289 = vpop.permute.xlu0 %1288
      %1290 = vrot.lane.b32.xlu0 %v567, 32
      %v1291 = vpop.permute.xlu0 %1290
      %1292 = vrot.lane.b32.xlu0 %v569, 32
      %v1293 = vpop.permute.xlu0 %1292
      %1294 = vrot.lane.b32.xlu0 %v572, 32
      %v1295 = vpop.permute.xlu0 %1294
      %1296 = vrot.lane.b32.xlu0 %v574, 32
      %v1297 = vpop.permute.xlu0 %1296
      %1298 = vrot.lane.b32.xlu0 %v577, 32
      %v1299 = vpop.permute.xlu0 %1298
      %1300 = vrot.lane.b32.xlu0 %v579, 32
      %v1301 = vpop.permute.xlu0 %1300
      %1302 = vrot.lane.b32.xlu0 %v582, 32
      %v1303 = vpop.permute.xlu0 %1302
      %1304 = vrot.lane.b32.xlu0 %v584, 32
      %v1305 = vpop.permute.xlu0 %1304
      %1306 = vrot.lane.b32.xlu0 %v587, 32
      %v1307 = vpop.permute.xlu0 %1306
      %1308 = vrot.lane.b32.xlu0 %v589, 32
      %v1309 = vpop.permute.xlu0 %1308
      %1310 = vrot.lane.b32.xlu0 %v592, 32
      %v1311 = vpop.permute.xlu0 %1310
      %1312 = vrot.lane.b32.xlu0 %v594, 32
      %v1313 = vpop.permute.xlu0 %1312
      %1314 = vrot.lane.b32.xlu0 %v597, 32
      %v1315 = vpop.permute.xlu0 %1314
      %1316 = vrot.lane.b32.xlu0 %v599, 32
      %v1317 = vpop.permute.xlu0 %1316
      %1318 = vrot.lane.b32.xlu0 %v602, 32
      %v1319 = vpop.permute.xlu0 %1318
      %1320 = vrot.lane.b32.xlu0 %v604, 32
      %v1321 = vpop.permute.xlu0 %1320
      %1322 = vrot.lane.b32.xlu0 %v607, 32
      %v1323 = vpop.permute.xlu0 %1322
      %1324 = vrot.lane.b32.xlu0 %v609, 32
      %v1325 = vpop.permute.xlu0 %1324
      %1326 = vrot.lane.b32.xlu0 %v619, 32
      %v1327 = vpop.permute.xlu0 %1326
      %1328 = vrot.lane.b32.xlu0 %v621, 32
      %v1329 = vpop.permute.xlu0 %1328
      %vm1360 = vcmask 31744
      %v1361 = vsel %vm1360, %v396, %v623
      %v1362 = vsel %vm1360, %v271, %v625
      %v1363 = vsel %vm1360, %v397, %v627
      %v1364 = vsel %vm1360, %v274, %v629
      %v1365 = vsel %vm1360, %v398, %v631
      %v1366 = vsel %vm1360, %v277, %v633
      %v1367 = vsel %vm1360, %v399, %v635
      %v1368 = vsel %vm1360, %v280, %v637
      %v1369 = vsel %vm1360, %v400, %v639
      %v1370 = vsel %vm1360, %v283, %v641
      %v1371 = vsel %vm1360, %v401, %v643
      %v1372 = vsel %vm1360, %v286, %v645
      %v1373 = vsel %vm1360, %v402, %v647
      %v1374 = vsel %vm1360, %v289, %v649
      %v1375 = vsel %vm1360, %v403, %v651
      %v1376 = vsel %vm1360, %v292, %v653
      %v1377 = vsel %vm1360, %v404, %v655
      %v1378 = vsel %vm1360, %v295, %v657
      %v1379 = vsel %vm1360, %v405, %v659
      %v1380 = vsel %vm1360, %v298, %v661
      %v1381 = vsel %vm1360, %v406, %v663
      %v1382 = vsel %vm1360, %v301, %v665
      %v1383 = vsel %vm1360, %v407, %v667
      %v1384 = vsel %vm1360, %v304, %v669
      %v1385 = vsel %vm1360, %v408, %v671
      %v1386 = vsel %vm1360, %v307, %v673
      %v1387 = vsel %vm1360, %v409, %v675
      %v1388 = vsel %vm1360, %v310, %v677
      %v1389 = vsel %vm1360, %v410, %v679
      %v1390 = vsel %vm1360, %v313, %v681
      %vm1391 = vcmask 64512
      %v1392 = vsel %vm1391, %v1361, %v713
      %v1393 = vsel %vm1391, %v1362, %v715
      %v1394 = vsel %vm1391, %v1363, %v717
      %v1395 = vsel %vm1391, %v1364, %v719
      %v1396 = vsel %vm1391, %v1365, %v721
      %v1397 = vsel %vm1391, %v1366, %v723
      %v1398 = vsel %vm1391, %v1367, %v725
      %v1399 = vsel %vm1391, %v1368, %v727
      %v1400 = vsel %vm1391, %v1369, %v729
      %v1401 = vsel %vm1391, %v1370, %v731
      %v1402 = vsel %vm1391, %v1371, %v733
      %v1403 = vsel %vm1391, %v1372, %v735
      %v1404 = vsel %vm1391, %v1373, %v737
      %v1405 = vsel %vm1391, %v1374, %v739
      %v1406 = vsel %vm1391, %v1375, %v741
      %v1407 = vsel %vm1391, %v1376, %v743
      %v1408 = vsel %vm1391, %v1377, %v745
      %v1409 = vsel %vm1391, %v1378, %v747
      %v1410 = vsel %vm1391, %v1379, %v749
      %v1411 = vsel %vm1391, %v1380, %v751
      %v1412 = vsel %vm1391, %v1381, %v753
      %v1413 = vsel %vm1391, %v1382, %v755
      %v1414 = vsel %vm1391, %v1383, %v757
      %v1415 = vsel %vm1391, %v1384, %v759
      %v1416 = vsel %vm1391, %v1385, %v761
      %v1417 = vsel %vm1391, %v1386, %v763
      %v1418 = vsel %vm1391, %v1387, %v765
      %v1419 = vsel %vm1391, %v1388, %v767
      %v1420 = vsel %vm1391, %v1389, %v769
      %v1421 = vsel %vm1391, %v1390, %v771
      %vm1422 = vcmask 97280
      %v1423 = vsel %vm1422, %v1392, %v803
      %v1424 = vsel %vm1422, %v1393, %v805
      %v1425 = vsel %vm1422, %v1394, %v807
      %v1426 = vsel %vm1422, %v1395, %v809
      %v1427 = vsel %vm1422, %v1392, %v811
      %v1428 = vsel %vm1422, %v1393, %v813
      %v1429 = vsel %vm1422, %v1396, %v815
      %v1430 = vsel %vm1422, %v1397, %v817
      %v1431 = vsel %vm1422, %v1398, %v819
      %v1432 = vsel %vm1422, %v1399, %v821
      %v1433 = vsel %vm1422, %v1400, %v823
      %v1434 = vsel %vm1422, %v1401, %v825
      %v1435 = vsel %vm1422, %v1402, %v827
      %v1436 = vsel %vm1422, %v1403, %v829
      %v1437 = vsel %vm1422, %v1404, %v831
      %v1438 = vsel %vm1422, %v1405, %v833
      %v1439 = vsel %vm1422, %v1406, %v835
      %v1440 = vsel %vm1422, %v1407, %v837
      %v1441 = vsel %vm1422, %v1408, %v839
      %v1442 = vsel %vm1422, %v1409, %v841
      %v1443 = vsel %vm1422, %v1410, %v843
      %v1444 = vsel %vm1422, %v1411, %v845
      %v1445 = vsel %vm1422, %v1412, %v847
      %v1446 = vsel %vm1422, %v1413, %v849
      %v1447 = vsel %vm1422, %v1414, %v851
      %v1448 = vsel %vm1422, %v1415, %v853
      %v1449 = vsel %vm1422, %v1416, %v855
      %v1450 = vsel %vm1422, %v1417, %v857
      %v1451 = vsel %vm1422, %v1418, %v859
      %v1452 = vsel %vm1422, %v1419, %v861
      %v1453 = vsel %vm1422, %v1420, %v863
      %v1454 = vsel %vm1422, %v1421, %v865
      %vm1455 = vcmask 130048
      %v1456 = vsel %vm1455, %v1423, %v899
      %v1457 = vsel %vm1455, %v1424, %v901
      %v1458 = vsel %vm1455, %v1425, %v903
      %v1459 = vsel %vm1455, %v1426, %v905
      %v1460 = vsel %vm1455, %v1427, %v907
      %v1461 = vsel %vm1455, %v1428, %v909
      %v1462 = vsel %vm1455, %v1429, %v911
      %v1463 = vsel %vm1455, %v1430, %v913
      %v1464 = vsel %vm1455, %v1431, %v915
      %v1465 = vsel %vm1455, %v1432, %v917
      %v1466 = vsel %vm1455, %v1433, %v919
      %v1467 = vsel %vm1455, %v1434, %v921
      %v1468 = vsel %vm1455, %v1435, %v923
      %v1469 = vsel %vm1455, %v1436, %v925
      %v1470 = vsel %vm1455, %v1437, %v927
      %v1471 = vsel %vm1455, %v1438, %v929
      %v1472 = vsel %vm1455, %v1439, %v931
      %v1473 = vsel %vm1455, %v1440, %v933
      %v1474 = vsel %vm1455, %v1441, %v935
      %v1475 = vsel %vm1455, %v1442, %v937
      %v1476 = vsel %vm1455, %v1443, %v939
      %v1477 = vsel %vm1455, %v1444, %v941
      %v1478 = vsel %vm1455, %v1445, %v943
      %v1479 = vsel %vm1455, %v1446, %v945
      %v1480 = vsel %vm1455, %v1447, %v947
      %v1481 = vsel %vm1455, %v1448, %v949
      %v1482 = vsel %vm1455, %v1449, %v951
      %v1483 = vsel %vm1455, %v1450, %v953
      %v1484 = vsel %vm1455, %v1451, %v955
      %v1485 = vsel %vm1455, %v1452, %v957
      %v1486 = vsel %vm1455, %v1453, %v959
      %v1487 = vsel %vm1455, %v1454, %v961
      %vm1488 = vcmask 162816
      %v1489 = vsel %vm1488, %v1456, %v995
      %v1490 = vsel %vm1488, %v1457, %v997
      %v1491 = vsel %vm1488, %v1458, %v999
      %v1492 = vsel %vm1488, %v1459, %v1001
      %v1493 = vsel %vm1488, %v1460, %v1003
      %v1494 = vsel %vm1488, %v1461, %v1005
      %v1495 = vsel %vm1488, %v1462, %v1007
      %v1496 = vsel %vm1488, %v1463, %v1009
      %v1497 = vsel %vm1488, %v1464, %v1011
      %v1498 = vsel %vm1488, %v1465, %v1013
      %v1499 = vsel %vm1488, %v1466, %v1015
      %v1500 = vsel %vm1488, %v1467, %v1017
      %v1501 = vsel %vm1488, %v1468, %v1019
      %v1502 = vsel %vm1488, %v1469, %v1021
      %v1503 = vsel %vm1488, %v1470, %v1023
      %v1504 = vsel %vm1488, %v1471, %v1025
      %v1505 = vsel %vm1488, %v1472, %v1027
      %v1506 = vsel %vm1488, %v1473, %v1029
      %v1507 = vsel %vm1488, %v1474, %v1031
      %v1508 = vsel %vm1488, %v1475, %v1033
      %v1509 = vsel %vm1488, %v1476, %v1035
      %v1510 = vsel %vm1488, %v1477, %v1037
      %v1511 = vsel %vm1488, %v1478, %v1039
      %v1512 = vsel %vm1488, %v1479, %v1041
      %v1513 = vsel %vm1488, %v1480, %v1043
      %v1514 = vsel %vm1488, %v1481, %v1045
      %v1515 = vsel %vm1488, %v1482, %v1047
      %v1516 = vsel %vm1488, %v1483, %v1049
      %v1517 = vsel %vm1488, %v1484, %v1051
      %v1518 = vsel %vm1488, %v1485, %v1053
      %v1519 = vsel %vm1488, %v1486, %v1055
      %v1520 = vsel %vm1488, %v1487, %v1057
      %vm1521 = vcmask 195584
      %v1522 = vsel %vm1521, %v1489, %v1091
      %v1523 = vsel %vm1521, %v1490, %v1093
      %v1524 = vsel %vm1521, %v1491, %v1095
      %v1525 = vsel %vm1521, %v1492, %v1097
      %v1526 = vsel %vm1521, %v1493, %v1099
      %v1527 = vsel %vm1521, %v1494, %v1101
      %v1528 = vsel %vm1521, %v1495, %v1103
      %v1529 = vsel %vm1521, %v1496, %v1105
      %v1530 = vsel %vm1521, %v1497, %v1107
      %v1531 = vsel %vm1521, %v1498, %v1109
      %v1532 = vsel %vm1521, %v1499, %v1111
      %v1533 = vsel %vm1521, %v1500, %v1113
      %v1534 = vsel %vm1521, %v1501, %v1115
      %v1535 = vsel %vm1521, %v1502, %v1117
      %v1536 = vsel %vm1521, %v1503, %v1119
      %v1537 = vsel %vm1521, %v1504, %v1121
      %v1538 = vsel %vm1521, %v1505, %v1123
      %v1539 = vsel %vm1521, %v1506, %v1125
      %v1540 = vsel %vm1521, %v1507, %v1127
      %v1541 = vsel %vm1521, %v1508, %v1129
      %v1542 = vsel %vm1521, %v1509, %v1131
      %v1543 = vsel %vm1521, %v1510, %v1133
      %v1544 = vsel %vm1521, %v1511, %v1135
      %v1545 = vsel %vm1521, %v1512, %v1137
      %v1546 = vsel %vm1521, %v1513, %v1139
      %v1547 = vsel %vm1521, %v1514, %v1141
      %v1548 = vsel %vm1521, %v1515, %v1143
      %v1549 = vsel %vm1521, %v1516, %v1145
      %v1550 = vsel %vm1521, %v1517, %v1147
      %v1551 = vsel %vm1521, %v1518, %v1149
      %v1552 = vsel %vm1521, %v1519, %v1143
      %v1553 = vsel %vm1521, %v1520, %v1145
      %vm1554 = vcmask 228352
      %v1555 = vsel %vm1554, %v1522, %v1181
      %v1556 = vsel %vm1554, %v1523, %v1183
      %v1557 = vsel %vm1554, %v1524, %v1185
      %v1558 = vsel %vm1554, %v1525, %v1187
      %v1559 = vsel %vm1554, %v1526, %v1189
      %v1560 = vsel %vm1554, %v1527, %v1191
      %v1561 = vsel %vm1554, %v1528, %v1193
      %v1562 = vsel %vm1554, %v1529, %v1195
      %v1563 = vsel %vm1554, %v1530, %v1197
      %v1564 = vsel %vm1554, %v1531, %v1199
      %v1565 = vsel %vm1554, %v1532, %v1201
      %v1566 = vsel %vm1554, %v1533, %v1203
      %v1567 = vsel %vm1554, %v1534, %v1205
      %v1568 = vsel %vm1554, %v1535, %v1207
      %v1569 = vsel %vm1554, %v1536, %v1209
      %v1570 = vsel %vm1554, %v1537, %v1211
      %v1571 = vsel %vm1554, %v1538, %v1213
      %v1572 = vsel %vm1554, %v1539, %v1215
      %v1573 = vsel %vm1554, %v1540, %v1217
      %v1574 = vsel %vm1554, %v1541, %v1219
      %v1575 = vsel %vm1554, %v1542, %v1221
      %v1576 = vsel %vm1554, %v1543, %v1223
      %v1577 = vsel %vm1554, %v1544, %v1225
      %v1578 = vsel %vm1554, %v1545, %v1227
      %v1579 = vsel %vm1554, %v1546, %v1229
      %v1580 = vsel %vm1554, %v1547, %v1231
      %v1581 = vsel %vm1554, %v1548, %v1233
      %v1582 = vsel %vm1554, %v1549, %v1235
      %v1583 = vsel %vm1554, %v1550, %v1237
      %v1584 = vsel %vm1554, %v1551, %v1239
      %v1585 = vsel %vm1554, %v1552, %v1233
      %v1586 = vsel %vm1554, %v1553, %v1235
      %vm1587 = vcmask 261120
      %v1588 = vsel %vm1587, %v1555, %v1271
      %v1589 = vsel %vm1587, %v1556, %v1273
      %v1590 = vsel %vm1587, %v1557, %v1275
      %v1591 = vsel %vm1587, %v1558, %v1277
      %v1592 = vsel %vm1587, %v1559, %v1279
      %v1593 = vsel %vm1587, %v1560, %v1281
      %v1594 = vsel %vm1587, %v1561, %v1283
      %v1595 = vsel %vm1587, %v1562, %v1285
      %v1596 = vsel %vm1587, %v1563, %v1287
      %v1597 = vsel %vm1587, %v1564, %v1289
      %v1598 = vsel %vm1587, %v1565, %v1291
      %v1599 = vsel %vm1587, %v1566, %v1293
      %v1600 = vsel %vm1587, %v1567, %v1295
      %v1601 = vsel %vm1587, %v1568, %v1297
      %v1602 = vsel %vm1587, %v1569, %v1299
      %v1603 = vsel %vm1587, %v1570, %v1301
      %v1604 = vsel %vm1587, %v1571, %v1303
      %v1605 = vsel %vm1587, %v1572, %v1305
      %v1606 = vsel %vm1587, %v1573, %v1307
      %v1607 = vsel %vm1587, %v1574, %v1309
      %v1608 = vsel %vm1587, %v1575, %v1311
      %v1609 = vsel %vm1587, %v1576, %v1313
      %v1610 = vsel %vm1587, %v1577, %v1315
      %v1611 = vsel %vm1587, %v1578, %v1317
      %v1612 = vsel %vm1587, %v1579, %v1319
      %v1613 = vsel %vm1587, %v1580, %v1321
      %v1614 = vsel %vm1587, %v1581, %v1323
      %v1615 = vsel %vm1587, %v1582, %v1325
      %v1616 = vsel %vm1587, %v1583, %v1327
      %v1617 = vsel %vm1587, %v1584, %v1329
      %v1618 = vsel %vm1587, %v1585, %v1323
      %v1619 = vsel %vm1587, %v1586, %v1325
      %v1620 = vpack.c.bf16 %v1589, %v1588
      %v1621 = vpack.c.bf16 %v1591, %v1590
      %v1622 = vpack.c.bf16 %v1593, %v1592
      %v1623 = vpack.c.bf16 %v1595, %v1594
      %v1624 = vpack.c.bf16 %v1597, %v1596
      %v1625 = vpack.c.bf16 %v1599, %v1598
      %v1626 = vpack.c.bf16 %v1601, %v1600
      %v1627 = vpack.c.bf16 %v1603, %v1602
      %v1628 = vpack.c.bf16 %v1605, %v1604
      %v1629 = vpack.c.bf16 %v1607, %v1606
      %v1630 = vpack.c.bf16 %v1609, %v1608
      %v1631 = vpack.c.bf16 %v1611, %v1610
      %v1632 = vpack.c.bf16 %v1613, %v1612
      %v1633 = vpack.c.bf16 %v1615, %v1614
      %v1634 = vpack.c.bf16 %v1617, %v1616
      %v1635 = vpack.c.bf16 %v1619, %v1618
      %v1636 = vld [vmem:[%s1] sm:$0xf]
      %v1637 = vld [vmem:[%s1 + $0x4] sm:$0xf]
      %v1638 = vld [vmem:[%s1 + $0x8] sm:$0xf]
      %v1639 = vld [vmem:[%s1 + $0xc] sm:$0xf]
      %v1640 = vld [vmem:[%s1 + $0x10] sm:$0x3]
      %v1646 = vunpack.c.l.b16 %v1636
      %v1647 = vunpack.c.l.b16 %v1637
      %v1648 = vunpack.c.l.b16 %v1638
      %v1649 = vunpack.c.l.b16 %v1639
      %v1650 = vunpack.c.l.b16 %v1640
      %v1651 = vpack.c.b16 %v1647, %v1646
      %v1652 = vpack.c.b16 %v1649, %v1648
      %v1653 = vpack.c.b16 %v1650, %v1650
      %vm1656 = vcmask 293888
      %v1658 = vsel %vm1656, %v1620, 0
      %v1661 = vsel %vm1656, %v1621, 0
      %v1664 = vsel %vm1656, %v1622, 0
      %v1667 = vsel %vm1656, %v1623, 0
      %v1670 = vsel %vm1656, %v1624, 0
      %v1673 = vsel %vm1656, %v1625, 0
      %v1676 = vsel %vm1656, %v1626, 0
      %v1679 = vsel %vm1656, %v1627, 0
      %v1682 = vsel %vm1656, %v1628, 0
      %v1685 = vsel %vm1656, %v1629, 0
      %v1688 = vsel %vm1656, %v1630, 0
      %v1691 = vsel %vm1656, %v1631, 0
      %v1694 = vsel %vm1656, %v1632, 0
      %v1697 = vsel %vm1656, %v1633, 0
      %v1700 = vsel %vm1656, %v1634, 0
      %v1703 = vsel %vm1656, %v1635, 0
      %vm1705 = vcmask 1041408
      %v1707 = vsel %vm1705, %v1653, 0
      %1709 = vmatprep.subr.bf16.mxu0 0
      %1710 = vmatpush1.bf16.msra.mxu0 %v1651
      %1711 = vmatprep.subr.bf16.mxu0 0
      %1712 = vmatpush1.bf16.msra.mxu0 %v1652
      %1713 = vmatprep.subr.bf16.mxu0 0
      %1714 = vmatpush1.bf16.msra.mxu0 %v1707
      %1715 = vmatprep.subr.bf16.mxu0 0
      %1716 = vmatpush1.bf16.msra.mxu0 0
      %1717 = vmatprep.subr.bf16.mxu0 0
      %1718 = vmatpush1.bf16.msra.mxu0 0
      %1719 = vmatprep.subr.bf16.mxu0 0
      %1720 = vmatpush1.bf16.msra.mxu0 0
      %1721 = vmatprep.subr.bf16.mxu0 0
      %1722 = vmatpush1.bf16.msra.mxu0 0
      %1723 = vmatprep.subr.bf16.mxu0 0
      %1724 = vmatpush1.bf16.msra.mxu0 0
      %1725 = vmatprep.subr.bf16.mxu0 0
      %1726 = vmatpush1.bf16.msra.mxu0 0
      %1727 = vmatprep.subr.bf16.mxu0 0
      %1728 = vmatpush1.bf16.msra.mxu0 0
      %1729 = vmatprep.subr.bf16.mxu0 0
      %1730 = vmatpush1.bf16.msra.mxu0 0
      %1731 = vmatprep.subr.bf16.mxu0 0
      %1732 = vmatpush1.bf16.msra.mxu0 0
      %1733 = vmatprep.subr.bf16.mxu0 0
      %1734 = vmatpush1.bf16.msra.mxu0 0
      %1735 = vmatprep.subr.bf16.mxu0 0
      %1736 = vmatpush1.bf16.msra.mxu0 0
      %1737 = vmatprep.subr.bf16.mxu0 0
      %1738 = vmatpush1.bf16.msra.mxu0 0
      %1739 = vmatprep.subr.bf16.mxu0 0
      %1740 = vmatpush1.bf16.msra.mxu0 0
      %1741 = vmatprep.mubr.bf16.mxu0 0
      %1742 = vmatmul.mubr.bf16.gmra.mrb[0].mxu0 %v1658
      %v1743 = vpop.f32.mrb[0].mxu0
      %v1744 = vadd.f32 0.0, %v1743
      %v1745 = vpop.f32.mrb[0].mxu0
      %v1746 = vpop.f32.mrb[0].mxu0
      %v1747 = vadd.f32 0.0, %v1746
      %v1748 = vpop.f32.mrb[0].mxu0
      %1749 = vmatprep.mubr.bf16.mxu0 0
      %1750 = vmatmul.mubr.bf16.gmra.mrb[0].mxu0 %v1661
      %v1751 = vpop.f32.mrb[0].mxu0
      %v1752 = vadd.f32 0.0, %v1751
      %v1753 = vpop.f32.mrb[0].mxu0
      %v1754 = vpop.f32.mrb[0].mxu0
      %v1755 = vadd.f32 0.0, %v1754
      %v1756 = vpop.f32.mrb[0].mxu0
      %1757 = vmatprep.mubr.bf16.mxu0 0
      %1758 = vmatmul.mubr.bf16.gmra.mrb[0].mxu0 %v1664
      %v1759 = vpop.f32.mrb[0].mxu0
      %v1760 = vadd.f32 0.0, %v1759
      %v1761 = vpop.f32.mrb[0].mxu0
      %v1762 = vpop.f32.mrb[0].mxu0
      %v1763 = vadd.f32 0.0, %v1762
      %v1764 = vpop.f32.mrb[0].mxu0
      %1765 = vmatprep.mubr.bf16.mxu0 0
      %1766 = vmatmul.mubr.bf16.gmra.mrb[0].mxu0 %v1667
      %v1767 = vpop.f32.mrb[0].mxu0
      %v1768 = vadd.f32 0.0, %v1767
      %v1769 = vpop.f32.mrb[0].mxu0
      %v1770 = vpop.f32.mrb[0].mxu0
      %v1771 = vadd.f32 0.0, %v1770
      %v1772 = vpop.f32.mrb[0].mxu0
      %1773 = vmatprep.mubr.bf16.mxu0 0
      %1774 = vmatmul.mubr.bf16.gmra.mrb[0].mxu0 %v1670
      %v1775 = vpop.f32.mrb[0].mxu0
      %v1776 = vadd.f32 0.0, %v1775
      %v1777 = vpop.f32.mrb[0].mxu0
      %v1778 = vpop.f32.mrb[0].mxu0
      %v1779 = vadd.f32 0.0, %v1778
      %v1780 = vpop.f32.mrb[0].mxu0
      %1781 = vmatprep.mubr.bf16.mxu0 0
      %1782 = vmatmul.mubr.bf16.gmra.mrb[0].mxu0 %v1673
      %v1783 = vpop.f32.mrb[0].mxu0
      %v1784 = vadd.f32 0.0, %v1783
      %v1785 = vpop.f32.mrb[0].mxu0
      %v1786 = vpop.f32.mrb[0].mxu0
      %v1787 = vadd.f32 0.0, %v1786
      %v1788 = vpop.f32.mrb[0].mxu0
      %1789 = vmatprep.mubr.bf16.mxu0 0
      %1790 = vmatmul.mubr.bf16.gmra.mrb[0].mxu0 %v1676
      %v1791 = vpop.f32.mrb[0].mxu0
      %v1792 = vadd.f32 0.0, %v1791
      %v1793 = vpop.f32.mrb[0].mxu0
      %v1794 = vpop.f32.mrb[0].mxu0
      %v1795 = vadd.f32 0.0, %v1794
      %v1796 = vpop.f32.mrb[0].mxu0
      %1797 = vmatprep.mubr.bf16.mxu0 0
      %1798 = vmatmul.mubr.bf16.gmra.mrb[0].mxu0 %v1679
      %v1799 = vpop.f32.mrb[0].mxu0
      %v1800 = vadd.f32 0.0, %v1799
      %v1801 = vpop.f32.mrb[0].mxu0
      %v1802 = vpop.f32.mrb[0].mxu0
      %v1803 = vadd.f32 0.0, %v1802
      %v1804 = vpop.f32.mrb[0].mxu0
      %1805 = vmatprep.mubr.bf16.mxu0 0
      %1806 = vmatmul.mubr.bf16.gmra.mrb[0].mxu0 %v1682
      %v1807 = vpop.f32.mrb[0].mxu0
      %v1808 = vadd.f32 0.0, %v1807
      %v1809 = vpop.f32.mrb[0].mxu0
      %v1810 = vpop.f32.mrb[0].mxu0
      %v1811 = vadd.f32 0.0, %v1810
      %v1812 = vpop.f32.mrb[0].mxu0
      %1813 = vmatprep.mubr.bf16.mxu0 0
      %1814 = vmatmul.mubr.bf16.gmra.mrb[0].mxu0 %v1685
      %v1815 = vpop.f32.mrb[0].mxu0
      %v1816 = vadd.f32 0.0, %v1815
      %v1817 = vpop.f32.mrb[0].mxu0
      %v1818 = vpop.f32.mrb[0].mxu0
      %v1819 = vadd.f32 0.0, %v1818
      %v1820 = vpop.f32.mrb[0].mxu0
      %1821 = vmatprep.mubr.bf16.mxu0 0
      %1822 = vmatmul.mubr.bf16.gmra.mrb[0].mxu0 %v1688
      %v1823 = vpop.f32.mrb[0].mxu0
      %v1824 = vadd.f32 0.0, %v1823
      %v1825 = vpop.f32.mrb[0].mxu0
      %v1826 = vpop.f32.mrb[0].mxu0
      %v1827 = vadd.f32 0.0, %v1826
      %v1828 = vpop.f32.mrb[0].mxu0
      %1829 = vmatprep.mubr.bf16.mxu0 0
      %1830 = vmatmul.mubr.bf16.gmra.mrb[0].mxu0 %v1691
      %v1831 = vpop.f32.mrb[0].mxu0
      %v1832 = vadd.f32 0.0, %v1831
      %v1833 = vpop.f32.mrb[0].mxu0
      %v1834 = vpop.f32.mrb[0].mxu0
      %v1835 = vadd.f32 0.0, %v1834
      %v1836 = vpop.f32.mrb[0].mxu0
      %1837 = vmatprep.mubr.bf16.mxu0 0
      %1838 = vmatmul.mubr.bf16.gmra.mrb[0].mxu0 %v1694
      %v1839 = vpop.f32.mrb[0].mxu0
      %v1840 = vadd.f32 0.0, %v1839
      %v1841 = vpop.f32.mrb[0].mxu0
      %v1842 = vpop.f32.mrb[0].mxu0
      %v1843 = vadd.f32 0.0, %v1842
      %v1844 = vpop.f32.mrb[0].mxu0
      %1845 = vmatprep.mubr.bf16.mxu0 0
      %1846 = vmatmul.mubr.bf16.gmra.mrb[0].mxu0 %v1697
      %v1847 = vpop.f32.mrb[0].mxu0
      %v1848 = vadd.f32 0.0, %v1847
      %v1849 = vpop.f32.mrb[0].mxu0
      %v1850 = vpop.f32.mrb[0].mxu0
      %v1851 = vadd.f32 0.0, %v1850
      %v1852 = vpop.f32.mrb[0].mxu0
      %1853 = vmatprep.mubr.bf16.mxu0 0
      %1854 = vmatmul.mubr.bf16.gmra.mrb[0].mxu0 %v1700
      %v1855 = vpop.f32.mrb[0].mxu0
      %v1856 = vadd.f32 0.0, %v1855
      %v1857 = vpop.f32.mrb[0].mxu0
      %v1858 = vpop.f32.mrb[0].mxu0
      %v1859 = vadd.f32 0.0, %v1858
      %v1860 = vpop.f32.mrb[0].mxu0
      %1861 = vmatprep.mubr.bf16.mxu0 0
      %1862 = vmatmul.mubr.bf16.gmra.mrb[0].mxu0 %v1703
      %v1863 = vpop.f32.mrb[0].mxu0
      %v1864 = vadd.f32 0.0, %v1863
      %v1865 = vpop.f32.mrb[0].mxu0
      %v1866 = vpop.f32.mrb[0].mxu0
      %v1867 = vadd.f32 0.0, %v1866
      %v1868 = vpop.f32.mrb[0].mxu0
      %1869 = vdwg.mxu0
      %v1870 = vsel %vm1360, %v1744, 0.0
      %v1871 = vsel %vm1360, %v1747, 0.0
      %v1872 = vadd.f32 %v1870, %v1871
      %v1873 = vsel %vm1360, %v1752, 0.0
      %v1874 = vadd.f32 %v1872, %v1873
      %v1875 = vsel %vm1360, %v1755, 0.0
      %v1876 = vadd.f32 %v1874, %v1875
      %v1877 = vsel %vm1360, %v1760, 0.0
      %v1878 = vadd.f32 %v1876, %v1877
      %v1879 = vsel %vm1360, %v1763, 0.0
      %v1880 = vadd.f32 %v1878, %v1879
      %v1881 = vsel %vm1360, %v1768, 0.0
      %v1882 = vadd.f32 %v1880, %v1881
      %v1883 = vsel %vm1360, %v1771, 0.0
      %v1884 = vadd.f32 %v1882, %v1883
      %v1885 = vsel %vm1360, %v1776, 0.0
      %v1886 = vadd.f32 %v1884, %v1885
      %v1887 = vsel %vm1360, %v1779, 0.0
      %v1888 = vadd.f32 %v1886, %v1887
      %v1889 = vsel %vm1360, %v1784, 0.0
      %v1890 = vadd.f32 %v1888, %v1889
      %v1891 = vsel %vm1360, %v1787, 0.0
      %v1892 = vadd.f32 %v1890, %v1891
      %v1893 = vsel %vm1360, %v1792, 0.0
      %v1894 = vadd.f32 %v1892, %v1893
      %v1895 = vsel %vm1360, %v1795, 0.0
      %v1896 = vadd.f32 %v1894, %v1895
      %v1897 = vsel %vm1360, %v1800, 0.0
      %v1898 = vadd.f32 %v1896, %v1897
      %v1899 = vsel %vm1360, %v1803, 0.0
      %v1900 = vadd.f32 %v1898, %v1899
      %v1901 = vsel %vm1360, %v1808, 0.0
      %v1902 = vadd.f32 %v1900, %v1901
      %v1903 = vsel %vm1360, %v1811, 0.0
      %v1904 = vadd.f32 %v1902, %v1903
      %v1905 = vsel %vm1360, %v1816, 0.0
      %v1906 = vadd.f32 %v1904, %v1905
      %v1907 = vsel %vm1360, %v1819, 0.0
      %v1908 = vadd.f32 %v1906, %v1907
      %v1909 = vsel %vm1360, %v1824, 0.0
      %v1910 = vadd.f32 %v1908, %v1909
      %v1911 = vsel %vm1360, %v1827, 0.0
      %v1912 = vadd.f32 %v1910, %v1911
      %v1913 = vsel %vm1360, %v1832, 0.0
      %v1914 = vadd.f32 %v1912, %v1913
      %v1915 = vsel %vm1360, %v1835, 0.0
      %v1916 = vadd.f32 %v1914, %v1915
      %v1917 = vsel %vm1360, %v1840, 0.0
      %v1918 = vadd.f32 %v1916, %v1917
      %v1919 = vsel %vm1360, %v1843, 0.0
      %v1920 = vadd.f32 %v1918, %v1919
      %v1921 = vsel %vm1360, %v1848, 0.0
      %v1922 = vadd.f32 %v1920, %v1921
      %v1923 = vsel %vm1360, %v1851, 0.0
      %v1924 = vadd.f32 %v1922, %v1923
      %v1925 = vsel %vm1360, %v1856, 0.0
      %v1926 = vadd.f32 %v1924, %v1925
      %v1927 = vsel %vm1360, %v1859, 0.0
      %v1928 = vadd.f32 %v1926, %v1927
      %v1929 = vsel %vm1360, %v1864, 0.0
      %v1930 = vadd.f32 %v1928, %v1929
      %v1931 = vsel %vm1360, %v1867, 0.0
      %v1932 = vadd.f32 %v1930, %v1931
      %v1933 = vrot.slane %v1932, 4
      %v1934 = vadd.f32 %v1932, %v1933
      %v1935 = vrot.slane %v1934, 2
      %v1936 = vadd.f32 %v1934, %v1935
      %v1937 = vrot.slane %v1936, 1
      %v1938 = vadd.f32 %v1936, %v1937
      %v1939 = vrcp.pop 256.0
      %v1940 = vmul.f32 %v1938, %v1939
      %v1941 = vmul.f32 %v1744, %v1744
      %v1942 = vmul.f32 %v1747, %v1747
      %v1943 = vmul.f32 %v1752, %v1752
      %v1944 = vmul.f32 %v1755, %v1755
      %v1945 = vmul.f32 %v1760, %v1760
      %v1946 = vmul.f32 %v1763, %v1763
      %v1947 = vmul.f32 %v1768, %v1768
      %v1948 = vmul.f32 %v1771, %v1771
      %v1949 = vmul.f32 %v1776, %v1776
      %v1950 = vmul.f32 %v1779, %v1779
      %v1951 = vmul.f32 %v1784, %v1784
      %v1952 = vmul.f32 %v1787, %v1787
      %v1953 = vmul.f32 %v1792, %v1792
      %v1954 = vmul.f32 %v1795, %v1795
      %v1955 = vmul.f32 %v1800, %v1800
      %v1956 = vmul.f32 %v1803, %v1803
      %v1957 = vmul.f32 %v1808, %v1808
      %v1958 = vmul.f32 %v1811, %v1811
      %v1959 = vmul.f32 %v1816, %v1816
      %v1960 = vmul.f32 %v1819, %v1819
      %v1961 = vmul.f32 %v1824, %v1824
      %v1962 = vmul.f32 %v1827, %v1827
      %v1963 = vmul.f32 %v1832, %v1832
      %v1964 = vmul.f32 %v1835, %v1835
      %v1965 = vmul.f32 %v1840, %v1840
      %v1966 = vmul.f32 %v1843, %v1843
      %v1967 = vmul.f32 %v1848, %v1848
      %v1968 = vmul.f32 %v1851, %v1851
      %v1969 = vmul.f32 %v1856, %v1856
      %v1970 = vmul.f32 %v1859, %v1859
      %v1971 = vmul.f32 %v1864, %v1864
      %v1972 = vmul.f32 %v1867, %v1867
      %v1973 = vsel %vm1360, %v1941, 0.0
      %v1974 = vsel %vm1360, %v1942, 0.0
      %v1975 = vadd.f32 %v1973, %v1974
      %v1976 = vsel %vm1360, %v1943, 0.0
      %v1977 = vadd.f32 %v1975, %v1976
      %v1978 = vsel %vm1360, %v1944, 0.0
      %v1979 = vadd.f32 %v1977, %v1978
      %v1980 = vsel %vm1360, %v1945, 0.0
      %v1981 = vadd.f32 %v1979, %v1980
      %v1982 = vsel %vm1360, %v1946, 0.0
      %v1983 = vadd.f32 %v1981, %v1982
      %v1984 = vsel %vm1360, %v1947, 0.0
      %v1985 = vadd.f32 %v1983, %v1984
      %v1986 = vsel %vm1360, %v1948, 0.0
      %v1987 = vadd.f32 %v1985, %v1986
      %v1988 = vsel %vm1360, %v1949, 0.0
      %v1989 = vadd.f32 %v1987, %v1988
      %v1990 = vsel %vm1360, %v1950, 0.0
      %v1991 = vadd.f32 %v1989, %v1990
      %v1992 = vsel %vm1360, %v1951, 0.0
      %v1993 = vadd.f32 %v1991, %v1992
      %v1994 = vsel %vm1360, %v1952, 0.0
      %v1995 = vadd.f32 %v1993, %v1994
      %v1996 = vsel %vm1360, %v1953, 0.0
      %v1997 = vadd.f32 %v1995, %v1996
      %v1998 = vsel %vm1360, %v1954, 0.0
      %v1999 = vadd.f32 %v1997, %v1998
      %v2000 = vsel %vm1360, %v1955, 0.0
      %v2001 = vadd.f32 %v1999, %v2000
      %v2002 = vsel %vm1360, %v1956, 0.0
      %v2003 = vadd.f32 %v2001, %v2002
      %v2004 = vsel %vm1360, %v1957, 0.0
      %v2005 = vadd.f32 %v2003, %v2004
      %v2006 = vsel %vm1360, %v1958, 0.0
      %v2007 = vadd.f32 %v2005, %v2006
      %v2008 = vsel %vm1360, %v1959, 0.0
      %v2009 = vadd.f32 %v2007, %v2008
      %v2010 = vsel %vm1360, %v1960, 0.0
      %v2011 = vadd.f32 %v2009, %v2010
      %v2012 = vsel %vm1360, %v1961, 0.0
      %v2013 = vadd.f32 %v2011, %v2012
      %v2014 = vsel %vm1360, %v1962, 0.0
      %v2015 = vadd.f32 %v2013, %v2014
      %v2016 = vsel %vm1360, %v1963, 0.0
      %v2017 = vadd.f32 %v2015, %v2016
      %v2018 = vsel %vm1360, %v1964, 0.0
      %v2019 = vadd.f32 %v2017, %v2018
      %v2020 = vsel %vm1360, %v1965, 0.0
      %v2021 = vadd.f32 %v2019, %v2020
      %v2022 = vsel %vm1360, %v1966, 0.0
      %v2023 = vadd.f32 %v2021, %v2022
      %v2024 = vsel %vm1360, %v1967, 0.0
      %v2025 = vadd.f32 %v2023, %v2024
      %v2026 = vsel %vm1360, %v1968, 0.0
      %v2027 = vadd.f32 %v2025, %v2026
      %v2028 = vsel %vm1360, %v1969, 0.0
      %v2029 = vadd.f32 %v2027, %v2028
      %v2030 = vsel %vm1360, %v1970, 0.0
      %v2031 = vadd.f32 %v2029, %v2030
      %v2032 = vsel %vm1360, %v1971, 0.0
      %v2033 = vadd.f32 %v2031, %v2032
      %v2034 = vsel %vm1360, %v1972, 0.0
      %v2035 = vadd.f32 %v2033, %v2034
      %v2036 = vrot.slane %v2035, 4
      %v2037 = vadd.f32 %v2035, %v2036
      %v2038 = vrot.slane %v2037, 2
      %v2039 = vadd.f32 %v2037, %v2038
      %v2040 = vrot.slane %v2039, 1
      %v2041 = vadd.f32 %v2039, %v2040
      %v2042 = vmul.f32 %v2041, %v1939
      %v2043 = vmul.f32 %v1940, %v1940
      %v2044 = vsub.f32 %v2042, %v2043
      %v2045 = vsub.f32 %v1744, %v1940
      %v2046 = vsub.f32 %v1747, %v1940
      %v2047 = vsub.f32 %v1752, %v1940
      %v2048 = vsub.f32 %v1755, %v1940
      %v2049 = vsub.f32 %v1760, %v1940
      %v2050 = vsub.f32 %v1763, %v1940
      %v2051 = vsub.f32 %v1768, %v1940
      %v2052 = vsub.f32 %v1771, %v1940
      %v2053 = vsub.f32 %v1776, %v1940
      %v2054 = vsub.f32 %v1779, %v1940
      %v2055 = vsub.f32 %v1784, %v1940
      %v2056 = vsub.f32 %v1787, %v1940
      %v2057 = vsub.f32 %v1792, %v1940
      %v2058 = vsub.f32 %v1795, %v1940
      %v2059 = vsub.f32 %v1800, %v1940
      %v2060 = vsub.f32 %v1803, %v1940
      %v2061 = vsub.f32 %v1808, %v1940
      %v2062 = vsub.f32 %v1811, %v1940
      %v2063 = vsub.f32 %v1816, %v1940
      %v2064 = vsub.f32 %v1819, %v1940
      %v2065 = vsub.f32 %v1824, %v1940
      %v2066 = vsub.f32 %v1827, %v1940
      %v2067 = vsub.f32 %v1832, %v1940
      %v2068 = vsub.f32 %v1835, %v1940
      %v2069 = vsub.f32 %v1840, %v1940
      %v2070 = vsub.f32 %v1843, %v1940
      %v2071 = vsub.f32 %v1848, %v1940
      %v2072 = vsub.f32 %v1851, %v1940
      %v2073 = vsub.f32 %v1856, %v1940
      %v2074 = vsub.f32 %v1859, %v1940
      %v2075 = vsub.f32 %v1864, %v1940
      %v2076 = vsub.f32 %v1867, %v1940
      %v2077 = vadd.f32 %v2044, 1e-05
      %v2078 = vrsqrt.pop %v2077
      %v2079 = vmul.f32 %v2045, %v2078
      %v2080 = vmul.f32 %v2046, %v2078
      %v2081 = vmul.f32 %v2047, %v2078
      %v2082 = vmul.f32 %v2048, %v2078
      %v2083 = vmul.f32 %v2049, %v2078
      %v2084 = vmul.f32 %v2050, %v2078
      %v2085 = vmul.f32 %v2051, %v2078
      %v2086 = vmul.f32 %v2052, %v2078
      %v2087 = vmul.f32 %v2053, %v2078
      %v2088 = vmul.f32 %v2054, %v2078
      %v2089 = vmul.f32 %v2055, %v2078
      %v2090 = vmul.f32 %v2056, %v2078
      %v2091 = vmul.f32 %v2057, %v2078
      %v2092 = vmul.f32 %v2058, %v2078
      %v2093 = vmul.f32 %v2059, %v2078
      %v2094 = vmul.f32 %v2060, %v2078
      %v2095 = vmul.f32 %v2061, %v2078
      %v2096 = vmul.f32 %v2062, %v2078
      %v2097 = vmul.f32 %v2063, %v2078
      %v2098 = vmul.f32 %v2064, %v2078
      %v2099 = vmul.f32 %v2065, %v2078
      %v2100 = vmul.f32 %v2066, %v2078
      %v2101 = vmul.f32 %v2067, %v2078
      %v2102 = vmul.f32 %v2068, %v2078
      %v2103 = vmul.f32 %v2069, %v2078
      %v2104 = vmul.f32 %v2070, %v2078
      %v2105 = vmul.f32 %v2071, %v2078
      %v2106 = vmul.f32 %v2072, %v2078
      %v2107 = vmul.f32 %v2073, %v2078
      %v2108 = vmul.f32 %v2074, %v2078
      %v2109 = vmul.f32 %v2075, %v2078
      %v2110 = vmul.f32 %v2076, %v2078
      %v2111 = vmax.f32 %v2079, 0.0
      %v2112 = vmax.f32 %v2080, 0.0
      %v2113 = vmax.f32 %v2081, 0.0
      %v2114 = vmax.f32 %v2082, 0.0
      %v2115 = vmax.f32 %v2083, 0.0
      %v2116 = vmax.f32 %v2084, 0.0
      %v2117 = vmax.f32 %v2085, 0.0
      %v2118 = vmax.f32 %v2086, 0.0
      %v2119 = vmax.f32 %v2087, 0.0
      %v2120 = vmax.f32 %v2088, 0.0
      %v2121 = vmax.f32 %v2089, 0.0
      %v2122 = vmax.f32 %v2090, 0.0
      %v2123 = vmax.f32 %v2091, 0.0
      %v2124 = vmax.f32 %v2092, 0.0
      %v2125 = vmax.f32 %v2093, 0.0
      %v2126 = vmax.f32 %v2094, 0.0
      %v2127 = vmax.f32 %v2095, 0.0
      %v2128 = vmax.f32 %v2096, 0.0
      %v2129 = vmax.f32 %v2097, 0.0
      %v2130 = vmax.f32 %v2098, 0.0
      %v2131 = vmax.f32 %v2099, 0.0
      %v2132 = vmax.f32 %v2100, 0.0
      %v2133 = vmax.f32 %v2101, 0.0
      %v2134 = vmax.f32 %v2102, 0.0
      %v2135 = vmax.f32 %v2103, 0.0
      %v2136 = vmax.f32 %v2104, 0.0
      %v2137 = vmax.f32 %v2105, 0.0
      %v2138 = vmax.f32 %v2106, 0.0
      %v2139 = vmax.f32 %v2107, 0.0
      %v2140 = vmax.f32 %v2108, 0.0
      %v2141 = vmax.f32 %v2109, 0.0
      %v2142 = vmax.f32 %v2110, 0.0
      %v2159 = vrot.slane %v2113, 1
      %v2160 = vrot.slane %v2111, 1
      %v2161 = vrot.slane %v2115, 1
      %v2162 = vrot.slane %v2117, 1
      %v2163 = vrot.slane %v2119, 1
      %v2164 = vrot.slane %v2121, 1
      %v2165 = vrot.slane %v2123, 1
      %v2166 = vrot.slane %v2125, 1
      %v2167 = vrot.slane %v2127, 1
      %v2168 = vrot.slane %v2129, 1
      %v2169 = vrot.slane %v2131, 1
      %v2170 = vrot.slane %v2133, 1
      %v2171 = vrot.slane %v2135, 1
      %v2172 = vrot.slane %v2137, 1
      %v2173 = vrot.slane %v2139, 1
      %v2174 = vrot.slane %v2141, 1
      %v2207 = vrot.slane %v2113, 7
      %v2208 = vrot.slane %v2114, 7
      %v2209 = vsel %vm268, %v2207, %v2208
      %v2210 = vrot.slane %v2111, 7
      %v2211 = vrot.slane %v2112, 7
      %v2212 = vsel %vm268, %v2210, %v2211
      %v2213 = vrot.slane %v2115, 7
      %v2214 = vrot.slane %v2116, 7
      %v2215 = vsel %vm268, %v2213, %v2214
      %v2216 = vrot.slane %v2117, 7
      %v2217 = vrot.slane %v2118, 7
      %v2218 = vsel %vm268, %v2216, %v2217
      %v2219 = vrot.slane %v2119, 7
      %v2220 = vrot.slane %v2120, 7
      %v2221 = vsel %vm268, %v2219, %v2220
      %v2222 = vrot.slane %v2121, 7
      %v2223 = vrot.slane %v2122, 7
      %v2224 = vsel %vm268, %v2222, %v2223
      %v2225 = vrot.slane %v2123, 7
      %v2226 = vrot.slane %v2124, 7
      %v2227 = vsel %vm268, %v2225, %v2226
      %v2228 = vrot.slane %v2125, 7
      %v2229 = vrot.slane %v2126, 7
      %v2230 = vsel %vm268, %v2228, %v2229
      %v2231 = vrot.slane %v2127, 7
      %v2232 = vrot.slane %v2128, 7
      %v2233 = vsel %vm268, %v2231, %v2232
      %v2234 = vrot.slane %v2129, 7
      %v2235 = vrot.slane %v2130, 7
      %v2236 = vsel %vm268, %v2234, %v2235
      %v2237 = vrot.slane %v2131, 7
      %v2238 = vrot.slane %v2132, 7
      %v2239 = vsel %vm268, %v2237, %v2238
      %v2240 = vrot.slane %v2133, 7
      %v2241 = vrot.slane %v2134, 7
      %v2242 = vsel %vm268, %v2240, %v2241
      %v2243 = vrot.slane %v2135, 7
      %v2244 = vrot.slane %v2136, 7
      %v2245 = vsel %vm268, %v2243, %v2244
      %v2246 = vrot.slane %v2137, 7
      %v2247 = vrot.slane %v2138, 7
      %v2248 = vsel %vm268, %v2246, %v2247
      %v2249 = vrot.slane %v2139, 7
      %v2250 = vrot.slane %v2140, 7
      %v2251 = vsel %vm268, %v2249, %v2250
      %v2252 = vrot.slane %v2141, 7
      %v2253 = vrot.slane %v2142, 7
      %v2254 = vsel %vm268, %v2252, %v2253
      %v2302 = vrot.slane %v2114, 5
      %v2303 = vrot.slane %v2112, 5
      %v2304 = vrot.slane %v2116, 5
      %v2305 = vrot.slane %v2118, 5
      %v2306 = vrot.slane %v2120, 5
      %v2307 = vrot.slane %v2122, 5
      %v2308 = vrot.slane %v2124, 5
      %v2309 = vrot.slane %v2126, 5
      %v2310 = vrot.slane %v2128, 5
      %v2311 = vrot.slane %v2130, 5
      %v2312 = vrot.slane %v2132, 5
      %v2313 = vrot.slane %v2134, 5
      %v2314 = vrot.slane %v2136, 5
      %v2315 = vrot.slane %v2138, 5
      %v2316 = vrot.slane %v2140, 5
      %v2317 = vrot.slane %v2142, 5
      %v2334 = vsel %vm268, %v2159, %v2207
      %v2335 = vsel %vm268, %v2160, %v2210
      %v2336 = vsel %vm268, %v2161, %v2213
      %v2337 = vsel %vm268, %v2162, %v2216
      %v2338 = vsel %vm268, %v2163, %v2219
      %v2339 = vsel %vm268, %v2164, %v2222
      %v2340 = vsel %vm268, %v2165, %v2225
      %v2341 = vsel %vm268, %v2166, %v2228
      %v2342 = vsel %vm268, %v2167, %v2231
      %v2343 = vsel %vm268, %v2168, %v2234
      %v2344 = vsel %vm268, %v2169, %v2237
      %v2345 = vsel %vm268, %v2170, %v2240
      %v2346 = vsel %vm268, %v2171, %v2243
      %v2347 = vsel %vm268, %v2172, %v2246
      %v2348 = vsel %vm268, %v2173, %v2249
      %v2349 = vsel %vm268, %v2174, %v2252
      %v2350 = vsel %vm268, %v2208, %v2302
      %v2351 = vsel %vm268, %v2211, %v2303
      %v2352 = vsel %vm268, %v2214, %v2304
      %v2353 = vsel %vm268, %v2217, %v2305
      %v2354 = vsel %vm268, %v2220, %v2306
      %v2355 = vsel %vm268, %v2223, %v2307
      %v2356 = vsel %vm268, %v2226, %v2308
      %v2357 = vsel %vm268, %v2229, %v2309
      %v2358 = vsel %vm268, %v2232, %v2310
      %v2359 = vsel %vm268, %v2235, %v2311
      %v2360 = vsel %vm268, %v2238, %v2312
      %v2361 = vsel %vm268, %v2241, %v2313
      %v2362 = vsel %vm268, %v2244, %v2314
      %v2363 = vsel %vm268, %v2247, %v2315
      %v2364 = vsel %vm268, %v2250, %v2316
      %v2365 = vsel %vm268, %v2253, %v2317
      %v2396 = vrot.slane %v2334, 1
      %v2397 = vrot.slane %v2209, 1
      %v2398 = vsel %vm458, %v2396, %v2397
      %v2399 = vrot.slane %v2350, 1
      %v2400 = vsel %vm458, %v2397, %v2399
      %v2401 = vrot.slane %v2335, 1
      %v2402 = vrot.slane %v2212, 1
      %v2403 = vsel %vm458, %v2401, %v2402
      %v2404 = vrot.slane %v2351, 1
      %v2405 = vsel %vm458, %v2402, %v2404
      %v2406 = vrot.slane %v2336, 1
      %v2407 = vrot.slane %v2215, 1
      %v2408 = vsel %vm458, %v2406, %v2407
      %v2409 = vrot.slane %v2352, 1
      %v2410 = vsel %vm458, %v2407, %v2409
      %v2411 = vrot.slane %v2337, 1
      %v2412 = vrot.slane %v2218, 1
      %v2413 = vsel %vm458, %v2411, %v2412
      %v2414 = vrot.slane %v2353, 1
      %v2415 = vsel %vm458, %v2412, %v2414
      %v2416 = vrot.slane %v2338, 1
      %v2417 = vrot.slane %v2221, 1
      %v2418 = vsel %vm458, %v2416, %v2417
      %v2419 = vrot.slane %v2354, 1
      %v2420 = vsel %vm458, %v2417, %v2419
      %v2421 = vrot.slane %v2339, 1
      %v2422 = vrot.slane %v2224, 1
      %v2423 = vsel %vm458, %v2421, %v2422
      %v2424 = vrot.slane %v2355, 1
      %v2425 = vsel %vm458, %v2422, %v2424
      %v2426 = vrot.slane %v2340, 1
      %v2427 = vrot.slane %v2227, 1
      %v2428 = vsel %vm458, %v2426, %v2427
      %v2429 = vrot.slane %v2356, 1
      %v2430 = vsel %vm458, %v2427, %v2429
      %v2431 = vrot.slane %v2341, 1
      %v2432 = vrot.slane %v2230, 1
      %v2433 = vsel %vm458, %v2431, %v2432
      %v2434 = vrot.slane %v2357, 1
      %v2435 = vsel %vm458, %v2432, %v2434
      %v2436 = vrot.slane %v2342, 1
      %v2437 = vrot.slane %v2233, 1
      %v2438 = vsel %vm458, %v2436, %v2437
      %v2439 = vrot.slane %v2358, 1
      %v2440 = vsel %vm458, %v2437, %v2439
      %v2441 = vrot.slane %v2343, 1
      %v2442 = vrot.slane %v2236, 1
      %v2443 = vsel %vm458, %v2441, %v2442
      %v2444 = vrot.slane %v2359, 1
      %v2445 = vsel %vm458, %v2442, %v2444
      %v2446 = vrot.slane %v2344, 1
      %v2447 = vrot.slane %v2239, 1
      %v2448 = vsel %vm458, %v2446, %v2447
      %v2449 = vrot.slane %v2360, 1
      %v2450 = vsel %vm458, %v2447, %v2449
      %v2451 = vrot.slane %v2345, 1
      %v2452 = vrot.slane %v2242, 1
      %v2453 = vsel %vm458, %v2451, %v2452
      %v2454 = vrot.slane %v2361, 1
      %v2455 = vsel %vm458, %v2452, %v2454
      %v2456 = vrot.slane %v2346, 1
      %v2457 = vrot.slane %v2245, 1
      %v2458 = vsel %vm458, %v2456, %v2457
      %v2459 = vrot.slane %v2362, 1
      %v2460 = vsel %vm458, %v2457, %v2459
      %v2461 = vrot.slane %v2347, 1
      %v2462 = vrot.slane %v2248, 1
      %v2463 = vsel %vm458, %v2461, %v2462
      %v2464 = vrot.slane %v2363, 1
      %v2465 = vsel %vm458, %v2462, %v2464
      %v2466 = vrot.slane %v2348, 1
      %v2467 = vrot.slane %v2251, 1
      %v2468 = vsel %vm458, %v2466, %v2467
      %v2469 = vrot.slane %v2364, 1
      %v2470 = vsel %vm458, %v2467, %v2469
      %v2471 = vrot.slane %v2334, 2
      %v2472 = vrot.slane %v2209, 2
      %v2473 = vsel %vm534, %v2471, %v2472
      %v2474 = vrot.slane %v2350, 2
      %v2475 = vsel %vm534, %v2472, %v2474
      %v2476 = vrot.slane %v2335, 2
      %v2477 = vrot.slane %v2212, 2
      %v2478 = vsel %vm534, %v2476, %v2477
      %v2479 = vrot.slane %v2351, 2
      %v2480 = vsel %vm534, %v2477, %v2479
      %v2481 = vrot.slane %v2336, 2
      %v2482 = vrot.slane %v2215, 2
      %v2483 = vsel %vm534, %v2481, %v2482
      %v2484 = vrot.slane %v2352, 2
      %v2485 = vsel %vm534, %v2482, %v2484
      %v2486 = vrot.slane %v2337, 2
      %v2487 = vrot.slane %v2218, 2
      %v2488 = vsel %vm534, %v2486, %v2487
      %v2489 = vrot.slane %v2353, 2
      %v2490 = vsel %vm534, %v2487, %v2489
      %v2491 = vrot.slane %v2338, 2
      %v2492 = vrot.slane %v2221, 2
      %v2493 = vsel %vm534, %v2491, %v2492
      %v2494 = vrot.slane %v2354, 2
      %v2495 = vsel %vm534, %v2492, %v2494
      %v2496 = vrot.slane %v2339, 2
      %v2497 = vrot.slane %v2224, 2
      %v2498 = vsel %vm534, %v2496, %v2497
      %v2499 = vrot.slane %v2355, 2
      %v2500 = vsel %vm534, %v2497, %v2499
      %v2501 = vrot.slane %v2340, 2
      %v2502 = vrot.slane %v2227, 2
      %v2503 = vsel %vm534, %v2501, %v2502
      %v2504 = vrot.slane %v2356, 2
      %v2505 = vsel %vm534, %v2502, %v2504
      %v2506 = vrot.slane %v2341, 2
      %v2507 = vrot.slane %v2230, 2
      %v2508 = vsel %vm534, %v2506, %v2507
      %v2509 = vrot.slane %v2357, 2
      %v2510 = vsel %vm534, %v2507, %v2509
      %v2511 = vrot.slane %v2342, 2
      %v2512 = vrot.slane %v2233, 2
      %v2513 = vsel %vm534, %v2511, %v2512
      %v2514 = vrot.slane %v2358, 2
      %v2515 = vsel %vm534, %v2512, %v2514
      %v2516 = vrot.slane %v2343, 2
      %v2517 = vrot.slane %v2236, 2
      %v2518 = vsel %vm534, %v2516, %v2517
      %v2519 = vrot.slane %v2359, 2
      %v2520 = vsel %vm534, %v2517, %v2519
      %v2521 = vrot.slane %v2344, 2
      %v2522 = vrot.slane %v2239, 2
      %v2523 = vsel %vm534, %v2521, %v2522
      %v2524 = vrot.slane %v2360, 2
      %v2525 = vsel %vm534, %v2522, %v2524
      %v2526 = vrot.slane %v2345, 2
      %v2527 = vrot.slane %v2242, 2
      %v2528 = vsel %vm534, %v2526, %v2527
      %v2529 = vrot.slane %v2361, 2
      %v2530 = vsel %vm534, %v2527, %v2529
      %v2531 = vrot.slane %v2346, 2
      %v2532 = vrot.slane %v2245, 2
      %v2533 = vsel %vm534, %v2531, %v2532
      %v2534 = vrot.slane %v2362, 2
      %v2535 = vsel %vm534, %v2532, %v2534
      %v2536 = vrot.slane %v2347, 2
      %v2537 = vrot.slane %v2248, 2
      %v2538 = vsel %vm534, %v2536, %v2537
      %v2539 = vrot.slane %v2363, 2
      %v2540 = vsel %vm534, %v2537, %v2539
      %v2541 = vrot.slane %v2348, 2
      %v2542 = vrot.slane %v2251, 2
      %v2543 = vsel %vm534, %v2541, %v2542
      %v2544 = vrot.slane %v2364, 2
      %v2545 = vsel %vm534, %v2542, %v2544
      %v2548 = vrot.slane %v2349, 1
      %v2549 = vrot.slane %v2254, 1
      %v2550 = vsel %vm458, %v2548, %v2549
      %v2551 = vrot.slane %v2365, 1
      %v2552 = vsel %vm458, %v2549, %v2551
      %v2553 = vrot.slane %v2349, 2
      %v2554 = vrot.slane %v2254, 2
      %v2555 = vsel %vm534, %v2553, %v2554
      %v2556 = vrot.slane %v2365, 2
      %v2557 = vsel %vm534, %v2554, %v2556
      %2558 = vrot.lane.b32.xlu0 %v2398, 4
      %v2559 = vpop.permute.xlu0 %2558
      %2560 = vrot.lane.b32.xlu0 %v2400, 4
      %v2561 = vpop.permute.xlu0 %2560
      %2562 = vrot.lane.b32.xlu0 %v2403, 4
      %v2563 = vpop.permute.xlu0 %2562
      %2564 = vrot.lane.b32.xlu0 %v2405, 4
      %v2565 = vpop.permute.xlu0 %2564
      %2566 = vrot.lane.b32.xlu0 %v2408, 4
      %v2567 = vpop.permute.xlu0 %2566
      %2568 = vrot.lane.b32.xlu0 %v2410, 4
      %v2569 = vpop.permute.xlu0 %2568
      %2570 = vrot.lane.b32.xlu0 %v2413, 4
      %v2571 = vpop.permute.xlu0 %2570
      %2572 = vrot.lane.b32.xlu0 %v2415, 4
      %v2573 = vpop.permute.xlu0 %2572
      %2574 = vrot.lane.b32.xlu0 %v2418, 4
      %v2575 = vpop.permute.xlu0 %2574
      %2576 = vrot.lane.b32.xlu0 %v2420, 4
      %v2577 = vpop.permute.xlu0 %2576
      %2578 = vrot.lane.b32.xlu0 %v2423, 4
      %v2579 = vpop.permute.xlu0 %2578
      %2580 = vrot.lane.b32.xlu0 %v2425, 4
      %v2581 = vpop.permute.xlu0 %2580
      %2582 = vrot.lane.b32.xlu0 %v2428, 4
      %v2583 = vpop.permute.xlu0 %2582
      %2584 = vrot.lane.b32.xlu0 %v2430, 4
      %v2585 = vpop.permute.xlu0 %2584
      %2586 = vrot.lane.b32.xlu0 %v2433, 4
      %v2587 = vpop.permute.xlu0 %2586
      %2588 = vrot.lane.b32.xlu0 %v2435, 4
      %v2589 = vpop.permute.xlu0 %2588
      %2590 = vrot.lane.b32.xlu0 %v2438, 4
      %v2591 = vpop.permute.xlu0 %2590
      %2592 = vrot.lane.b32.xlu0 %v2440, 4
      %v2593 = vpop.permute.xlu0 %2592
      %2594 = vrot.lane.b32.xlu0 %v2443, 4
      %v2595 = vpop.permute.xlu0 %2594
      %2596 = vrot.lane.b32.xlu0 %v2445, 4
      %v2597 = vpop.permute.xlu0 %2596
      %2598 = vrot.lane.b32.xlu0 %v2448, 4
      %v2599 = vpop.permute.xlu0 %2598
      %2600 = vrot.lane.b32.xlu0 %v2450, 4
      %v2601 = vpop.permute.xlu0 %2600
      %2602 = vrot.lane.b32.xlu0 %v2453, 4
      %v2603 = vpop.permute.xlu0 %2602
      %2604 = vrot.lane.b32.xlu0 %v2455, 4
      %v2605 = vpop.permute.xlu0 %2604
      %2606 = vrot.lane.b32.xlu0 %v2458, 4
      %v2607 = vpop.permute.xlu0 %2606
      %2608 = vrot.lane.b32.xlu0 %v2460, 4
      %v2609 = vpop.permute.xlu0 %2608
      %2610 = vrot.lane.b32.xlu0 %v2463, 4
      %v2611 = vpop.permute.xlu0 %2610
      %2612 = vrot.lane.b32.xlu0 %v2465, 4
      %v2613 = vpop.permute.xlu0 %2612
      %2614 = vrot.lane.b32.xlu0 %v2468, 4
      %v2615 = vpop.permute.xlu0 %2614
      %2616 = vrot.lane.b32.xlu0 %v2470, 4
      %v2617 = vpop.permute.xlu0 %2616
      %2648 = vrot.lane.b32.xlu0 %v2473, 8
      %v2649 = vpop.permute.xlu0 %2648
      %2650 = vrot.lane.b32.xlu0 %v2475, 8
      %v2651 = vpop.permute.xlu0 %2650
      %2652 = vrot.lane.b32.xlu0 %v2478, 8
      %v2653 = vpop.permute.xlu0 %2652
      %2654 = vrot.lane.b32.xlu0 %v2480, 8
      %v2655 = vpop.permute.xlu0 %2654
      %2656 = vrot.lane.b32.xlu0 %v2483, 8
      %v2657 = vpop.permute.xlu0 %2656
      %2658 = vrot.lane.b32.xlu0 %v2485, 8
      %v2659 = vpop.permute.xlu0 %2658
      %2660 = vrot.lane.b32.xlu0 %v2488, 8
      %v2661 = vpop.permute.xlu0 %2660
      %2662 = vrot.lane.b32.xlu0 %v2490, 8
      %v2663 = vpop.permute.xlu0 %2662
      %2664 = vrot.lane.b32.xlu0 %v2493, 8
      %v2665 = vpop.permute.xlu0 %2664
      %2666 = vrot.lane.b32.xlu0 %v2495, 8
      %v2667 = vpop.permute.xlu0 %2666
      %2668 = vrot.lane.b32.xlu0 %v2498, 8
      %v2669 = vpop.permute.xlu0 %2668
      %2670 = vrot.lane.b32.xlu0 %v2500, 8
      %v2671 = vpop.permute.xlu0 %2670
      %2672 = vrot.lane.b32.xlu0 %v2503, 8
      %v2673 = vpop.permute.xlu0 %2672
      %2674 = vrot.lane.b32.xlu0 %v2505, 8
      %v2675 = vpop.permute.xlu0 %2674
      %2676 = vrot.lane.b32.xlu0 %v2508, 8
      %v2677 = vpop.permute.xlu0 %2676
      %2678 = vrot.lane.b32.xlu0 %v2510, 8
      %v2679 = vpop.permute.xlu0 %2678
      %2680 = vrot.lane.b32.xlu0 %v2513, 8
      %v2681 = vpop.permute.xlu0 %2680
      %2682 = vrot.lane.b32.xlu0 %v2515, 8
      %v2683 = vpop.permute.xlu0 %2682
      %2684 = vrot.lane.b32.xlu0 %v2518, 8
      %v2685 = vpop.permute.xlu0 %2684
      %2686 = vrot.lane.b32.xlu0 %v2520, 8
      %v2687 = vpop.permute.xlu0 %2686
      %2688 = vrot.lane.b32.xlu0 %v2523, 8
      %v2689 = vpop.permute.xlu0 %2688
      %2690 = vrot.lane.b32.xlu0 %v2525, 8
      %v2691 = vpop.permute.xlu0 %2690
      %2692 = vrot.lane.b32.xlu0 %v2528, 8
      %v2693 = vpop.permute.xlu0 %2692
      %2694 = vrot.lane.b32.xlu0 %v2530, 8
      %v2695 = vpop.permute.xlu0 %2694
      %2696 = vrot.lane.b32.xlu0 %v2533, 8
      %v2697 = vpop.permute.xlu0 %2696
      %2698 = vrot.lane.b32.xlu0 %v2535, 8
      %v2699 = vpop.permute.xlu0 %2698
      %2700 = vrot.lane.b32.xlu0 %v2538, 8
      %v2701 = vpop.permute.xlu0 %2700
      %2702 = vrot.lane.b32.xlu0 %v2540, 8
      %v2703 = vpop.permute.xlu0 %2702
      %2704 = vrot.lane.b32.xlu0 %v2543, 8
      %v2705 = vpop.permute.xlu0 %2704
      %2706 = vrot.lane.b32.xlu0 %v2545, 8
      %v2707 = vpop.permute.xlu0 %2706
      %2738 = vrot.lane.b32.xlu0 %v2335, 12
      %v2739 = vpop.permute.xlu0 %2738
      %2740 = vrot.lane.b32.xlu0 %v2212, 12
      %v2741 = vpop.permute.xlu0 %2740
      %2742 = vrot.lane.b32.xlu0 %v2334, 12
      %v2743 = vpop.permute.xlu0 %2742
      %2744 = vrot.lane.b32.xlu0 %v2209, 12
      %v2745 = vpop.permute.xlu0 %2744
      %2746 = vrot.lane.b32.xlu0 %v2336, 12
      %v2747 = vpop.permute.xlu0 %2746
      %2748 = vrot.lane.b32.xlu0 %v2215, 12
      %v2749 = vpop.permute.xlu0 %2748
      %2750 = vrot.lane.b32.xlu0 %v2337, 12
      %v2751 = vpop.permute.xlu0 %2750
      %2752 = vrot.lane.b32.xlu0 %v2218, 12
      %v2753 = vpop.permute.xlu0 %2752
      %2754 = vrot.lane.b32.xlu0 %v2338, 12
      %v2755 = vpop.permute.xlu0 %2754
      %2756 = vrot.lane.b32.xlu0 %v2221, 12
      %v2757 = vpop.permute.xlu0 %2756
      %2758 = vrot.lane.b32.xlu0 %v2339, 12
      %v2759 = vpop.permute.xlu0 %2758
      %2760 = vrot.lane.b32.xlu0 %v2224, 12
      %v2761 = vpop.permute.xlu0 %2760
      %2762 = vrot.lane.b32.xlu0 %v2340, 12
      %v2763 = vpop.permute.xlu0 %2762
      %2764 = vrot.lane.b32.xlu0 %v2227, 12
      %v2765 = vpop.permute.xlu0 %2764
      %2766 = vrot.lane.b32.xlu0 %v2341, 12
      %v2767 = vpop.permute.xlu0 %2766
      %2768 = vrot.lane.b32.xlu0 %v2230, 12
      %v2769 = vpop.permute.xlu0 %2768
      %2770 = vrot.lane.b32.xlu0 %v2342, 12
      %v2771 = vpop.permute.xlu0 %2770
      %2772 = vrot.lane.b32.xlu0 %v2233, 12
      %v2773 = vpop.permute.xlu0 %2772
      %2774 = vrot.lane.b32.xlu0 %v2343, 12
      %v2775 = vpop.permute.xlu0 %2774
      %2776 = vrot.lane.b32.xlu0 %v2236, 12
      %v2777 = vpop.permute.xlu0 %2776
      %2778 = vrot.lane.b32.xlu0 %v2344, 12
      %v2779 = vpop.permute.xlu0 %2778
      %2780 = vrot.lane.b32.xlu0 %v2239, 12
      %v2781 = vpop.permute.xlu0 %2780
      %2782 = vrot.lane.b32.xlu0 %v2345, 12
      %v2783 = vpop.permute.xlu0 %2782
      %2784 = vrot.lane.b32.xlu0 %v2242, 12
      %v2785 = vpop.permute.xlu0 %2784
      %2786 = vrot.lane.b32.xlu0 %v2346, 12
      %v2787 = vpop.permute.xlu0 %2786
      %2788 = vrot.lane.b32.xlu0 %v2245, 12
      %v2789 = vpop.permute.xlu0 %2788
      %2790 = vrot.lane.b32.xlu0 %v2347, 12
      %v2791 = vpop.permute.xlu0 %2790
      %2792 = vrot.lane.b32.xlu0 %v2248, 12
      %v2793 = vpop.permute.xlu0 %2792
      %2794 = vrot.lane.b32.xlu0 %v2348, 12
      %v2795 = vpop.permute.xlu0 %2794
      %2796 = vrot.lane.b32.xlu0 %v2251, 12
      %v2797 = vpop.permute.xlu0 %2796
      %2798 = vrot.lane.b32.xlu0 %v2349, 12
      %v2799 = vpop.permute.xlu0 %2798
      %2800 = vrot.lane.b32.xlu0 %v2254, 12
      %v2801 = vpop.permute.xlu0 %2800
      %2834 = vrot.lane.b32.xlu0 %v2403, 16
      %v2835 = vpop.permute.xlu0 %2834
      %2836 = vrot.lane.b32.xlu0 %v2405, 16
      %v2837 = vpop.permute.xlu0 %2836
      %2838 = vrot.lane.b32.xlu0 %v2398, 16
      %v2839 = vpop.permute.xlu0 %2838
      %2840 = vrot.lane.b32.xlu0 %v2400, 16
      %v2841 = vpop.permute.xlu0 %2840
      %2842 = vrot.lane.b32.xlu0 %v2408, 16
      %v2843 = vpop.permute.xlu0 %2842
      %2844 = vrot.lane.b32.xlu0 %v2410, 16
      %v2845 = vpop.permute.xlu0 %2844
      %2846 = vrot.lane.b32.xlu0 %v2413, 16
      %v2847 = vpop.permute.xlu0 %2846
      %2848 = vrot.lane.b32.xlu0 %v2415, 16
      %v2849 = vpop.permute.xlu0 %2848
      %2850 = vrot.lane.b32.xlu0 %v2418, 16
      %v2851 = vpop.permute.xlu0 %2850
      %2852 = vrot.lane.b32.xlu0 %v2420, 16
      %v2853 = vpop.permute.xlu0 %2852
      %2854 = vrot.lane.b32.xlu0 %v2423, 16
      %v2855 = vpop.permute.xlu0 %2854
      %2856 = vrot.lane.b32.xlu0 %v2425, 16
      %v2857 = vpop.permute.xlu0 %2856
      %2858 = vrot.lane.b32.xlu0 %v2428, 16
      %v2859 = vpop.permute.xlu0 %2858
      %2860 = vrot.lane.b32.xlu0 %v2430, 16
      %v2861 = vpop.permute.xlu0 %2860
      %2862 = vrot.lane.b32.xlu0 %v2433, 16
      %v2863 = vpop.permute.xlu0 %2862
      %2864 = vrot.lane.b32.xlu0 %v2435, 16
      %v2865 = vpop.permute.xlu0 %2864
      %2866 = vrot.lane.b32.xlu0 %v2438, 16
      %v2867 = vpop.permute.xlu0 %2866
      %2868 = vrot.lane.b32.xlu0 %v2440, 16
      %v2869 = vpop.permute.xlu0 %2868
      %2870 = vrot.lane.b32.xlu0 %v2443, 16
      %v2871 = vpop.permute.xlu0 %2870
      %2872 = vrot.lane.b32.xlu0 %v2445, 16
      %v2873 = vpop.permute.xlu0 %2872
      %2874 = vrot.lane.b32.xlu0 %v2448, 16
      %v2875 = vpop.permute.xlu0 %2874
      %2876 = vrot.lane.b32.xlu0 %v2450, 16
      %v2877 = vpop.permute.xlu0 %2876
      %2878 = vrot.lane.b32.xlu0 %v2453, 16
      %v2879 = vpop.permute.xlu0 %2878
      %2880 = vrot.lane.b32.xlu0 %v2455, 16
      %v2881 = vpop.permute.xlu0 %2880
      %2882 = vrot.lane.b32.xlu0 %v2458, 16
      %v2883 = vpop.permute.xlu0 %2882
      %2884 = vrot.lane.b32.xlu0 %v2460, 16
      %v2885 = vpop.permute.xlu0 %2884
      %2886 = vrot.lane.b32.xlu0 %v2463, 16
      %v2887 = vpop.permute.xlu0 %2886
      %2888 = vrot.lane.b32.xlu0 %v2465, 16
      %v2889 = vpop.permute.xlu0 %2888
      %2890 = vrot.lane.b32.xlu0 %v2468, 16
      %v2891 = vpop.permute.xlu0 %2890
      %2892 = vrot.lane.b32.xlu0 %v2470, 16
      %v2893 = vpop.permute.xlu0 %2892
      %2894 = vrot.lane.b32.xlu0 %v2550, 16
      %v2895 = vpop.permute.xlu0 %2894
      %2896 = vrot.lane.b32.xlu0 %v2552, 16
      %v2897 = vpop.permute.xlu0 %2896
      %2930 = vrot.lane.b32.xlu0 %v2478, 20
      %v2931 = vpop.permute.xlu0 %2930
      %2932 = vrot.lane.b32.xlu0 %v2480, 20
      %v2933 = vpop.permute.xlu0 %2932
      %2934 = vrot.lane.b32.xlu0 %v2473, 20
      %v2935 = vpop.permute.xlu0 %2934
      %2936 = vrot.lane.b32.xlu0 %v2475, 20
      %v2937 = vpop.permute.xlu0 %2936
      %2938 = vrot.lane.b32.xlu0 %v2483, 20
      %v2939 = vpop.permute.xlu0 %2938
      %2940 = vrot.lane.b32.xlu0 %v2485, 20
      %v2941 = vpop.permute.xlu0 %2940
      %2942 = vrot.lane.b32.xlu0 %v2488, 20
      %v2943 = vpop.permute.xlu0 %2942
      %2944 = vrot.lane.b32.xlu0 %v2490, 20
      %v2945 = vpop.permute.xlu0 %2944
      %2946 = vrot.lane.b32.xlu0 %v2493, 20
      %v2947 = vpop.permute.xlu0 %2946
      %2948 = vrot.lane.b32.xlu0 %v2495, 20
      %v2949 = vpop.permute.xlu0 %2948
      %2950 = vrot.lane.b32.xlu0 %v2498, 20
      %v2951 = vpop.permute.xlu0 %2950
      %2952 = vrot.lane.b32.xlu0 %v2500, 20
      %v2953 = vpop.permute.xlu0 %2952
      %2954 = vrot.lane.b32.xlu0 %v2503, 20
      %v2955 = vpop.permute.xlu0 %2954
      %2956 = vrot.lane.b32.xlu0 %v2505, 20
      %v2957 = vpop.permute.xlu0 %2956
      %2958 = vrot.lane.b32.xlu0 %v2508, 20
      %v2959 = vpop.permute.xlu0 %2958
      %2960 = vrot.lane.b32.xlu0 %v2510, 20
      %v2961 = vpop.permute.xlu0 %2960
      %2962 = vrot.lane.b32.xlu0 %v2513, 20
      %v2963 = vpop.permute.xlu0 %2962
      %2964 = vrot.lane.b32.xlu0 %v2515, 20
      %v2965 = vpop.permute.xlu0 %2964
      %2966 = vrot.lane.b32.xlu0 %v2518, 20
      %v2967 = vpop.permute.xlu0 %2966
      %2968 = vrot.lane.b32.xlu0 %v2520, 20
      %v2969 = vpop.permute.xlu0 %2968
      %2970 = vrot.lane.b32.xlu0 %v2523, 20
      %v2971 = vpop.permute.xlu0 %2970
      %2972 = vrot.lane.b32.xlu0 %v2525, 20
      %v2973 = vpop.permute.xlu0 %2972
      %2974 = vrot.lane.b32.xlu0 %v2528, 20
      %v2975 = vpop.permute.xlu0 %2974
      %2976 = vrot.lane.b32.xlu0 %v2530, 20
      %v2977 = vpop.permute.xlu0 %2976
      %2978 = vrot.lane.b32.xlu0 %v2533, 20
      %v2979 = vpop.permute.xlu0 %2978
      %2980 = vrot.lane.b32.xlu0 %v2535, 20
      %v2981 = vpop.permute.xlu0 %2980
      %2982 = vrot.lane.b32.xlu0 %v2538, 20
      %v2983 = vpop.permute.xlu0 %2982
      %2984 = vrot.lane.b32.xlu0 %v2540, 20
      %v2985 = vpop.permute.xlu0 %2984
      %2986 = vrot.lane.b32.xlu0 %v2543, 20
      %v2987 = vpop.permute.xlu0 %2986
      %2988 = vrot.lane.b32.xlu0 %v2545, 20
      %v2989 = vpop.permute.xlu0 %2988
      %2990 = vrot.lane.b32.xlu0 %v2555, 20
      %v2991 = vpop.permute.xlu0 %2990
      %2992 = vrot.lane.b32.xlu0 %v2557, 20
      %v2993 = vpop.permute.xlu0 %2992
      %3026 = vrot.lane.b32.xlu0 %v2334, 24
      %v3027 = vpop.permute.xlu0 %3026
      %3028 = vrot.lane.b32.xlu0 %v2209, 24
      %v3029 = vpop.permute.xlu0 %3028
      %3030 = vrot.lane.b32.xlu0 %v2336, 24
      %v3031 = vpop.permute.xlu0 %3030
      %3032 = vrot.lane.b32.xlu0 %v2215, 24
      %v3033 = vpop.permute.xlu0 %3032
      %3034 = vrot.lane.b32.xlu0 %v2337, 24
      %v3035 = vpop.permute.xlu0 %3034
      %3036 = vrot.lane.b32.xlu0 %v2218, 24
      %v3037 = vpop.permute.xlu0 %3036
      %3038 = vrot.lane.b32.xlu0 %v2338, 24
      %v3039 = vpop.permute.xlu0 %3038
      %3040 = vrot.lane.b32.xlu0 %v2221, 24
      %v3041 = vpop.permute.xlu0 %3040
      %3042 = vrot.lane.b32.xlu0 %v2339, 24
      %v3043 = vpop.permute.xlu0 %3042
      %3044 = vrot.lane.b32.xlu0 %v2224, 24
      %v3045 = vpop.permute.xlu0 %3044
      %3046 = vrot.lane.b32.xlu0 %v2340, 24
      %v3047 = vpop.permute.xlu0 %3046
      %3048 = vrot.lane.b32.xlu0 %v2227, 24
      %v3049 = vpop.permute.xlu0 %3048
      %3050 = vrot.lane.b32.xlu0 %v2341, 24
      %v3051 = vpop.permute.xlu0 %3050
      %3052 = vrot.lane.b32.xlu0 %v2230, 24
      %v3053 = vpop.permute.xlu0 %3052
      %3054 = vrot.lane.b32.xlu0 %v2342, 24
      %v3055 = vpop.permute.xlu0 %3054
      %3056 = vrot.lane.b32.xlu0 %v2233, 24
      %v3057 = vpop.permute.xlu0 %3056
      %3058 = vrot.lane.b32.xlu0 %v2343, 24
      %v3059 = vpop.permute.xlu0 %3058
      %3060 = vrot.lane.b32.xlu0 %v2236, 24
      %v3061 = vpop.permute.xlu0 %3060
      %3062 = vrot.lane.b32.xlu0 %v2344, 24
      %v3063 = vpop.permute.xlu0 %3062
      %3064 = vrot.lane.b32.xlu0 %v2239, 24
      %v3065 = vpop.permute.xlu0 %3064
      %3066 = vrot.lane.b32.xlu0 %v2345, 24
      %v3067 = vpop.permute.xlu0 %3066
      %3068 = vrot.lane.b32.xlu0 %v2242, 24
      %v3069 = vpop.permute.xlu0 %3068
      %3070 = vrot.lane.b32.xlu0 %v2346, 24
      %v3071 = vpop.permute.xlu0 %3070
      %3072 = vrot.lane.b32.xlu0 %v2245, 24
      %v3073 = vpop.permute.xlu0 %3072
      %3074 = vrot.lane.b32.xlu0 %v2347, 24
      %v3075 = vpop.permute.xlu0 %3074
      %3076 = vrot.lane.b32.xlu0 %v2248, 24
      %v3077 = vpop.permute.xlu0 %3076
      %3078 = vrot.lane.b32.xlu0 %v2348, 24
      %v3079 = vpop.permute.xlu0 %3078
      %3080 = vrot.lane.b32.xlu0 %v2251, 24
      %v3081 = vpop.permute.xlu0 %3080
      %3082 = vrot.lane.b32.xlu0 %v2349, 24
      %v3083 = vpop.permute.xlu0 %3082
      %3084 = vrot.lane.b32.xlu0 %v2254, 24
      %v3085 = vpop.permute.xlu0 %3084
      %3116 = vrot.lane.b32.xlu0 %v2398, 28
      %v3117 = vpop.permute.xlu0 %3116
      %3118 = vrot.lane.b32.xlu0 %v2400, 28
      %v3119 = vpop.permute.xlu0 %3118
      %3120 = vrot.lane.b32.xlu0 %v2408, 28
      %v3121 = vpop.permute.xlu0 %3120
      %3122 = vrot.lane.b32.xlu0 %v2410, 28
      %v3123 = vpop.permute.xlu0 %3122
      %3124 = vrot.lane.b32.xlu0 %v2413, 28
      %v3125 = vpop.permute.xlu0 %3124
      %3126 = vrot.lane.b32.xlu0 %v2415, 28
      %v3127 = vpop.permute.xlu0 %3126
      %3128 = vrot.lane.b32.xlu0 %v2418, 28
      %v3129 = vpop.permute.xlu0 %3128
      %3130 = vrot.lane.b32.xlu0 %v2420, 28
      %v3131 = vpop.permute.xlu0 %3130
      %3132 = vrot.lane.b32.xlu0 %v2423, 28
      %v3133 = vpop.permute.xlu0 %3132
      %3134 = vrot.lane.b32.xlu0 %v2425, 28
      %v3135 = vpop.permute.xlu0 %3134
      %3136 = vrot.lane.b32.xlu0 %v2428, 28
      %v3137 = vpop.permute.xlu0 %3136
      %3138 = vrot.lane.b32.xlu0 %v2430, 28
      %v3139 = vpop.permute.xlu0 %3138
      %3140 = vrot.lane.b32.xlu0 %v2433, 28
      %v3141 = vpop.permute.xlu0 %3140
      %3142 = vrot.lane.b32.xlu0 %v2435, 28
      %v3143 = vpop.permute.xlu0 %3142
      %3144 = vrot.lane.b32.xlu0 %v2438, 28
      %v3145 = vpop.permute.xlu0 %3144
      %3146 = vrot.lane.b32.xlu0 %v2440, 28
      %v3147 = vpop.permute.xlu0 %3146
      %3148 = vrot.lane.b32.xlu0 %v2443, 28
      %v3149 = vpop.permute.xlu0 %3148
      %3150 = vrot.lane.b32.xlu0 %v2445, 28
      %v3151 = vpop.permute.xlu0 %3150
      %3152 = vrot.lane.b32.xlu0 %v2448, 28
      %v3153 = vpop.permute.xlu0 %3152
      %3154 = vrot.lane.b32.xlu0 %v2450, 28
      %v3155 = vpop.permute.xlu0 %3154
      %3156 = vrot.lane.b32.xlu0 %v2453, 28
      %v3157 = vpop.permute.xlu0 %3156
      %3158 = vrot.lane.b32.xlu0 %v2455, 28
      %v3159 = vpop.permute.xlu0 %3158
      %3160 = vrot.lane.b32.xlu0 %v2458, 28
      %v3161 = vpop.permute.xlu0 %3160
      %3162 = vrot.lane.b32.xlu0 %v2460, 28
      %v3163 = vpop.permute.xlu0 %3162
      %3164 = vrot.lane.b32.xlu0 %v2463, 28
      %v3165 = vpop.permute.xlu0 %3164
      %3166 = vrot.lane.b32.xlu0 %v2465, 28
      %v3167 = vpop.permute.xlu0 %3166
      %3168 = vrot.lane.b32.xlu0 %v2468, 28
      %v3169 = vpop.permute.xlu0 %3168
      %3170 = vrot.lane.b32.xlu0 %v2470, 28
      %v3171 = vpop.permute.xlu0 %3170
      %3172 = vrot.lane.b32.xlu0 %v2550, 28
      %v3173 = vpop.permute.xlu0 %3172
      %3174 = vrot.lane.b32.xlu0 %v2552, 28
      %v3175 = vpop.permute.xlu0 %3174
      %3206 = vrot.lane.b32.xlu0 %v2473, 32
      %v3207 = vpop.permute.xlu0 %3206
      %3208 = vrot.lane.b32.xlu0 %v2475, 32
      %v3209 = vpop.permute.xlu0 %3208
      %3210 = vrot.lane.b32.xlu0 %v2483, 32
      %v3211 = vpop.permute.xlu0 %3210
      %3212 = vrot.lane.b32.xlu0 %v2485, 32
      %v3213 = vpop.permute.xlu0 %3212
      %3214 = vrot.lane.b32.xlu0 %v2488, 32
      %v3215 = vpop.permute.xlu0 %3214
      %3216 = vrot.lane.b32.xlu0 %v2490, 32
      %v3217 = vpop.permute.xlu0 %3216
      %3218 = vrot.lane.b32.xlu0 %v2493, 32
      %v3219 = vpop.permute.xlu0 %3218
      %3220 = vrot.lane.b32.xlu0 %v2495, 32
      %v3221 = vpop.permute.xlu0 %3220
      %3222 = vrot.lane.b32.xlu0 %v2498, 32
      %v3223 = vpop.permute.xlu0 %3222
      %3224 = vrot.lane.b32.xlu0 %v2500, 32
      %v3225 = vpop.permute.xlu0 %3224
      %3226 = vrot.lane.b32.xlu0 %v2503, 32
      %v3227 = vpop.permute.xlu0 %3226
      %3228 = vrot.lane.b32.xlu0 %v2505, 32
      %v3229 = vpop.permute.xlu0 %3228
      %3230 = vrot.lane.b32.xlu0 %v2508, 32
      %v3231 = vpop.permute.xlu0 %3230
      %3232 = vrot.lane.b32.xlu0 %v2510, 32
      %v3233 = vpop.permute.xlu0 %3232
      %3234 = vrot.lane.b32.xlu0 %v2513, 32
      %v3235 = vpop.permute.xlu0 %3234
      %3236 = vrot.lane.b32.xlu0 %v2515, 32
      %v3237 = vpop.permute.xlu0 %3236
      %3238 = vrot.lane.b32.xlu0 %v2518, 32
      %v3239 = vpop.permute.xlu0 %3238
      %3240 = vrot.lane.b32.xlu0 %v2520, 32
      %v3241 = vpop.permute.xlu0 %3240
      %3242 = vrot.lane.b32.xlu0 %v2523, 32
      %v3243 = vpop.permute.xlu0 %3242
      %3244 = vrot.lane.b32.xlu0 %v2525, 32
      %v3245 = vpop.permute.xlu0 %3244
      %3246 = vrot.lane.b32.xlu0 %v2528, 32
      %v3247 = vpop.permute.xlu0 %3246
      %3248 = vrot.lane.b32.xlu0 %v2530, 32
      %v3249 = vpop.permute.xlu0 %3248
      %3250 = vrot.lane.b32.xlu0 %v2533, 32
      %v3251 = vpop.permute.xlu0 %3250
      %3252 = vrot.lane.b32.xlu0 %v2535, 32
      %v3253 = vpop.permute.xlu0 %3252
      %3254 = vrot.lane.b32.xlu0 %v2538, 32
      %v3255 = vpop.permute.xlu0 %3254
      %3256 = vrot.lane.b32.xlu0 %v2540, 32
      %v3257 = vpop.permute.xlu0 %3256
      %3258 = vrot.lane.b32.xlu0 %v2543, 32
      %v3259 = vpop.permute.xlu0 %3258
      %3260 = vrot.lane.b32.xlu0 %v2545, 32
      %v3261 = vpop.permute.xlu0 %3260
      %3262 = vrot.lane.b32.xlu0 %v2555, 32
      %v3263 = vpop.permute.xlu0 %3262
      %3264 = vrot.lane.b32.xlu0 %v2557, 32
      %v3265 = vpop.permute.xlu0 %3264
      %v3296 = vsel %vm1360, %v2334, %v2559
      %v3297 = vsel %vm1360, %v2209, %v2561
      %v3298 = vsel %vm1360, %v2335, %v2563
      %v3299 = vsel %vm1360, %v2212, %v2565
      %v3300 = vsel %vm1360, %v2336, %v2567
      %v3301 = vsel %vm1360, %v2215, %v2569
      %v3302 = vsel %vm1360, %v2337, %v2571
      %v3303 = vsel %vm1360, %v2218, %v2573
      %v3304 = vsel %vm1360, %v2338, %v2575
      %v3305 = vsel %vm1360, %v2221, %v2577
      %v3306 = vsel %vm1360, %v2339, %v2579
      %v3307 = vsel %vm1360, %v2224, %v2581
      %v3308 = vsel %vm1360, %v2340, %v2583
      %v3309 = vsel %vm1360, %v2227, %v2585
      %v3310 = vsel %vm1360, %v2341, %v2587
      %v3311 = vsel %vm1360, %v2230, %v2589
      %v3312 = vsel %vm1360, %v2342, %v2591
      %v3313 = vsel %vm1360, %v2233, %v2593
      %v3314 = vsel %vm1360, %v2343, %v2595
      %v3315 = vsel %vm1360, %v2236, %v2597
      %v3316 = vsel %vm1360, %v2344, %v2599
      %v3317 = vsel %vm1360, %v2239, %v2601
      %v3318 = vsel %vm1360, %v2345, %v2603
      %v3319 = vsel %vm1360, %v2242, %v2605
      %v3320 = vsel %vm1360, %v2346, %v2607
      %v3321 = vsel %vm1360, %v2245, %v2609
      %v3322 = vsel %vm1360, %v2347, %v2611
      %v3323 = vsel %vm1360, %v2248, %v2613
      %v3324 = vsel %vm1360, %v2348, %v2615
      %v3325 = vsel %vm1360, %v2251, %v2617
      %v3326 = vsel %vm1391, %v3296, %v2649
      %v3327 = vsel %vm1391, %v3297, %v2651
      %v3328 = vsel %vm1391, %v3298, %v2653
      %v3329 = vsel %vm1391, %v3299, %v2655
      %v3330 = vsel %vm1391, %v3300, %v2657
      %v3331 = vsel %vm1391, %v3301, %v2659
      %v3332 = vsel %vm1391, %v3302, %v2661
      %v3333 = vsel %vm1391, %v3303, %v2663
      %v3334 = vsel %vm1391, %v3304, %v2665
      %v3335 = vsel %vm1391, %v3305, %v2667
      %v3336 = vsel %vm1391, %v3306, %v2669
      %v3337 = vsel %vm1391, %v3307, %v2671
      %v3338 = vsel %vm1391, %v3308, %v2673
      %v3339 = vsel %vm1391, %v3309, %v2675
      %v3340 = vsel %vm1391, %v3310, %v2677
      %v3341 = vsel %vm1391, %v3311, %v2679
      %v3342 = vsel %vm1391, %v3312, %v2681
      %v3343 = vsel %vm1391, %v3313, %v2683
      %v3344 = vsel %vm1391, %v3314, %v2685
      %v3345 = vsel %vm1391, %v3315, %v2687
      %v3346 = vsel %vm1391, %v3316, %v2689
      %v3347 = vsel %vm1391, %v3317, %v2691
      %v3348 = vsel %vm1391, %v3318, %v2693
      %v3349 = vsel %vm1391, %v3319, %v2695
      %v3350 = vsel %vm1391, %v3320, %v2697
      %v3351 = vsel %vm1391, %v3321, %v2699
      %v3352 = vsel %vm1391, %v3322, %v2701
      %v3353 = vsel %vm1391, %v3323, %v2703
      %v3354 = vsel %vm1391, %v3324, %v2705
      %v3355 = vsel %vm1391, %v3325, %v2707
      %v3356 = vsel %vm1422, %v3326, %v2739
      %v3357 = vsel %vm1422, %v3327, %v2741
      %v3358 = vsel %vm1422, %v3328, %v2743
      %v3359 = vsel %vm1422, %v3329, %v2745
      %v3360 = vsel %vm1422, %v3326, %v2747
      %v3361 = vsel %vm1422, %v3327, %v2749
      %v3362 = vsel %vm1422, %v3330, %v2751
      %v3363 = vsel %vm1422, %v3331, %v2753
      %v3364 = vsel %vm1422, %v3332, %v2755
      %v3365 = vsel %vm1422, %v3333, %v2757
      %v3366 = vsel %vm1422, %v3334, %v2759
      %v3367 = vsel %vm1422, %v3335, %v2761
      %v3368 = vsel %vm1422, %v3336, %v2763
      %v3369 = vsel %vm1422, %v3337, %v2765
      %v3370 = vsel %vm1422, %v3338, %v2767
      %v3371 = vsel %vm1422, %v3339, %v2769
      %v3372 = vsel %vm1422, %v3340, %v2771
      %v3373 = vsel %vm1422, %v3341, %v2773
      %v3374 = vsel %vm1422, %v3342, %v2775
      %v3375 = vsel %vm1422, %v3343, %v2777
      %v3376 = vsel %vm1422, %v3344, %v2779
      %v3377 = vsel %vm1422, %v3345, %v2781
      %v3378 = vsel %vm1422, %v3346, %v2783
      %v3379 = vsel %vm1422, %v3347, %v2785
      %v3380 = vsel %vm1422, %v3348, %v2787
      %v3381 = vsel %vm1422, %v3349, %v2789
      %v3382 = vsel %vm1422, %v3350, %v2791
      %v3383 = vsel %vm1422, %v3351, %v2793
      %v3384 = vsel %vm1422, %v3352, %v2795
      %v3385 = vsel %vm1422, %v3353, %v2797
      %v3386 = vsel %vm1422, %v3354, %v2799
      %v3387 = vsel %vm1422, %v3355, %v2801
      %v3388 = vsel %vm1455, %v3356, %v2835
      %v3389 = vsel %vm1455, %v3357, %v2837
      %v3390 = vsel %vm1455, %v3358, %v2839
      %v3391 = vsel %vm1455, %v3359, %v2841
      %v3392 = vsel %vm1455, %v3360, %v2843
      %v3393 = vsel %vm1455, %v3361, %v2845
      %v3394 = vsel %vm1455, %v3362, %v2847
      %v3395 = vsel %vm1455, %v3363, %v2849
      %v3396 = vsel %vm1455, %v3364, %v2851
      %v3397 = vsel %vm1455, %v3365, %v2853
      %v3398 = vsel %vm1455, %v3366, %v2855
      %v3399 = vsel %vm1455, %v3367, %v2857
      %v3400 = vsel %vm1455, %v3368, %v2859
      %v3401 = vsel %vm1455, %v3369, %v2861
      %v3402 = vsel %vm1455, %v3370, %v2863
      %v3403 = vsel %vm1455, %v3371, %v2865
      %v3404 = vsel %vm1455, %v3372, %v2867
      %v3405 = vsel %vm1455, %v3373, %v2869
      %v3406 = vsel %vm1455, %v3374, %v2871
      %v3407 = vsel %vm1455, %v3375, %v2873
      %v3408 = vsel %vm1455, %v3376, %v2875
      %v3409 = vsel %vm1455, %v3377, %v2877
      %v3410 = vsel %vm1455, %v3378, %v2879
      %v3411 = vsel %vm1455, %v3379, %v2881
      %v3412 = vsel %vm1455, %v3380, %v2883
      %v3413 = vsel %vm1455, %v3381, %v2885
      %v3414 = vsel %vm1455, %v3382, %v2887
      %v3415 = vsel %vm1455, %v3383, %v2889
      %v3416 = vsel %vm1455, %v3384, %v2891
      %v3417 = vsel %vm1455, %v3385, %v2893
      %v3418 = vsel %vm1455, %v3386, %v2895
      %v3419 = vsel %vm1455, %v3387, %v2897
      %v3420 = vsel %vm1488, %v3388, %v2931
      %v3421 = vsel %vm1488, %v3389, %v2933
      %v3422 = vsel %vm1488, %v3390, %v2935
      %v3423 = vsel %vm1488, %v3391, %v2937
      %v3424 = vsel %vm1488, %v3392, %v2939
      %v3425 = vsel %vm1488, %v3393, %v2941
      %v3426 = vsel %vm1488, %v3394, %v2943
      %v3427 = vsel %vm1488, %v3395, %v2945
      %v3428 = vsel %vm1488, %v3396, %v2947
      %v3429 = vsel %vm1488, %v3397, %v2949
      %v3430 = vsel %vm1488, %v3398, %v2951
      %v3431 = vsel %vm1488, %v3399, %v2953
      %v3432 = vsel %vm1488, %v3400, %v2955
      %v3433 = vsel %vm1488, %v3401, %v2957
      %v3434 = vsel %vm1488, %v3402, %v2959
      %v3435 = vsel %vm1488, %v3403, %v2961
      %v3436 = vsel %vm1488, %v3404, %v2963
      %v3437 = vsel %vm1488, %v3405, %v2965
      %v3438 = vsel %vm1488, %v3406, %v2967
      %v3439 = vsel %vm1488, %v3407, %v2969
      %v3440 = vsel %vm1488, %v3408, %v2971
      %v3441 = vsel %vm1488, %v3409, %v2973
      %v3442 = vsel %vm1488, %v3410, %v2975
      %v3443 = vsel %vm1488, %v3411, %v2977
      %v3444 = vsel %vm1488, %v3412, %v2979
      %v3445 = vsel %vm1488, %v3413, %v2981
      %v3446 = vsel %vm1488, %v3414, %v2983
      %v3447 = vsel %vm1488, %v3415, %v2985
      %v3448 = vsel %vm1488, %v3416, %v2987
      %v3449 = vsel %vm1488, %v3417, %v2989
      %v3450 = vsel %vm1488, %v3418, %v2991
      %v3451 = vsel %vm1488, %v3419, %v2993
      %v3452 = vsel %vm1521, %v3420, %v3027
      %v3453 = vsel %vm1521, %v3421, %v3029
      %v3454 = vsel %vm1521, %v3422, %v3031
      %v3455 = vsel %vm1521, %v3423, %v3033
      %v3456 = vsel %vm1521, %v3424, %v3035
      %v3457 = vsel %vm1521, %v3425, %v3037
      %v3458 = vsel %vm1521, %v3426, %v3039
      %v3459 = vsel %vm1521, %v3427, %v3041
      %v3460 = vsel %vm1521, %v3428, %v3043
      %v3461 = vsel %vm1521, %v3429, %v3045
      %v3462 = vsel %vm1521, %v3430, %v3047
      %v3463 = vsel %vm1521, %v3431, %v3049
      %v3464 = vsel %vm1521, %v3432, %v3051
      %v3465 = vsel %vm1521, %v3433, %v3053
      %v3466 = vsel %vm1521, %v3434, %v3055
      %v3467 = vsel %vm1521, %v3435, %v3057
      %v3468 = vsel %vm1521, %v3436, %v3059
      %v3469 = vsel %vm1521, %v3437, %v3061
      %v3470 = vsel %vm1521, %v3438, %v3063
      %v3471 = vsel %vm1521, %v3439, %v3065
      %v3472 = vsel %vm1521, %v3440, %v3067
      %v3473 = vsel %vm1521, %v3441, %v3069
      %v3474 = vsel %vm1521, %v3442, %v3071
      %v3475 = vsel %vm1521, %v3443, %v3073
      %v3476 = vsel %vm1521, %v3444, %v3075
      %v3477 = vsel %vm1521, %v3445, %v3077
      %v3478 = vsel %vm1521, %v3446, %v3079
      %v3479 = vsel %vm1521, %v3447, %v3081
      %v3480 = vsel %vm1521, %v3448, %v3083
      %v3481 = vsel %vm1521, %v3449, %v3085
      %v3482 = vsel %vm1521, %v3450, %v3079
      %v3483 = vsel %vm1521, %v3451, %v3081
      %v3484 = vsel %vm1554, %v3452, %v3117
      %v3485 = vsel %vm1554, %v3453, %v3119
      %v3486 = vsel %vm1554, %v3454, %v3121
      %v3487 = vsel %vm1554, %v3455, %v3123
      %v3488 = vsel %vm1554, %v3456, %v3125
      %v3489 = vsel %vm1554, %v3457, %v3127
      %v3490 = vsel %vm1554, %v3458, %v3129
      %v3491 = vsel %vm1554, %v3459, %v3131
      %v3492 = vsel %vm1554, %v3460, %v3133
      %v3493 = vsel %vm1554, %v3461, %v3135
      %v3494 = vsel %vm1554, %v3462, %v3137
      %v3495 = vsel %vm1554, %v3463, %v3139
      %v3496 = vsel %vm1554, %v3464, %v3141
      %v3497 = vsel %vm1554, %v3465, %v3143
      %v3498 = vsel %vm1554, %v3466, %v3145
      %v3499 = vsel %vm1554, %v3467, %v3147
      %v3500 = vsel %vm1554, %v3468, %v3149
      %v3501 = vsel %vm1554, %v3469, %v3151
      %v3502 = vsel %vm1554, %v3470, %v3153
      %v3503 = vsel %vm1554, %v3471, %v3155
      %v3504 = vsel %vm1554, %v3472, %v3157
      %v3505 = vsel %vm1554, %v3473, %v3159
      %v3506 = vsel %vm1554, %v3474, %v3161
      %v3507 = vsel %vm1554, %v3475, %v3163
      %v3508 = vsel %vm1554, %v3476, %v3165
      %v3509 = vsel %vm1554, %v3477, %v3167
      %v3510 = vsel %vm1554, %v3478, %v3169
      %v3511 = vsel %vm1554, %v3479, %v3171
      %v3512 = vsel %vm1554, %v3480, %v3173
      %v3513 = vsel %vm1554, %v3481, %v3175
      %v3514 = vsel %vm1554, %v3482, %v3169
      %v3515 = vsel %vm1554, %v3483, %v3171
      %v3516 = vsel %vm1587, %v3484, %v3207
      %v3517 = vsel %vm1587, %v3485, %v3209
      %v3518 = vsel %vm1587, %v3486, %v3211
      %v3519 = vsel %vm1587, %v3487, %v3213
      %v3520 = vsel %vm1587, %v3488, %v3215
      %v3521 = vsel %vm1587, %v3489, %v3217
      %v3522 = vsel %vm1587, %v3490, %v3219
      %v3523 = vsel %vm1587, %v3491, %v3221
      %v3524 = vsel %vm1587, %v3492, %v3223
      %v3525 = vsel %vm1587, %v3493, %v3225
      %v3526 = vsel %vm1587, %v3494, %v3227
      %v3527 = vsel %vm1587, %v3495, %v3229
      %v3528 = vsel %vm1587, %v3496, %v3231
      %v3529 = vsel %vm1587, %v3497, %v3233
      %v3530 = vsel %vm1587, %v3498, %v3235
      %v3531 = vsel %vm1587, %v3499, %v3237
      %v3532 = vsel %vm1587, %v3500, %v3239
      %v3533 = vsel %vm1587, %v3501, %v3241
      %v3534 = vsel %vm1587, %v3502, %v3243
      %v3535 = vsel %vm1587, %v3503, %v3245
      %v3536 = vsel %vm1587, %v3504, %v3247
      %v3537 = vsel %vm1587, %v3505, %v3249
      %v3538 = vsel %vm1587, %v3506, %v3251
      %v3539 = vsel %vm1587, %v3507, %v3253
      %v3540 = vsel %vm1587, %v3508, %v3255
      %v3541 = vsel %vm1587, %v3509, %v3257
      %v3542 = vsel %vm1587, %v3510, %v3259
      %v3543 = vsel %vm1587, %v3511, %v3261
      %v3544 = vsel %vm1587, %v3512, %v3263
      %v3545 = vsel %vm1587, %v3513, %v3265
      %v3546 = vsel %vm1587, %v3514, %v3259
      %v3547 = vsel %vm1587, %v3515, %v3261
      %v3548 = vpack.c.bf16 %v3517, %v3516
      %v3549 = vpack.c.bf16 %v3519, %v3518
      %v3550 = vpack.c.bf16 %v3521, %v3520
      %v3551 = vpack.c.bf16 %v3523, %v3522
      %v3552 = vpack.c.bf16 %v3525, %v3524
      %v3553 = vpack.c.bf16 %v3527, %v3526
      %v3554 = vpack.c.bf16 %v3529, %v3528
      %v3555 = vpack.c.bf16 %v3531, %v3530
      %v3556 = vpack.c.bf16 %v3533, %v3532
      %v3557 = vpack.c.bf16 %v3535, %v3534
      %v3558 = vpack.c.bf16 %v3537, %v3536
      %v3559 = vpack.c.bf16 %v3539, %v3538
      %v3560 = vpack.c.bf16 %v3541, %v3540
      %v3561 = vpack.c.bf16 %v3543, %v3542
      %v3562 = vpack.c.bf16 %v3545, %v3544
      %v3563 = vpack.c.bf16 %v3547, %v3546
      %v3564 = vld [vmem:[%s2] sm:$0xf]
      %v3565 = vld [vmem:[%s2 + $0x4] sm:$0xf]
      %v3566 = vld [vmem:[%s2 + $0x8] sm:$0xf]
      %v3567 = vld [vmem:[%s2 + $0xc] sm:$0xf]
      %v3568 = vld [vmem:[%s2 + $0x10] sm:$0x3]
      %v3574 = vunpack.c.l.b16 %v3564
      %v3575 = vunpack.c.l.b16 %v3565
      %v3576 = vunpack.c.l.b16 %v3566
      %v3577 = vunpack.c.l.b16 %v3567
      %v3578 = vunpack.c.l.b16 %v3568
      %v3579 = vpack.c.b16 %v3575, %v3574
      %v3580 = vpack.c.b16 %v3577, %v3576
      %v3581 = vpack.c.b16 %v3578, %v3578
      %v3585 = vsel %vm1656, %v3548, 0
      %v3588 = vsel %vm1656, %v3549, 0
      %v3591 = vsel %vm1656, %v3550, 0
      %v3594 = vsel %vm1656, %v3551, 0
      %v3597 = vsel %vm1656, %v3552, 0
      %v3600 = vsel %vm1656, %v3553, 0
      %v3603 = vsel %vm1656, %v3554, 0
      %v3606 = vsel %vm1656, %v3555, 0
      %v3609 = vsel %vm1656, %v3556, 0
      %v3612 = vsel %vm1656, %v3557, 0
      %v3615 = vsel %vm1656, %v3558, 0
      %v3618 = vsel %vm1656, %v3559, 0
      %v3621 = vsel %vm1656, %v3560, 0
      %v3624 = vsel %vm1656, %v3561, 0
      %v3627 = vsel %vm1656, %v3562, 0
      %v3630 = vsel %vm1656, %v3563, 0
      %v3633 = vsel %vm1705, %v3581, 0
      %3635 = vmatprep.subr.bf16.mxu0 0
      %3636 = vmatpush1.bf16.msra.mxu0 %v3579
      %3637 = vmatprep.subr.bf16.mxu0 0
      %3638 = vmatpush1.bf16.msra.mxu0 %v3580
      %3639 = vmatprep.subr.bf16.mxu0 0
      %3640 = vmatpush1.bf16.msra.mxu0 %v3633
      %3641 = vmatprep.subr.bf16.mxu0 0
      %3642 = vmatpush1.bf16.msra.mxu0 0
      %3643 = vmatprep.subr.bf16.mxu0 0
      %3644 = vmatpush1.bf16.msra.mxu0 0
      %3645 = vmatprep.subr.bf16.mxu0 0
      %3646 = vmatpush1.bf16.msra.mxu0 0
      %3647 = vmatprep.subr.bf16.mxu0 0
      %3648 = vmatpush1.bf16.msra.mxu0 0
      %3649 = vmatprep.subr.bf16.mxu0 0
      %3650 = vmatpush1.bf16.msra.mxu0 0
      %3651 = vmatprep.subr.bf16.mxu0 0
      %3652 = vmatpush1.bf16.msra.mxu0 0
      %3653 = vmatprep.subr.bf16.mxu0 0
      %3654 = vmatpush1.bf16.msra.mxu0 0
      %3655 = vmatprep.subr.bf16.mxu0 0
      %3656 = vmatpush1.bf16.msra.mxu0 0
      %3657 = vmatprep.subr.bf16.mxu0 0
      %3658 = vmatpush1.bf16.msra.mxu0 0
      %3659 = vmatprep.subr.bf16.mxu0 0
      %3660 = vmatpush1.bf16.msra.mxu0 0
      %3661 = vmatprep.subr.bf16.mxu0 0
      %3662 = vmatpush1.bf16.msra.mxu0 0
      %3663 = vmatprep.subr.bf16.mxu0 0
      %3664 = vmatpush1.bf16.msra.mxu0 0
      %3665 = vmatprep.subr.bf16.mxu0 0
      %3666 = vmatpush1.bf16.msra.mxu0 0
      %3667 = vmatprep.mubr.bf16.mxu0 0
      %3668 = vmatmul.mubr.bf16.gmra.mrb[0].mxu0 %v3585
      %v3669 = vpop.f32.mrb[0].mxu0
      %v3670 = vadd.f32 0.0, %v3669
      %v3671 = vpop.f32.mrb[0].mxu0
      %v3672 = vpop.f32.mrb[0].mxu0
      %v3673 = vadd.f32 0.0, %v3672
      %v3674 = vpop.f32.mrb[0].mxu0
      %3675 = vmatprep.mubr.bf16.mxu0 0
      %3676 = vmatmul.mubr.bf16.gmra.mrb[0].mxu0 %v3588
      %v3677 = vpop.f32.mrb[0].mxu0
      %v3678 = vadd.f32 0.0, %v3677
      %v3679 = vpop.f32.mrb[0].mxu0
      %v3680 = vpop.f32.mrb[0].mxu0
      %v3681 = vadd.f32 0.0, %v3680
      %v3682 = vpop.f32.mrb[0].mxu0
      %3683 = vmatprep.mubr.bf16.mxu0 0
      %3684 = vmatmul.mubr.bf16.gmra.mrb[0].mxu0 %v3591
      %v3685 = vpop.f32.mrb[0].mxu0
      %v3686 = vadd.f32 0.0, %v3685
      %v3687 = vpop.f32.mrb[0].mxu0
      %v3688 = vpop.f32.mrb[0].mxu0
      %v3689 = vadd.f32 0.0, %v3688
      %v3690 = vpop.f32.mrb[0].mxu0
      %3691 = vmatprep.mubr.bf16.mxu0 0
      %3692 = vmatmul.mubr.bf16.gmra.mrb[0].mxu0 %v3594
      %v3693 = vpop.f32.mrb[0].mxu0
      %v3694 = vadd.f32 0.0, %v3693
      %v3695 = vpop.f32.mrb[0].mxu0
      %v3696 = vpop.f32.mrb[0].mxu0
      %v3697 = vadd.f32 0.0, %v3696
      %v3698 = vpop.f32.mrb[0].mxu0
      %3699 = vmatprep.mubr.bf16.mxu0 0
      %3700 = vmatmul.mubr.bf16.gmra.mrb[0].mxu0 %v3597
      %v3701 = vpop.f32.mrb[0].mxu0
      %v3702 = vadd.f32 0.0, %v3701
      %v3703 = vpop.f32.mrb[0].mxu0
      %v3704 = vpop.f32.mrb[0].mxu0
      %v3705 = vadd.f32 0.0, %v3704
      %v3706 = vpop.f32.mrb[0].mxu0
      %3707 = vmatprep.mubr.bf16.mxu0 0
      %3708 = vmatmul.mubr.bf16.gmra.mrb[0].mxu0 %v3600
      %v3709 = vpop.f32.mrb[0].mxu0
      %v3710 = vadd.f32 0.0, %v3709
      %v3711 = vpop.f32.mrb[0].mxu0
      %v3712 = vpop.f32.mrb[0].mxu0
      %v3713 = vadd.f32 0.0, %v3712
      %v3714 = vpop.f32.mrb[0].mxu0
      %3715 = vmatprep.mubr.bf16.mxu0 0
      %3716 = vmatmul.mubr.bf16.gmra.mrb[0].mxu0 %v3603
      %v3717 = vpop.f32.mrb[0].mxu0
      %v3718 = vadd.f32 0.0, %v3717
      %v3719 = vpop.f32.mrb[0].mxu0
      %v3720 = vpop.f32.mrb[0].mxu0
      %v3721 = vadd.f32 0.0, %v3720
      %v3722 = vpop.f32.mrb[0].mxu0
      %3723 = vmatprep.mubr.bf16.mxu0 0
      %3724 = vmatmul.mubr.bf16.gmra.mrb[0].mxu0 %v3606
      %v3725 = vpop.f32.mrb[0].mxu0
      %v3726 = vadd.f32 0.0, %v3725
      %v3727 = vpop.f32.mrb[0].mxu0
      %v3728 = vpop.f32.mrb[0].mxu0
      %v3729 = vadd.f32 0.0, %v3728
      %v3730 = vpop.f32.mrb[0].mxu0
      %3731 = vmatprep.mubr.bf16.mxu0 0
      %3732 = vmatmul.mubr.bf16.gmra.mrb[0].mxu0 %v3609
      %v3733 = vpop.f32.mrb[0].mxu0
      %v3734 = vadd.f32 0.0, %v3733
      %v3735 = vpop.f32.mrb[0].mxu0
      %v3736 = vpop.f32.mrb[0].mxu0
      %v3737 = vadd.f32 0.0, %v3736
      %v3738 = vpop.f32.mrb[0].mxu0
      %3739 = vmatprep.mubr.bf16.mxu0 0
      %3740 = vmatmul.mubr.bf16.gmra.mrb[0].mxu0 %v3612
      %v3741 = vpop.f32.mrb[0].mxu0
      %v3742 = vadd.f32 0.0, %v3741
      %v3743 = vpop.f32.mrb[0].mxu0
      %v3744 = vpop.f32.mrb[0].mxu0
      %v3745 = vadd.f32 0.0, %v3744
      %v3746 = vpop.f32.mrb[0].mxu0
      %3747 = vmatprep.mubr.bf16.mxu0 0
      %3748 = vmatmul.mubr.bf16.gmra.mrb[0].mxu0 %v3615
      %v3749 = vpop.f32.mrb[0].mxu0
      %v3750 = vadd.f32 0.0, %v3749
      %v3751 = vpop.f32.mrb[0].mxu0
      %v3752 = vpop.f32.mrb[0].mxu0
      %v3753 = vadd.f32 0.0, %v3752
      %v3754 = vpop.f32.mrb[0].mxu0
      %3755 = vmatprep.mubr.bf16.mxu0 0
      %3756 = vmatmul.mubr.bf16.gmra.mrb[0].mxu0 %v3618
      %v3757 = vpop.f32.mrb[0].mxu0
      %v3758 = vadd.f32 0.0, %v3757
      %v3759 = vpop.f32.mrb[0].mxu0
      %v3760 = vpop.f32.mrb[0].mxu0
      %v3761 = vadd.f32 0.0, %v3760
      %v3762 = vpop.f32.mrb[0].mxu0
      %3763 = vmatprep.mubr.bf16.mxu0 0
      %3764 = vmatmul.mubr.bf16.gmra.mrb[0].mxu0 %v3621
      %v3765 = vpop.f32.mrb[0].mxu0
      %v3766 = vadd.f32 0.0, %v3765
      %v3767 = vpop.f32.mrb[0].mxu0
      %v3768 = vpop.f32.mrb[0].mxu0
      %v3769 = vadd.f32 0.0, %v3768
      %v3770 = vpop.f32.mrb[0].mxu0
      %3771 = vmatprep.mubr.bf16.mxu0 0
      %3772 = vmatmul.mubr.bf16.gmra.mrb[0].mxu0 %v3624
      %v3773 = vpop.f32.mrb[0].mxu0
      %v3774 = vadd.f32 0.0, %v3773
      %v3775 = vpop.f32.mrb[0].mxu0
      %v3776 = vpop.f32.mrb[0].mxu0
      %v3777 = vadd.f32 0.0, %v3776
      %v3778 = vpop.f32.mrb[0].mxu0
      %3779 = vmatprep.mubr.bf16.mxu0 0
      %3780 = vmatmul.mubr.bf16.gmra.mrb[0].mxu0 %v3627
      %v3781 = vpop.f32.mrb[0].mxu0
      %v3782 = vadd.f32 0.0, %v3781
      %v3783 = vpop.f32.mrb[0].mxu0
      %v3784 = vpop.f32.mrb[0].mxu0
      %v3785 = vadd.f32 0.0, %v3784
      %v3786 = vpop.f32.mrb[0].mxu0
      %3787 = vmatprep.mubr.bf16.mxu0 0
      %3788 = vmatmul.mubr.bf16.gmra.mrb[0].mxu0 %v3630
      %v3789 = vpop.f32.mrb[0].mxu0
      %v3790 = vadd.f32 0.0, %v3789
      %v3791 = vpop.f32.mrb[0].mxu0
      %v3792 = vpop.f32.mrb[0].mxu0
      %v3793 = vadd.f32 0.0, %v3792
      %v3794 = vpop.f32.mrb[0].mxu0
      %3795 = vdwg.mxu0
      %v3796 = vsel %vm1360, %v3670, 0.0
      %v3797 = vsel %vm1360, %v3673, 0.0
      %v3798 = vadd.f32 %v3796, %v3797
      %v3799 = vsel %vm1360, %v3678, 0.0
      %v3800 = vadd.f32 %v3798, %v3799
      %v3801 = vsel %vm1360, %v3681, 0.0
      %v3802 = vadd.f32 %v3800, %v3801
      %v3803 = vsel %vm1360, %v3686, 0.0
      %v3804 = vadd.f32 %v3802, %v3803
      %v3805 = vsel %vm1360, %v3689, 0.0
      %v3806 = vadd.f32 %v3804, %v3805
      %v3807 = vsel %vm1360, %v3694, 0.0
      %v3808 = vadd.f32 %v3806, %v3807
      %v3809 = vsel %vm1360, %v3697, 0.0
      %v3810 = vadd.f32 %v3808, %v3809
      %v3811 = vsel %vm1360, %v3702, 0.0
      %v3812 = vadd.f32 %v3810, %v3811
      %v3813 = vsel %vm1360, %v3705, 0.0
      %v3814 = vadd.f32 %v3812, %v3813
      %v3815 = vsel %vm1360, %v3710, 0.0
      %v3816 = vadd.f32 %v3814, %v3815
      %v3817 = vsel %vm1360, %v3713, 0.0
      %v3818 = vadd.f32 %v3816, %v3817
      %v3819 = vsel %vm1360, %v3718, 0.0
      %v3820 = vadd.f32 %v3818, %v3819
      %v3821 = vsel %vm1360, %v3721, 0.0
      %v3822 = vadd.f32 %v3820, %v3821
      %v3823 = vsel %vm1360, %v3726, 0.0
      %v3824 = vadd.f32 %v3822, %v3823
      %v3825 = vsel %vm1360, %v3729, 0.0
      %v3826 = vadd.f32 %v3824, %v3825
      %v3827 = vsel %vm1360, %v3734, 0.0
      %v3828 = vadd.f32 %v3826, %v3827
      %v3829 = vsel %vm1360, %v3737, 0.0
      %v3830 = vadd.f32 %v3828, %v3829
      %v3831 = vsel %vm1360, %v3742, 0.0
      %v3832 = vadd.f32 %v3830, %v3831
      %v3833 = vsel %vm1360, %v3745, 0.0
      %v3834 = vadd.f32 %v3832, %v3833
      %v3835 = vsel %vm1360, %v3750, 0.0
      %v3836 = vadd.f32 %v3834, %v3835
      %v3837 = vsel %vm1360, %v3753, 0.0
      %v3838 = vadd.f32 %v3836, %v3837
      %v3839 = vsel %vm1360, %v3758, 0.0
      %v3840 = vadd.f32 %v3838, %v3839
      %v3841 = vsel %vm1360, %v3761, 0.0
      %v3842 = vadd.f32 %v3840, %v3841
      %v3843 = vsel %vm1360, %v3766, 0.0
      %v3844 = vadd.f32 %v3842, %v3843
      %v3845 = vsel %vm1360, %v3769, 0.0
      %v3846 = vadd.f32 %v3844, %v3845
      %v3847 = vsel %vm1360, %v3774, 0.0
      %v3848 = vadd.f32 %v3846, %v3847
      %v3849 = vsel %vm1360, %v3777, 0.0
      %v3850 = vadd.f32 %v3848, %v3849
      %v3851 = vsel %vm1360, %v3782, 0.0
      %v3852 = vadd.f32 %v3850, %v3851
      %v3853 = vsel %vm1360, %v3785, 0.0
      %v3854 = vadd.f32 %v3852, %v3853
      %v3855 = vsel %vm1360, %v3790, 0.0
      %v3856 = vadd.f32 %v3854, %v3855
      %v3857 = vsel %vm1360, %v3793, 0.0
      %v3858 = vadd.f32 %v3856, %v3857
      %v3859 = vrot.slane %v3858, 4
      %v3860 = vadd.f32 %v3858, %v3859
      %v3861 = vrot.slane %v3860, 2
      %v3862 = vadd.f32 %v3860, %v3861
      %v3863 = vrot.slane %v3862, 1
      %v3864 = vadd.f32 %v3862, %v3863
      %v3865 = vmul.f32 %v3864, %v1939
      %v3866 = vmul.f32 %v3670, %v3670
      %v3867 = vmul.f32 %v3673, %v3673
      %v3868 = vmul.f32 %v3678, %v3678
      %v3869 = vmul.f32 %v3681, %v3681
      %v3870 = vmul.f32 %v3686, %v3686
      %v3871 = vmul.f32 %v3689, %v3689
      %v3872 = vmul.f32 %v3694, %v3694
      %v3873 = vmul.f32 %v3697, %v3697
      %v3874 = vmul.f32 %v3702, %v3702
      %v3875 = vmul.f32 %v3705, %v3705
      %v3876 = vmul.f32 %v3710, %v3710
      %v3877 = vmul.f32 %v3713, %v3713
      %v3878 = vmul.f32 %v3718, %v3718
      %v3879 = vmul.f32 %v3721, %v3721
      %v3880 = vmul.f32 %v3726, %v3726
      %v3881 = vmul.f32 %v3729, %v3729
      %v3882 = vmul.f32 %v3734, %v3734
      %v3883 = vmul.f32 %v3737, %v3737
      %v3884 = vmul.f32 %v3742, %v3742
      %v3885 = vmul.f32 %v3745, %v3745
      %v3886 = vmul.f32 %v3750, %v3750
      %v3887 = vmul.f32 %v3753, %v3753
      %v3888 = vmul.f32 %v3758, %v3758
      %v3889 = vmul.f32 %v3761, %v3761
      %v3890 = vmul.f32 %v3766, %v3766
      %v3891 = vmul.f32 %v3769, %v3769
      %v3892 = vmul.f32 %v3774, %v3774
      %v3893 = vmul.f32 %v3777, %v3777
      %v3894 = vmul.f32 %v3782, %v3782
      %v3895 = vmul.f32 %v3785, %v3785
      %v3896 = vmul.f32 %v3790, %v3790
      %v3897 = vmul.f32 %v3793, %v3793
      %v3898 = vsel %vm1360, %v3866, 0.0
      %v3899 = vsel %vm1360, %v3867, 0.0
      %v3900 = vadd.f32 %v3898, %v3899
      %v3901 = vsel %vm1360, %v3868, 0.0
      %v3902 = vadd.f32 %v3900, %v3901
      %v3903 = vsel %vm1360, %v3869, 0.0
      %v3904 = vadd.f32 %v3902, %v3903
      %v3905 = vsel %vm1360, %v3870, 0.0
      %v3906 = vadd.f32 %v3904, %v3905
      %v3907 = vsel %vm1360, %v3871, 0.0
      %v3908 = vadd.f32 %v3906, %v3907
      %v3909 = vsel %vm1360, %v3872, 0.0
      %v3910 = vadd.f32 %v3908, %v3909
      %v3911 = vsel %vm1360, %v3873, 0.0
      %v3912 = vadd.f32 %v3910, %v3911
      %v3913 = vsel %vm1360, %v3874, 0.0
      %v3914 = vadd.f32 %v3912, %v3913
      %v3915 = vsel %vm1360, %v3875, 0.0
      %v3916 = vadd.f32 %v3914, %v3915
      %v3917 = vsel %vm1360, %v3876, 0.0
      %v3918 = vadd.f32 %v3916, %v3917
      %v3919 = vsel %vm1360, %v3877, 0.0
      %v3920 = vadd.f32 %v3918, %v3919
      %v3921 = vsel %vm1360, %v3878, 0.0
      %v3922 = vadd.f32 %v3920, %v3921
      %v3923 = vsel %vm1360, %v3879, 0.0
      %v3924 = vadd.f32 %v3922, %v3923
      %v3925 = vsel %vm1360, %v3880, 0.0
      %v3926 = vadd.f32 %v3924, %v3925
      %v3927 = vsel %vm1360, %v3881, 0.0
      %v3928 = vadd.f32 %v3926, %v3927
      %v3929 = vsel %vm1360, %v3882, 0.0
      %v3930 = vadd.f32 %v3928, %v3929
      %v3931 = vsel %vm1360, %v3883, 0.0
      %v3932 = vadd.f32 %v3930, %v3931
      %v3933 = vsel %vm1360, %v3884, 0.0
      %v3934 = vadd.f32 %v3932, %v3933
      %v3935 = vsel %vm1360, %v3885, 0.0
      %v3936 = vadd.f32 %v3934, %v3935
      %v3937 = vsel %vm1360, %v3886, 0.0
      %v3938 = vadd.f32 %v3936, %v3937
      %v3939 = vsel %vm1360, %v3887, 0.0
      %v3940 = vadd.f32 %v3938, %v3939
      %v3941 = vsel %vm1360, %v3888, 0.0
      %v3942 = vadd.f32 %v3940, %v3941
      %v3943 = vsel %vm1360, %v3889, 0.0
      %v3944 = vadd.f32 %v3942, %v3943
      %v3945 = vsel %vm1360, %v3890, 0.0
      %v3946 = vadd.f32 %v3944, %v3945
      %v3947 = vsel %vm1360, %v3891, 0.0
      %v3948 = vadd.f32 %v3946, %v3947
      %v3949 = vsel %vm1360, %v3892, 0.0
      %v3950 = vadd.f32 %v3948, %v3949
      %v3951 = vsel %vm1360, %v3893, 0.0
      %v3952 = vadd.f32 %v3950, %v3951
      %v3953 = vsel %vm1360, %v3894, 0.0
      %v3954 = vadd.f32 %v3952, %v3953
      %v3955 = vsel %vm1360, %v3895, 0.0
      %v3956 = vadd.f32 %v3954, %v3955
      %v3957 = vsel %vm1360, %v3896, 0.0
      %v3958 = vadd.f32 %v3956, %v3957
      %v3959 = vsel %vm1360, %v3897, 0.0
      %v3960 = vadd.f32 %v3958, %v3959
      %v3961 = vrot.slane %v3960, 4
      %v3962 = vadd.f32 %v3960, %v3961
      %v3963 = vrot.slane %v3962, 2
      %v3964 = vadd.f32 %v3962, %v3963
      %v3965 = vrot.slane %v3964, 1
      %v3966 = vadd.f32 %v3964, %v3965
      %v3967 = vmul.f32 %v3966, %v1939
      %v3968 = vmul.f32 %v3865, %v3865
      %v3969 = vsub.f32 %v3967, %v3968
      %v3970 = vsub.f32 %v3670, %v3865
      %v3971 = vsub.f32 %v3673, %v3865
      %v3972 = vsub.f32 %v3678, %v3865
      %v3973 = vsub.f32 %v3681, %v3865
      %v3974 = vsub.f32 %v3686, %v3865
      %v3975 = vsub.f32 %v3689, %v3865
      %v3976 = vsub.f32 %v3694, %v3865
      %v3977 = vsub.f32 %v3697, %v3865
      %v3978 = vsub.f32 %v3702, %v3865
      %v3979 = vsub.f32 %v3705, %v3865
      %v3980 = vsub.f32 %v3710, %v3865
      %v3981 = vsub.f32 %v3713, %v3865
      %v3982 = vsub.f32 %v3718, %v3865
      %v3983 = vsub.f32 %v3721, %v3865
      %v3984 = vsub.f32 %v3726, %v3865
      %v3985 = vsub.f32 %v3729, %v3865
      %v3986 = vsub.f32 %v3734, %v3865
      %v3987 = vsub.f32 %v3737, %v3865
      %v3988 = vsub.f32 %v3742, %v3865
      %v3989 = vsub.f32 %v3745, %v3865
      %v3990 = vsub.f32 %v3750, %v3865
      %v3991 = vsub.f32 %v3753, %v3865
      %v3992 = vsub.f32 %v3758, %v3865
      %v3993 = vsub.f32 %v3761, %v3865
      %v3994 = vsub.f32 %v3766, %v3865
      %v3995 = vsub.f32 %v3769, %v3865
      %v3996 = vsub.f32 %v3774, %v3865
      %v3997 = vsub.f32 %v3777, %v3865
      %v3998 = vsub.f32 %v3782, %v3865
      %v3999 = vsub.f32 %v3785, %v3865
      %v4000 = vsub.f32 %v3790, %v3865
      %v4001 = vsub.f32 %v3793, %v3865
      %v4002 = vadd.f32 %v3969, 1e-05
      %v4003 = vrsqrt.pop %v4002
      %v4004 = vmul.f32 %v3970, %v4003
      %v4005 = vmul.f32 %v3971, %v4003
      %v4006 = vmul.f32 %v3972, %v4003
      %v4007 = vmul.f32 %v3973, %v4003
      %v4008 = vmul.f32 %v3974, %v4003
      %v4009 = vmul.f32 %v3975, %v4003
      %v4010 = vmul.f32 %v3976, %v4003
      %v4011 = vmul.f32 %v3977, %v4003
      %v4012 = vmul.f32 %v3978, %v4003
      %v4013 = vmul.f32 %v3979, %v4003
      %v4014 = vmul.f32 %v3980, %v4003
      %v4015 = vmul.f32 %v3981, %v4003
      %v4016 = vmul.f32 %v3982, %v4003
      %v4017 = vmul.f32 %v3983, %v4003
      %v4018 = vmul.f32 %v3984, %v4003
      %v4019 = vmul.f32 %v3985, %v4003
      %v4020 = vmul.f32 %v3986, %v4003
      %v4021 = vmul.f32 %v3987, %v4003
      %v4022 = vmul.f32 %v3988, %v4003
      %v4023 = vmul.f32 %v3989, %v4003
      %v4024 = vmul.f32 %v3990, %v4003
      %v4025 = vmul.f32 %v3991, %v4003
      %v4026 = vmul.f32 %v3992, %v4003
      %v4027 = vmul.f32 %v3993, %v4003
      %v4028 = vmul.f32 %v3994, %v4003
      %v4029 = vmul.f32 %v3995, %v4003
      %v4030 = vmul.f32 %v3996, %v4003
      %v4031 = vmul.f32 %v3997, %v4003
      %v4032 = vmul.f32 %v3998, %v4003
      %v4033 = vmul.f32 %v3999, %v4003
      %v4034 = vmul.f32 %v4000, %v4003
      %v4035 = vmul.f32 %v4001, %v4003
      %v4036 = vadd.f32 %v172, %v4004
      %v4037 = vadd.f32 %v173, %v4005
      %v4038 = vadd.f32 %v174, %v4006
      %v4039 = vadd.f32 %v175, %v4007
      %v4040 = vadd.f32 %v176, %v4008
      %v4041 = vadd.f32 %v177, %v4009
      %v4042 = vadd.f32 %v178, %v4010
      %v4043 = vadd.f32 %v179, %v4011
      %v4044 = vadd.f32 %v180, %v4012
      %v4045 = vadd.f32 %v181, %v4013
      %v4046 = vadd.f32 %v182, %v4014
      %v4047 = vadd.f32 %v183, %v4015
      %v4048 = vadd.f32 %v184, %v4016
      %v4049 = vadd.f32 %v185, %v4017
      %v4050 = vadd.f32 %v186, %v4018
      %v4051 = vadd.f32 %v187, %v4019
      %v4052 = vadd.f32 %v188, %v4020
      %v4053 = vadd.f32 %v189, %v4021
      %v4054 = vadd.f32 %v190, %v4022
      %v4055 = vadd.f32 %v191, %v4023
      %v4056 = vadd.f32 %v192, %v4024
      %v4057 = vadd.f32 %v193, %v4025
      %v4058 = vadd.f32 %v194, %v4026
      %v4059 = vadd.f32 %v195, %v4027
      %v4060 = vadd.f32 %v196, %v4028
      %v4061 = vadd.f32 %v197, %v4029
      %v4062 = vadd.f32 %v198, %v4030
      %v4063 = vadd.f32 %v199, %v4031
      %v4064 = vadd.f32 %v200, %v4032
      %v4065 = vadd.f32 %v201, %v4033
      %v4066 = vadd.f32 %v202, %v4034
      %v4067 = vadd.f32 %v203, %v4035
      %4068 = vst.msk [vmem:[%s170] sm:$0xff] %vm1360, %v4036
      %4069 = vst.msk [vmem:[%s170 + $0x8] sm:$0xff] %vm1360, %v4037
      %4070 = vst.msk [vmem:[%s170 + $0x10] sm:$0xff] %vm1360, %v4038
      %4071 = vst.msk [vmem:[%s170 + $0x18] sm:$0xff] %vm1360, %v4039
      %4072 = vst.msk [vmem:[%s170 + $0x20] sm:$0xff] %vm1360, %v4040
      %4073 = vst.msk [vmem:[%s170 + $0x28] sm:$0xff] %vm1360, %v4041
      %4074 = vst.msk [vmem:[%s170 + $0x30] sm:$0xff] %vm1360, %v4042
      %4075 = vst.msk [vmem:[%s170 + $0x38] sm:$0xff] %vm1360, %v4043
      %4076 = vst.msk [vmem:[%s170 + $0x40] sm:$0xff] %vm1360, %v4044
      %4077 = vst.msk [vmem:[%s170 + $0x48] sm:$0xff] %vm1360, %v4045
      %4078 = vst.msk [vmem:[%s170 + $0x50] sm:$0xff] %vm1360, %v4046
      %4079 = vst.msk [vmem:[%s170 + $0x58] sm:$0xff] %vm1360, %v4047
      %4080 = vst.msk [vmem:[%s170 + $0x60] sm:$0xff] %vm1360, %v4048
      %4081 = vst.msk [vmem:[%s170 + $0x68] sm:$0xff] %vm1360, %v4049
      %4082 = vst.msk [vmem:[%s170 + $0x70] sm:$0xff] %vm1360, %v4050
      %4083 = vst.msk [vmem:[%s170 + $0x78] sm:$0xff] %vm1360, %v4051
      %4084 = vst.msk [vmem:[%s170 + $0x80] sm:$0xff] %vm1360, %v4052
      %4085 = vst.msk [vmem:[%s170 + $0x88] sm:$0xff] %vm1360, %v4053
      %4086 = vst.msk [vmem:[%s170 + $0x90] sm:$0xff] %vm1360, %v4054
      %4087 = vst.msk [vmem:[%s170 + $0x98] sm:$0xff] %vm1360, %v4055
      %4088 = vst.msk [vmem:[%s170 + $0xa0] sm:$0xff] %vm1360, %v4056
      %4089 = vst.msk [vmem:[%s170 + $0xa8] sm:$0xff] %vm1360, %v4057
      %4090 = vst.msk [vmem:[%s170 + $0xb0] sm:$0xff] %vm1360, %v4058
      %4091 = vst.msk [vmem:[%s170 + $0xb8] sm:$0xff] %vm1360, %v4059
      %4092 = vst.msk [vmem:[%s170 + $0xc0] sm:$0xff] %vm1360, %v4060
      %4093 = vst.msk [vmem:[%s170 + $0xc8] sm:$0xff] %vm1360, %v4061
      %4094 = vst.msk [vmem:[%s170 + $0xd0] sm:$0xff] %vm1360, %v4062
      %4095 = vst.msk [vmem:[%s170 + $0xd8] sm:$0xff] %vm1360, %v4063
      %4096 = vst.msk [vmem:[%s170 + $0xe0] sm:$0xff] %vm1360, %v4064
      %4097 = vst.msk [vmem:[%s170 + $0xe8] sm:$0xff] %vm1360, %v4065
      %4098 = vst.msk [vmem:[%s170 + $0xf0] sm:$0xff] %vm1360, %v4066
      %4099 = vst.msk [vmem:[%s170 + $0xf8] sm:$0xff] %vm1360, %v4067
      %p4100 = scmp.lt.s32.totalorder %s14, 1
      %s4101 = scalar_select %p4100, %s14, 1
      %s4102 = smul.addr %s4101, 32
      %s4103 = smul.addr %s4102, 8
      %s4104 = scalar_lea.vmem %s3, %s4103
      // Predicated region
      $region33: #{tpu_custom_call.1} parent=31 // pred_check
        %p4105 = pneg %p100
      $region34: #{tpu_custom_call.1} parent=31 // pred_check_branch
        %4107 = sbr.rel (%p4105) target = $region36
      $region35: #{tpu_custom_call.1} parent=31 // pred_region
        _
      $region36: #{tpu_custom_call.1} parent=31 // pred_fallthru
        _
    $region32: #{tpu_custom_call.1} parent=5 // pred_fallthru
      _
    %p4108 = scmp.le.s32.totalorder 2, %s9
    // Predicated region
    $region37: #{tpu_custom_call.1} parent=5 // pred_check
      %p4109 = pneg %p4108
    $region38: #{tpu_custom_call.1} parent=5 // pred_check_branch
      %4111 = sbr.rel (%p4109) target = $region40
    $region39: #{tpu_custom_call.1} parent=5 // pred_region
      %s4112 = ssub.s32 %s9, 2
      // Predicated region
      $region41: #{tpu_custom_call.1} parent=39 // pred_check
        %p4113 = pneg %p106
      $region42: #{tpu_custom_call.1} parent=39 // pred_check_branch
        %4115 = sbr.rel (%p4113) target = $region44
      $region43: #{tpu_custom_call.1} parent=39 // pred_region
        %p4116 = scmp.lt.s32.totalorder %s15, 1
        %s4117 = scalar_select %p4116, %s15, 1
        %s4118 = smul.addr %s4117, 32
        %s4119 = smul.addr %s4118, 8
        %s4120 = scalar_lea.vmem %s3, %s4119
      $region44: #{tpu_custom_call.1} parent=39 // pred_fallthru
        _
    $region40: #{tpu_custom_call.1} parent=5 // pred_fallthru
      _
  $region6: #{tpu_custom_call.1} parent=0 // loop_footer
    %s13 = sadd.s32 1, %s9
  $region7: #{tpu_custom_call.1} parent=0 // loop_footer_branch
    %8 = sbr.rel target = $region3
  $region8: #{tpu_custom_call.1} parent=0 // loop_exit
    _

</llo_original>
